<compile_context>
chip_gen: v7x
topology: tpu7x:2x2x1
jax: 0.10.0
libtpu: 0.0.40
codegen_flags: <defaults>
</compile_context>

<pallas_src>
import functools
import math

import jax
import jax.numpy as jnp
import numpy as np
from jax.experimental import pallas as pl
from jax.experimental.pallas import tpu as pltpu


# ----------------------------------------------------------------------------
# Host-side weight transforms (tiny; run under jit)
# ----------------------------------------------------------------------------
def _group_mats(wdim, c):
    """G:(W*C, C) sums lanes per channel; G^T broadcasts per-channel -> lanes."""
    g = np.kron(np.ones((wdim, 1), np.float32), np.eye(c, dtype=np.float32))
    return jnp.asarray(g), jnp.asarray(g.T)


def _conv3x3_banded(w_oihw, wdim, dil):
    """(Co,Ci,3,3) conv weight -> (3, W*Ci, W*Co) banded matrices (one per kh).

    banded[kh][s'*Ci+ci, s*Co+co] = w[co,ci,kh,kw] with s' = s + (kw-1)*dil, so
    one kernel-row tap of the stride-1 dilated conv is a single
    (N*H, W*Ci) @ (W*Ci, W*Co) MXU matmul (W-taps + zero padding in the band).
    """
    co, ci, kh_n, kw_n = w_oihw.shape
    w = jnp.transpose(w_oihw, (2, 3, 1, 0)).astype(jnp.float32)   # (KH,KW,Ci,Co)
    taps = []
    for kh in range(kh_n):
        acc = jnp.zeros((wdim * ci, wdim * co), jnp.float32)
        for kw in range(kw_n):
            off = (kw - 1) * dil
            sel = np.eye(wdim, wdim, -off, dtype=np.float32)  # sel[s',s]=1 iff s'=s+off
            acc = acc + jnp.kron(jnp.asarray(sel), w[kh, kw])
        taps.append(acc)
    return jnp.stack(taps, axis=0).astype(jnp.bfloat16)


def _conv1x1_banded(w_oihw, wdim):
    co, ci = w_oihw.shape[:2]
    wm = jnp.transpose(w_oihw[:, :, 0, 0], (1, 0)).astype(jnp.float32)  # (Ci,Co)
    return jnp.kron(jnp.asarray(np.eye(wdim, dtype=np.float32)), wm).astype(jnp.bfloat16)


def _deconv_banded(w_iokk, wdim):
    """ConvTranspose2d(k=3,s=2,p=1,op=1) weight (Ci,Co,3,3) -> banded matrices
    (W*Ci, 2*W*Co) for the sub-pixel decomposition:
        even output rows : A0 @ be
        odd  output rows : A0 @ bo0 + A1 @ bo1   (A1 = A shifted one row up)
    Even/odd output columns are interleaved inside the 2*W*Co lane axis.
    """
    w = w_iokk.astype(jnp.float32)

    def sel(dw, ps):
        s = np.zeros((wdim, 2 * wdim), np.float32)
        for j in range(wdim):
            sp = j + dw
            if 0 <= sp < wdim:
                s[sp, 2 * j + ps] = 1.0
        return jnp.asarray(s)

    def wf(kh, kw):                       # spatially flipped tap, (Ci, Co)
        return w[:, :, 2 - kh, 2 - kw]

    be = (jnp.kron(sel(0, 0), wf(1, 1)) + jnp.kron(sel(0, 1), wf(1, 0))
          + jnp.kron(sel(1, 1), wf(1, 2)))
    bo0 = (jnp.kron(sel(0, 0), wf(0, 1)) + jnp.kron(sel(0, 1), wf(0, 0))
           + jnp.kron(sel(1, 1), wf(0, 2)))
    bo1 = (jnp.kron(sel(0, 0), wf(2, 1)) + jnp.kron(sel(0, 1), wf(2, 0))
           + jnp.kron(sel(1, 1), wf(2, 2)))
    return (be.astype(jnp.bfloat16), bo0.astype(jnp.bfloat16),
            bo1.astype(jnp.bfloat16))


# ----------------------------------------------------------------------------
# Kernel 1: fused ResBlock (+ UpBlock ReLU)
# ----------------------------------------------------------------------------
def _resblock_kernel(*refs, n, h, w, cin, cout, dil, eps, increase_dim):
    if increase_dim:
        (x_ref, g1_ref, b1_ref, gin_ref, gint_ref, w1_ref, c1_ref,
         g2_ref, b2_ref, gout_ref, goutt_ref, w2_ref, c2_ref,
         wsc_ref, csc_ref, o_ref, pad1_ref, pad2_ref) = refs
    else:
        (x_ref, g1_ref, b1_ref, gin_ref, gint_ref, w1_ref, c1_ref,
         g2_ref, b2_ref, gout_ref, goutt_ref, w2_ref, c2_ref,
         o_ref, pad1_ref, pad2_ref) = refs
        wsc_ref = csc_ref = None

    nh = n * h
    cnt = float(n * h * w)
    x = x_ref[...]                                            # (N*H, W*Cin) f32

    def bn_relu(val, g_ref, b_ref, gsum_ref, gbc_ref):
        # One-pass batch stats (sum & sum-of-squares), biased variance (training
        # mode), per-channel reduce/broadcast done with tiny f32 matmuls.
        lane_s = jnp.sum(val, axis=0, keepdims=True)
        lane_q = jnp.sum(val * val, axis=0, keepdims=True)
        ch_s = jnp.dot(lane_s, gsum_ref[...], preferred_element_type=jnp.float32)
        ch_q = jnp.dot(lane_q, gsum_ref[...], preferred_element_type=jnp.float32)
        mean = ch_s / cnt
        var = jnp.maximum(ch_q / cnt - mean * mean, 0.0)
        scale = g_ref[...] * jax.lax.rsqrt(var + eps)          # (1, C)
        shift = b_ref[...] - mean * scale
        scale_l = jnp.dot(scale, gbc_ref[...], preferred_element_type=jnp.float32)
        shift_l = jnp.dot(shift, gbc_ref[...], preferred_element_type=jnp.float32)
        return jnp.maximum(val * scale_l + shift_l, 0.0)

    def conv3x3(val, pad_ref, w_ref, bias_ref, gbc_ref, wc_src, c_out):
        # Banded-matmul dilated conv: one bf16 MXU matmul per kernel-row tap.
        pad_ref[...] = jnp.zeros(pad_ref.shape, pad_ref.dtype)
        pad_ref[:, pl.ds(dil, h), :] = val.reshape(n, h, wc_src)
        acc = jnp.zeros((nh, w * c_out), jnp.float32)
        for kh in range(3):
            xs = pad_ref[:, pl.ds(kh * dil, h), :].reshape(nh, wc_src)
            acc = acc + jnp.dot(xs.astype(jnp.bfloat16), w_ref[kh],
                                preferred_element_type=jnp.float32)
        bias_l = jnp.dot(bias_ref[...], gbc_ref[...],
                         preferred_element_type=jnp.float32)   # (1, W*Cout)
        return acc + bias_l

    h1 = bn_relu(x, g1_ref, b1_ref, gin_ref, gint_ref)
    r1 = conv3x3(h1, pad1_ref, w1_ref, c1_ref, goutt_ref, w * cin, cout)
    h2 = bn_relu(r1, g2_ref, b2_ref, gout_ref, goutt_ref)
    r2 = conv3x3(h2, pad2_ref, w2_ref, c2_ref, goutt_ref, w * cout, cout)

    if increase_dim:
        bias_sc = jnp.dot(csc_ref[...], goutt_ref[...],
                          preferred_element_type=jnp.float32)
        sc = jnp.dot(h1.astype(jnp.bfloat16), wsc_ref[...],
                     preferred_element_type=jnp.float32) + bias_sc
    else:
        sc = x

    # ResBlock output (shortcut + residual) with the UpBlock ReLU fused in.
    o_ref[...] = jnp.maximum(sc + r2, 0.0)


# ----------------------------------------------------------------------------
# Kernel 2: sub-pixel ConvTranspose2d + skip add (grid over batch, "parallel")
# ----------------------------------------------------------------------------
def _upsample_add_kernel(a_ref, xd_ref, be_ref, bo0_ref, bo1_ref, bias_ref,
                         o_ref, arow_ref, *, h, wc):
    # a_ref : (1, H, W*C)    ResBlock output slab for one batch sample
    # xd_ref: (1, H, 4*W*C)  skip input (even|odd output rows side by side)
    # o_ref : (1, H, 4*W*C)
    # arow_ref: (H+1, W*C) f32 scratch to build the +1-row-shifted slab
    wc2 = 2 * wc
    a0 = a_ref[0]                                             # (H, W*C) f32
    arow_ref[pl.ds(0, h), :] = a0
    arow_ref[pl.ds(h, 1), :] = jnp.zeros((1, wc), arow_ref.dtype)
    a0b = a0.astype(jnp.bfloat16)
    a1b = arow_ref[pl.ds(1, h), :].astype(jnp.bfloat16)       # A[r+1], zero last row

    bias = bias_ref[...]                                      # (1, 2*W*C)
    even = jnp.dot(a0b, be_ref[...], preferred_element_type=jnp.float32) + bias
    odd = (jnp.dot(a0b, bo0_ref[...], preferred_element_type=jnp.float32)
           + jnp.dot(a1b, bo1_ref[...], preferred_element_type=jnp.float32) + bias)

    xd = xd_ref[0]                                            # (H, 4*W*C)
    o_ref[0, :, pl.ds(0, wc2)] = even + xd[:, 0:wc2]
    o_ref[0, :, pl.ds(wc2, wc2)] = odd + xd[:, wc2:2 * wc2]


# ----------------------------------------------------------------------------
# UpBlock parameters (PyTorch-shaped, deterministic) + forward
# ----------------------------------------------------------------------------
def init_upblock_params(key, in_channels, out_channels):
    ks = jax.random.split(key, 8)

    def conv_init(kw_, kb_, cout, cin, kh, kwid):
        fan_in = cin * kh * kwid
        bound = 1.0 / math.sqrt(fan_in)
        w = jax.random.uniform(kw_, (cout, cin, kh, kwid), jnp.float32, -bound, bound)
        b = jax.random.uniform(kb_, (cout,), jnp.float32, -bound, bound)
        return w, b

    p = {}
    p["bn1_gamma"] = jnp.ones((in_channels,), jnp.float32)
    p["bn1_beta"] = jnp.zeros((in_channels,), jnp.float32)
    p["conv1_w"], p["conv1_b"] = conv_init(ks[0], ks[1], out_channels, in_channels, 3, 3)
    p["bn2_gamma"] = jnp.ones((out_channels,), jnp.float32)
    p["bn2_beta"] = jnp.zeros((out_channels,), jnp.float32)
    p["conv2_w"], p["conv2_b"] = conv_init(ks[2], ks[3], out_channels, out_channels, 3, 3)
    if in_channels != out_channels:
        p["conv_sc_w"], p["conv_sc_b"] = conv_init(ks[4], ks[5], out_channels, in_channels, 1, 1)
    # ConvTranspose2d weight layout: (in_channels, out_channels, kH, kW)
    bound = 1.0 / math.sqrt(out_channels * 3 * 3)
    p["up_w"] = jax.random.uniform(ks[6], (out_channels, out_channels, 3, 3),
                                   jnp.float32, -bound, bound)
    p["up_b"] = jax.random.uniform(ks[7], (out_channels,), jnp.float32, -bound, bound)
    return p


def upblock_forward(params, x_down_nchw, x_up_nchw, *, dilation):
    d = dilation
    n, cin, h, w = x_up_nchw.shape
    cout = params["conv1_w"].shape[0]
    increase_dim = "conv_sc_w" in params

    x_slab = (jnp.transpose(x_up_nchw, (0, 2, 3, 1)).astype(jnp.float32)
              .reshape(n * h, w * cin))

    g_in, gt_in = _group_mats(w, cin)
    g_out, gt_out = _group_mats(w, cout)
    w1b = _conv3x3_banded(params["conv1_w"], w, d)
    w2b = _conv3x3_banded(params["conv2_w"], w, d)

    inputs = [
        x_slab,
        params["bn1_gamma"].reshape(1, cin), params["bn1_beta"].reshape(1, cin),
        g_in, gt_in, w1b, params["conv1_b"].reshape(1, cout),
        params["bn2_gamma"].reshape(1, cout), params["bn2_beta"].reshape(1, cout),
        g_out, gt_out, w2b, params["conv2_b"].reshape(1, cout),
    ]
    if increase_dim:
        inputs += [_conv1x1_banded(params["conv_sc_w"], w),
                   params["conv_sc_b"].reshape(1, cout)]

    vmem = pl.BlockSpec(memory_space=pltpu.MemorySpace.VMEM)
    # Kernel 1: whole ResBlock (+ UpBlock ReLU).  Single invocation because the
    # training-mode BatchNorm batch statistics are a global (N,H,W) reduction.
    # TODO(synk): for production-size N/H/W use a two-phase (stats, apply) grid
    #             so the batch/row axes can be tiled and megacore-parallel.
    a_slab = pl.pallas_call(
        functools.partial(_resblock_kernel, n=n, h=h, w=w, cin=cin, cout=cout,
                          dil=d, eps=1e-5, increase_dim=increase_dim),
        out_shape=jax.ShapeDtypeStruct((n * h, w * cout), jnp.float32),
        in_specs=[vmem] * len(inputs),
        out_specs=vmem,
        scratch_shapes=[pltpu.VMEM((n, h + 2 * d, w * cin), jnp.float32),
                        pltpu.VMEM((n, h + 2 * d, w * cout), jnp.float32)],
    )(*inputs)

    # Kernel 2: sub-pixel ConvTranspose2d(k=3,s=2,p=1,op=1) + skip add.
    be, bo0, bo1 = _deconv_banded(params["up_w"], w)
    bias_lane = jnp.tile(params["up_b"].astype(jnp.float32),
                         2 * w).reshape(1, 2 * w * cout)
    wc = w * cout
    a3 = a_slab.reshape(n, h, wc)                               # metadata reshape
    xd = (jnp.transpose(x_down_nchw, (0, 2, 3, 1)).astype(jnp.float32)
          .reshape(n, h, 4 * wc))                               # metadata reshape

    out = pl.pallas_call(
        functools.partial(_upsample_add_kernel, h=h, wc=wc),
        out_shape=jax.ShapeDtypeStruct((n, h, 4 * wc), jnp.float32),
        grid=(n,),
        in_specs=[
            pl.BlockSpec((1, h, wc), lambda b: (b, 0, 0)),
            pl.BlockSpec((1, h, 4 * wc), lambda b: (b, 0, 0)),
            pl.BlockSpec((wc, 2 * wc), lambda b: (0, 0)),
            pl.BlockSpec((wc, 2 * wc), lambda b: (0, 0)),
            pl.BlockSpec((wc, 2 * wc), lambda b: (0, 0)),
            pl.BlockSpec((1, 2 * wc), lambda b: (0, 0)),
        ],
        out_specs=pl.BlockSpec((1, h, 4 * wc), lambda b: (b, 0, 0)),
        scratch_shapes=[pltpu.VMEM((h + 1, wc), jnp.float32)],
        compiler_params=pltpu.CompilerParams(dimension_semantics=("parallel",)),
    )(a3, xd, be, bo0, bo1, bias_lane)

    out = out.reshape(n, 2 * h, 2 * w, cout)     # metadata-only reshape to NHWC
    return jnp.transpose(out, (0, 3, 1, 2))      # back to NCHW


# ----------------------------------------------------------------------------
# Pure-XLA reference (for a loose sanity check of the fused/bf16 kernels)
# ----------------------------------------------------------------------------
def _reference_forward(params, x_down, x_up, *, dilation):
    d = dilation
    x = x_up.astype(jnp.float32)
    xd = x_down.astype(jnp.float32)

    def bn(v, g, b, eps=1e-5):
        mean = jnp.mean(v, axis=(0, 2, 3), keepdims=True)
        var = jnp.mean((v - mean) ** 2, axis=(0, 2, 3), keepdims=True)
        return ((v - mean) * jax.lax.rsqrt(var + eps) * g.reshape(1, -1, 1, 1)
                + b.reshape(1, -1, 1, 1))

    def conv(v, wgt, b, dil, pad):
        out = jax.lax.conv_general_dilated(
            v, wgt, window_strides=(1, 1), padding=((pad, pad), (pad, pad)),
            rhs_dilation=(dil, dil), dimension_numbers=("NCHW", "OIHW", "NCHW"))
        return out + b.reshape(1, -1, 1, 1)

    h1 = jax.nn.relu(bn(x, params["bn1_gamma"], params["bn1_beta"]))
    r = conv(h1, params["conv1_w"], params["conv1_b"], d, d)
    r = conv(jax.nn.relu(bn(r, params["bn2_gamma"], params["bn2_beta"])),
             params["conv2_w"], params["conv2_b"], d, d)
    if "conv_sc_w" in params:
        sc = conv(h1, params["conv_sc_w"], params["conv_sc_b"], 1, 0)
    else:
        sc = x
    a = jax.nn.relu(sc + r)
    wt = jnp.transpose(params["up_w"], (1, 0, 2, 3))[:, :, ::-1, ::-1]
    up = jax.lax.conv_general_dilated(
        a, wt, window_strides=(1, 1), padding=((1, 2), (1, 2)),
        lhs_dilation=(2, 2), dimension_numbers=("NCHW", "OIHW", "NCHW"))
    up = up + params["up_b"].reshape(1, -1, 1, 1)
    return up + xd


if __name__ == "__main__":
    in_channels, out_channels, dilation = 4, 8, 2
    n, h, w = 2, 16, 16

    key = jax.random.PRNGKey(0)
    k_p, k_up, k_down = jax.random.split(key, 3)
    params = init_upblock_params(k_p, in_channels, out_channels)
    x_up = jax.random.normal(k_up, (n, in_channels, h, w), jnp.float32)
    x_down = jax.random.normal(k_down, (n, out_channels, 2 * h, 2 * w), jnp.float32)

    fwd = jax.jit(functools.partial(upblock_forward, dilation=dilation))
    out = fwd(params, x_down, x_up)
    jax.block_until_ready(out)

    assert out.shape == (n, out_channels, 2 * h, 2 * w), out.shape
    assert out.dtype == jnp.float32

    # Loose tolerance: kernels use bf16 MXU inputs with f32 accumulation.
    ref = _reference_forward(params, x_down, x_up, dilation=dilation)
    err = float(jnp.max(jnp.abs(out - ref)))
    scale = float(jnp.max(jnp.abs(ref)))
    assert err <= 0.05 * scale + 0.05, f"mismatch: max_err={err}, ref_scale={scale}"

    print("KERNEL_OK")
</pallas_src>

<mosaic_0001>
module attributes {stable_mosaic.version = 11 : i64} {
  func.func @_resblock_kernel(%arg0: memref<32x64xf32, #tpu.memory_space<vmem>>, %arg1: memref<1x4xf32, #tpu.memory_space<vmem>>, %arg2: memref<1x4xf32, #tpu.memory_space<vmem>>, %arg3: memref<64x4xf32, #tpu.memory_space<vmem>>, %arg4: memref<4x64xf32, #tpu.memory_space<vmem>>, %arg5: memref<3x64x128xbf16, #tpu.memory_space<vmem>>, %arg6: memref<1x8xf32, #tpu.memory_space<vmem>>, %arg7: memref<1x8xf32, #tpu.memory_space<vmem>>, %arg8: memref<1x8xf32, #tpu.memory_space<vmem>>, %arg9: memref<128x8xf32, #tpu.memory_space<vmem>>, %arg10: memref<8x128xf32, #tpu.memory_space<vmem>>, %arg11: memref<3x128x128xbf16, #tpu.memory_space<vmem>>, %arg12: memref<1x8xf32, #tpu.memory_space<vmem>>, %arg13: memref<64x128xbf16, #tpu.memory_space<vmem>>, %arg14: memref<1x8xf32, #tpu.memory_space<vmem>>, %arg15: memref<32x128xf32, #tpu.memory_space<vmem>>, %arg16: memref<2x20x64xf32, #tpu.memory_space<vmem>>, %arg17: memref<2x20x128xf32, #tpu.memory_space<vmem>>) attributes {dimension_semantics = [], scalar_prefetch = 0 : i64, scratch_operands = 2 : i64, tpu.core_type = #tpu.core_type<tc>} {
    %c0 = arith.constant 0 : index
    %c0_0 = arith.constant 0 : index
    %0 = vector.load %arg0[%c0, %c0_0] : memref<32x64xf32, #tpu.memory_space<vmem>>, vector<32x64xf32>
    %cst = arith.constant dense<0.000000e+00> : vector<64xf32>
    %1 = vector.multi_reduction <add>, %0, %cst [0] : vector<32x64xf32> to vector<64xf32>
    %2 = vector.shape_cast %1 : vector<64xf32> to vector<1x64xf32>
    %3 = arith.mulf %0, %0 : vector<32x64xf32>
    %cst_1 = arith.constant dense<0.000000e+00> : vector<64xf32>
    %4 = vector.multi_reduction <add>, %3, %cst_1 [0] : vector<32x64xf32> to vector<64xf32>
    %5 = vector.shape_cast %4 : vector<64xf32> to vector<1x64xf32>
    %c0_2 = arith.constant 0 : index
    %c0_3 = arith.constant 0 : index
    %6 = vector.load %arg3[%c0_2, %c0_3] : memref<64x4xf32, #tpu.memory_space<vmem>>, vector<64x4xf32>
    %cst_4 = arith.constant dense<0.000000e+00> : vector<1x4xf32>
    %7 = tpu.matmul %2, %6, %cst_4 {dimension_numbers = #tpu.dot_dimension_numbers<[1], [0], [0], [1], [0, 0, 1, 1], [], []>} : vector<1x64xf32>, vector<64x4xf32>, vector<1x4xf32> -> vector<1x4xf32>
    %c0_5 = arith.constant 0 : index
    %c0_6 = arith.constant 0 : index
    %8 = vector.load %arg3[%c0_5, %c0_6] : memref<64x4xf32, #tpu.memory_space<vmem>>, vector<64x4xf32>
    %cst_7 = arith.constant dense<0.000000e+00> : vector<1x4xf32>
    %9 = tpu.matmul %5, %8, %cst_7 {dimension_numbers = #tpu.dot_dimension_numbers<[1], [0], [0], [1], [0, 0, 1, 1], [], []>} : vector<1x64xf32>, vector<64x4xf32>, vector<1x4xf32> -> vector<1x4xf32>
    %cst_8 = arith.constant 5.120000e+02 : f32
    %10 = vector.broadcast %cst_8 : f32 to vector<1x4xf32>
    %11 = arith.divf %7, %10 : vector<1x4xf32>
    %cst_9 = arith.constant 5.120000e+02 : f32
    %12 = vector.broadcast %cst_9 : f32 to vector<1x4xf32>
    %13 = arith.divf %9, %12 : vector<1x4xf32>
    %14 = arith.mulf %11, %11 : vector<1x4xf32>
    %15 = arith.subf %13, %14 : vector<1x4xf32>
    %cst_10 = arith.constant 0.000000e+00 : f32
    %16 = vector.broadcast %cst_10 : f32 to vector<1x4xf32>
    %17 = arith.maximumf %15, %16 : vector<1x4xf32>
    %c0_11 = arith.constant 0 : index
    %c0_12 = arith.constant 0 : index
    %18 = vector.load %arg1[%c0_11, %c0_12] : memref<1x4xf32, #tpu.memory_space<vmem>>, vector<1x4xf32>
    %cst_13 = arith.constant 9.99999974E-6 : f32
    %19 = vector.broadcast %cst_13 : f32 to vector<1x4xf32>
    %20 = arith.addf %17, %19 : vector<1x4xf32>
    %21 = math.rsqrt %20 : vector<1x4xf32>
    %22 = arith.mulf %18, %21 : vector<1x4xf32>
    %c0_14 = arith.constant 0 : index
    %c0_15 = arith.constant 0 : index
    %23 = vector.load %arg2[%c0_14, %c0_15] : memref<1x4xf32, #tpu.memory_space<vmem>>, vector<1x4xf32>
    %24 = arith.mulf %11, %22 : vector<1x4xf32>
    %25 = arith.subf %23, %24 : vector<1x4xf32>
    %c0_16 = arith.constant 0 : index
    %c0_17 = arith.constant 0 : index
    %26 = vector.load %arg4[%c0_16, %c0_17] : memref<4x64xf32, #tpu.memory_space<vmem>>, vector<4x64xf32>
    %cst_18 = arith.constant dense<0.000000e+00> : vector<1x64xf32>
    %27 = tpu.matmul %22, %26, %cst_18 {dimension_numbers = #tpu.dot_dimension_numbers<[1], [0], [0], [1], [0, 0, 1, 1], [], []>} : vector<1x4xf32>, vector<4x64xf32>, vector<1x64xf32> -> vector<1x64xf32>
    %c0_19 = arith.constant 0 : index
    %c0_20 = arith.constant 0 : index
    %28 = vector.load %arg4[%c0_19, %c0_20] : memref<4x64xf32, #tpu.memory_space<vmem>>, vector<4x64xf32>
    %cst_21 = arith.constant dense<0.000000e+00> : vector<1x64xf32>
    %29 = tpu.matmul %25, %28, %cst_21 {dimension_numbers = #tpu.dot_dimension_numbers<[1], [0], [0], [1], [0, 0, 1, 1], [], []>} : vector<1x4xf32>, vector<4x64xf32>, vector<1x64xf32> -> vector<1x64xf32>
    %30 = vector.broadcast %27 : vector<1x64xf32> to vector<32x64xf32>
    %31 = arith.mulf %0, %30 : vector<32x64xf32>
    %32 = vector.broadcast %29 : vector<1x64xf32> to vector<32x64xf32>
    %33 = arith.addf %31, %32 : vector<32x64xf32>
    %cst_22 = arith.constant 0.000000e+00 : f32
    %34 = vector.broadcast %cst_22 : f32 to vector<32x64xf32>
    %35 = arith.maximumf %33, %34 : vector<32x64xf32>
    %cst_23 = arith.constant 0.000000e+00 : f32
    %36 = vector.broadcast %cst_23 : f32 to vector<2x20x64xf32>
    %c0_24 = arith.constant 0 : index
    %c0_25 = arith.constant 0 : index
    %c0_26 = arith.constant 0 : index
    %37 = vector.load %arg16[%c0_24, %c0_25, %c0_26] : memref<2x20x64xf32, #tpu.memory_space<vmem>>, vector<2x20x64xf32>
    tpu.vector_store %arg16[%c0_24, %c0_25, %c0_26], %36 {strides = array<i32>} : memref<2x20x64xf32, #tpu.memory_space<vmem>>, vector<2x20x64xf32>,
    %38 = vector.shape_cast %35 : vector<32x64xf32> to vector<2x16x64xf32>
    %c0_27 = arith.constant 0 : index
    %c2 = arith.constant 2 : index
    %c0_28 = arith.constant 0 : index
    %39 = vector.load %arg16[%c0_27, %c2, %c0_28] : memref<2x20x64xf32, #tpu.memory_space<vmem>>, vector<2x16x64xf32>
    tpu.vector_store %arg16[%c0_27, %c2, %c0_28], %38 {strides = array<i32>} : memref<2x20x64xf32, #tpu.memory_space<vmem>>, vector<2x16x64xf32>,
    %cst_29 = arith.constant 0.000000e+00 : f32
    %40 = vector.broadcast %cst_29 : f32 to vector<32x128xf32>
    %c0_30 = arith.constant 0 : index
    %c0_31 = arith.constant 0 : index
    %c0_32 = arith.constant 0 : index
    %41 = vector.load %arg16[%c0_30, %c0_31, %c0_32] : memref<2x20x64xf32, #tpu.memory_space<vmem>>, vector<2x16x64xf32>
    %42 = vector.shape_cast %41 : vector<2x16x64xf32> to vector<32x64xf32>
    %43 = arith.truncf %42 : vector<32x64xf32> to vector<32x64xbf16>
    %c0_33 = arith.constant 0 : index
    %c0_34 = arith.constant 0 : index
    %c0_35 = arith.constant 0 : index
    %44 = vector.load %arg5[%c0_33, %c0_34, %c0_35] : memref<3x64x128xbf16, #tpu.memory_space<vmem>>, vector<1x64x128xbf16>
    %45 = vector.shape_cast %44 : vector<1x64x128xbf16> to vector<64x128xbf16>
    %cst_36 = arith.constant dense<0.000000e+00> : vector<32x128xf32>
    %46 = tpu.matmul %43, %45, %cst_36 {dimension_numbers = #tpu.dot_dimension_numbers<[1], [0], [0], [1], [0, 0, 1, 1], [], []>} : vector<32x64xbf16>, vector<64x128xbf16>, vector<32x128xf32> -> vector<32x128xf32>
    %47 = arith.addf %40, %46 : vector<32x128xf32>
    %c0_37 = arith.constant 0 : index
    %c2_38 = arith.constant 2 : index
    %c0_39 = arith.constant 0 : index
    %48 = vector.load %arg16[%c0_37, %c2_38, %c0_39] : memref<2x20x64xf32, #tpu.memory_space<vmem>>, vector<2x16x64xf32>
    %49 = vector.shape_cast %48 : vector<2x16x64xf32> to vector<32x64xf32>
    %50 = arith.truncf %49 : vector<32x64xf32> to vector<32x64xbf16>
    %c1 = arith.constant 1 : index
    %c0_40 = arith.constant 0 : index
    %c0_41 = arith.constant 0 : index
    %51 = vector.load %arg5[%c1, %c0_40, %c0_41] : memref<3x64x128xbf16, #tpu.memory_space<vmem>>, vector<1x64x128xbf16>
    %52 = vector.shape_cast %51 : vector<1x64x128xbf16> to vector<64x128xbf16>
    %cst_42 = arith.constant dense<0.000000e+00> : vector<32x128xf32>
    %53 = tpu.matmul %50, %52, %cst_42 {dimension_numbers = #tpu.dot_dimension_numbers<[1], [0], [0], [1], [0, 0, 1, 1], [], []>} : vector<32x64xbf16>, vector<64x128xbf16>, vector<32x128xf32> -> vector<32x128xf32>
    %54 = arith.addf %47, %53 : vector<32x128xf32>
    %c0_43 = arith.constant 0 : index
    %c4 = arith.constant 4 : index
    %c0_44 = arith.constant 0 : index
    %55 = vector.load %arg16[%c0_43, %c4, %c0_44] : memref<2x20x64xf32, #tpu.memory_space<vmem>>, vector<2x16x64xf32>
    %56 = vector.shape_cast %55 : vector<2x16x64xf32> to vector<32x64xf32>
    %57 = arith.truncf %56 : vector<32x64xf32> to vector<32x64xbf16>
    %c2_45 = arith.constant 2 : index
    %c0_46 = arith.constant 0 : index
    %c0_47 = arith.constant 0 : index
    %58 = vector.load %arg5[%c2_45, %c0_46, %c0_47] : memref<3x64x128xbf16, #tpu.memory_space<vmem>>, vector<1x64x128xbf16>
    %59 = vector.shape_cast %58 : vector<1x64x128xbf16> to vector<64x128xbf16>
    %cst_48 = arith.constant dense<0.000000e+00> : vector<32x128xf32>
    %60 = tpu.matmul %57, %59, %cst_48 {dimension_numbers = #tpu.dot_dimension_numbers<[1], [0], [0], [1], [0, 0, 1, 1], [], []>} : vector<32x64xbf16>, vector<64x128xbf16>, vector<32x128xf32> -> vector<32x128xf32>
    %61 = arith.addf %54, %60 : vector<32x128xf32>
    %c0_49 = arith.constant 0 : index
    %c0_50 = arith.constant 0 : index
    %62 = vector.load %arg6[%c0_49, %c0_50] : memref<1x8xf32, #tpu.memory_space<vmem>>, vector<1x8xf32>
    %c0_51 = arith.constant 0 : index
    %c0_52 = arith.constant 0 : index
    %63 = vector.load %arg10[%c0_51, %c0_52] : memref<8x128xf32, #tpu.memory_space<vmem>>, vector<8x128xf32>
    %cst_53 = arith.constant dense<0.000000e+00> : vector<1x128xf32>
    %64 = tpu.matmul %62, %63, %cst_53 {dimension_numbers = #tpu.dot_dimension_numbers<[1], [0], [0], [1], [0, 0, 1, 1], [], []>} : vector<1x8xf32>, vector<8x128xf32>, vector<1x128xf32> -> vector<1x128xf32>
    %65 = vector.broadcast %64 : vector<1x128xf32> to vector<32x128xf32>
    %66 = arith.addf %61, %65 : vector<32x128xf32>
    %cst_54 = arith.constant dense<0.000000e+00> : vector<128xf32>
    %67 = vector.multi_reduction <add>, %66, %cst_54 [0] : vector<32x128xf32> to vector<128xf32>
    %68 = vector.shape_cast %67 : vector<128xf32> to vector<1x128xf32>
    %69 = arith.mulf %66, %66 : vector<32x128xf32>
    %cst_55 = arith.constant dense<0.000000e+00> : vector<128xf32>
    %70 = vector.multi_reduction <add>, %69, %cst_55 [0] : vector<32x128xf32> to vector<128xf32>
    %71 = vector.shape_cast %70 : vector<128xf32> to vector<1x128xf32>
    %c0_56 = arith.constant 0 : index
    %c0_57 = arith.constant 0 : index
    %72 = vector.load %arg9[%c0_56, %c0_57] : memref<128x8xf32, #tpu.memory_space<vmem>>, vector<128x8xf32>
    %cst_58 = arith.constant dense<0.000000e+00> : vector<1x8xf32>
    %73 = tpu.matmul %68, %72, %cst_58 {dimension_numbers = #tpu.dot_dimension_numbers<[1], [0], [0], [1], [0, 0, 1, 1], [], []>} : vector<1x128xf32>, vector<128x8xf32>, vector<1x8xf32> -> vector<1x8xf32>
    %c0_59 = arith.constant 0 : index
    %c0_60 = arith.constant 0 : index
    %74 = vector.load %arg9[%c0_59, %c0_60] : memref<128x8xf32, #tpu.memory_space<vmem>>, vector<128x8xf32>
    %cst_61 = arith.constant dense<0.000000e+00> : vector<1x8xf32>
    %75 = tpu.matmul %71, %74, %cst_61 {dimension_numbers = #tpu.dot_dimension_numbers<[1], [0], [0], [1], [0, 0, 1, 1], [], []>} : vector<1x128xf32>, vector<128x8xf32>, vector<1x8xf32> -> vector<1x8xf32>
    %cst_62 = arith.constant 5.120000e+02 : f32
    %76 = vector.broadcast %cst_62 : f32 to vector<1x8xf32>
    %77 = arith.divf %73, %76 : vector<1x8xf32>
    %cst_63 = arith.constant 5.120000e+02 : f32
    %78 = vector.broadcast %cst_63 : f32 to vector<1x8xf32>
    %79 = arith.divf %75, %78 : vector<1x8xf32>
    %80 = arith.mulf %77, %77 : vector<1x8xf32>
    %81 = arith.subf %79, %80 : vector<1x8xf32>
    %cst_64 = arith.constant 0.000000e+00 : f32
    %82 = vector.broadcast %cst_64 : f32 to vector<1x8xf32>
    %83 = arith.maximumf %81, %82 : vector<1x8xf32>
    %c0_65 = arith.constant 0 : index
    %c0_66 = arith.constant 0 : index
    %84 = vector.load %arg7[%c0_65, %c0_66] : memref<1x8xf32, #tpu.memory_space<vmem>>, vector<1x8xf32>
    %cst_67 = arith.constant 9.99999974E-6 : f32
    %85 = vector.broadcast %cst_67 : f32 to vector<1x8xf32>
    %86 = arith.addf %83, %85 : vector<1x8xf32>
    %87 = math.rsqrt %86 : vector<1x8xf32>
    %88 = arith.mulf %84, %87 : vector<1x8xf32>
    %c0_68 = arith.constant 0 : index
    %c0_69 = arith.constant 0 : index
    %89 = vector.load %arg8[%c0_68, %c0_69] : memref<1x8xf32, #tpu.memory_space<vmem>>, vector<1x8xf32>
    %90 = arith.mulf %77, %88 : vector<1x8xf32>
    %91 = arith.subf %89, %90 : vector<1x8xf32>
    %c0_70 = arith.constant 0 : index
    %c0_71 = arith.constant 0 : index
    %92 = vector.load %arg10[%c0_70, %c0_71] : memref<8x128xf32, #tpu.memory_space<vmem>>, vector<8x128xf32>
    %cst_72 = arith.constant dense<0.000000e+00> : vector<1x128xf32>
    %93 = tpu.matmul %88, %92, %cst_72 {dimension_numbers = #tpu.dot_dimension_numbers<[1], [0], [0], [1], [0, 0, 1, 1], [], []>} : vector<1x8xf32>, vector<8x128xf32>, vector<1x128xf32> -> vector<1x128xf32>
    %c0_73 = arith.constant 0 : index
    %c0_74 = arith.constant 0 : index
    %94 = vector.load %arg10[%c0_73, %c0_74] : memref<8x128xf32, #tpu.memory_space<vmem>>, vector<8x128xf32>
    %cst_75 = arith.constant dense<0.000000e+00> : vector<1x128xf32>
    %95 = tpu.matmul %91, %94, %cst_75 {dimension_numbers = #tpu.dot_dimension_numbers<[1], [0], [0], [1], [0, 0, 1, 1], [], []>} : vector<1x8xf32>, vector<8x128xf32>, vector<1x128xf32> -> vector<1x128xf32>
    %96 = vector.broadcast %93 : vector<1x128xf32> to vector<32x128xf32>
    %97 = arith.mulf %66, %96 : vector<32x128xf32>
    %98 = vector.broadcast %95 : vector<1x128xf32> to vector<32x128xf32>
    %99 = arith.addf %97, %98 : vector<32x128xf32>
    %cst_76 = arith.constant 0.000000e+00 : f32
    %100 = vector.broadcast %cst_76 : f32 to vector<32x128xf32>
    %101 = arith.maximumf %99, %100 : vector<32x128xf32>
    %cst_77 = arith.constant 0.000000e+00 : f32
    %102 = vector.broadcast %cst_77 : f32 to vector<2x20x128xf32>
    %c0_78 = arith.constant 0 : index
    %c0_79 = arith.constant 0 : index
    %c0_80 = arith.constant 0 : index
    %103 = vector.load %arg17[%c0_78, %c0_79, %c0_80] : memref<2x20x128xf32, #tpu.memory_space<vmem>>, vector<2x20x128xf32>
    tpu.vector_store %arg17[%c0_78, %c0_79, %c0_80], %102 {strides = array<i32>} : memref<2x20x128xf32, #tpu.memory_space<vmem>>, vector<2x20x128xf32>,
    %104 = vector.shape_cast %101 : vector<32x128xf32> to vector<2x16x128xf32>
    %c0_81 = arith.constant 0 : index
    %c2_82 = arith.constant 2 : index
    %c0_83 = arith.constant 0 : index
    %105 = vector.load %arg17[%c0_81, %c2_82, %c0_83] : memref<2x20x128xf32, #tpu.memory_space<vmem>>, vector<2x16x128xf32>
    tpu.vector_store %arg17[%c0_81, %c2_82, %c0_83], %104 {strides = array<i32>} : memref<2x20x128xf32, #tpu.memory_space<vmem>>, vector<2x16x128xf32>,
    %cst_84 = arith.constant 0.000000e+00 : f32
    %106 = vector.broadcast %cst_84 : f32 to vector<32x128xf32>
    %c0_85 = arith.constant 0 : index
    %c0_86 = arith.constant 0 : index
    %c0_87 = arith.constant 0 : index
    %107 = vector.load %arg17[%c0_85, %c0_86, %c0_87] : memref<2x20x128xf32, #tpu.memory_space<vmem>>, vector<2x16x128xf32>
    %108 = vector.shape_cast %107 : vector<2x16x128xf32> to vector<32x128xf32>
    %109 = arith.truncf %108 : vector<32x128xf32> to vector<32x128xbf16>
    %c0_88 = arith.constant 0 : index
    %c0_89 = arith.constant 0 : index
    %c0_90 = arith.constant 0 : index
    %110 = vector.load %arg11[%c0_88, %c0_89, %c0_90] : memref<3x128x128xbf16, #tpu.memory_space<vmem>>, vector<1x128x128xbf16>
    %111 = vector.shape_cast %110 : vector<1x128x128xbf16> to vector<128x128xbf16>
    %cst_91 = arith.constant dense<0.000000e+00> : vector<32x128xf32>
    %112 = tpu.matmul %109, %111, %cst_91 {dimension_numbers = #tpu.dot_dimension_numbers<[1], [0], [0], [1], [0, 0, 1, 1], [], []>} : vector<32x128xbf16>, vector<128x128xbf16>, vector<32x128xf32> -> vector<32x128xf32>
    %113 = arith.addf %106, %112 : vector<32x128xf32>
    %c0_92 = arith.constant 0 : index
    %c2_93 = arith.constant 2 : index
    %c0_94 = arith.constant 0 : index
    %114 = vector.load %arg17[%c0_92, %c2_93, %c0_94] : memref<2x20x128xf32, #tpu.memory_space<vmem>>, vector<2x16x128xf32>
    %115 = vector.shape_cast %114 : vector<2x16x128xf32> to vector<32x128xf32>
    %116 = arith.truncf %115 : vector<32x128xf32> to vector<32x128xbf16>
    %c1_95 = arith.constant 1 : index
    %c0_96 = arith.constant 0 : index
    %c0_97 = arith.constant 0 : index
    %117 = vector.load %arg11[%c1_95, %c0_96, %c0_97] : memref<3x128x128xbf16, #tpu.memory_space<vmem>>, vector<1x128x128xbf16>
    %118 = vector.shape_cast %117 : vector<1x128x128xbf16> to vector<128x128xbf16>
    %cst_98 = arith.constant dense<0.000000e+00> : vector<32x128xf32>
    %119 = tpu.matmul %116, %118, %cst_98 {dimension_numbers = #tpu.dot_dimension_numbers<[1], [0], [0], [1], [0, 0, 1, 1], [], []>} : vector<32x128xbf16>, vector<128x128xbf16>, vector<32x128xf32> -> vector<32x128xf32>
    %120 = arith.addf %113, %119 : vector<32x128xf32>
    %c0_99 = arith.constant 0 : index
    %c4_100 = arith.constant 4 : index
    %c0_101 = arith.constant 0 : index
    %121 = vector.load %arg17[%c0_99, %c4_100, %c0_101] : memref<2x20x128xf32, #tpu.memory_space<vmem>>, vector<2x16x128xf32>
    %122 = vector.shape_cast %121 : vector<2x16x128xf32> to vector<32x128xf32>
    %123 = arith.truncf %122 : vector<32x128xf32> to vector<32x128xbf16>
    %c2_102 = arith.constant 2 : index
    %c0_103 = arith.constant 0 : index
    %c0_104 = arith.constant 0 : index
    %124 = vector.load %arg11[%c2_102, %c0_103, %c0_104] : memref<3x128x128xbf16, #tpu.memory_space<vmem>>, vector<1x128x128xbf16>
    %125 = vector.shape_cast %124 : vector<1x128x128xbf16> to vector<128x128xbf16>
    %cst_105 = arith.constant dense<0.000000e+00> : vector<32x128xf32>
    %126 = tpu.matmul %123, %125, %cst_105 {dimension_numbers = #tpu.dot_dimension_numbers<[1], [0], [0], [1], [0, 0, 1, 1], [], []>} : vector<32x128xbf16>, vector<128x128xbf16>, vector<32x128xf32> -> vector<32x128xf32>
    %127 = arith.addf %120, %126 : vector<32x128xf32>
    %c0_106 = arith.constant 0 : index
    %c0_107 = arith.constant 0 : index
    %128 = vector.load %arg12[%c0_106, %c0_107] : memref<1x8xf32, #tpu.memory_space<vmem>>, vector<1x8xf32>
    %c0_108 = arith.constant 0 : index
    %c0_109 = arith.constant 0 : index
    %129 = vector.load %arg10[%c0_108, %c0_109] : memref<8x128xf32, #tpu.memory_space<vmem>>, vector<8x128xf32>
    %cst_110 = arith.constant dense<0.000000e+00> : vector<1x128xf32>
    %130 = tpu.matmul %128, %129, %cst_110 {dimension_numbers = #tpu.dot_dimension_numbers<[1], [0], [0], [1], [0, 0, 1, 1], [], []>} : vector<1x8xf32>, vector<8x128xf32>, vector<1x128xf32> -> vector<1x128xf32>
    %131 = vector.broadcast %130 : vector<1x128xf32> to vector<32x128xf32>
    %132 = arith.addf %127, %131 : vector<32x128xf32>
    %c0_111 = arith.constant 0 : index
    %c0_112 = arith.constant 0 : index
    %133 = vector.load %arg14[%c0_111, %c0_112] : memref<1x8xf32, #tpu.memory_space<vmem>>, vector<1x8xf32>
    %c0_113 = arith.constant 0 : index
    %c0_114 = arith.constant 0 : index
    %134 = vector.load %arg10[%c0_113, %c0_114] : memref<8x128xf32, #tpu.memory_space<vmem>>, vector<8x128xf32>
    %cst_115 = arith.constant dense<0.000000e+00> : vector<1x128xf32>
    %135 = tpu.matmul %133, %134, %cst_115 {dimension_numbers = #tpu.dot_dimension_numbers<[1], [0], [0], [1], [0, 0, 1, 1], [], []>} : vector<1x8xf32>, vector<8x128xf32>, vector<1x128xf32> -> vector<1x128xf32>
    %136 = arith.truncf %35 : vector<32x64xf32> to vector<32x64xbf16>
    %c0_116 = arith.constant 0 : index
    %c0_117 = arith.constant 0 : index
    %137 = vector.load %arg13[%c0_116, %c0_117] : memref<64x128xbf16, #tpu.memory_space<vmem>>, vector<64x128xbf16>
    %cst_118 = arith.constant dense<0.000000e+00> : vector<32x128xf32>
    %138 = tpu.matmul %136, %137, %cst_118 {dimension_numbers = #tpu.dot_dimension_numbers<[1], [0], [0], [1], [0, 0, 1, 1], [], []>} : vector<32x64xbf16>, vector<64x128xbf16>, vector<32x128xf32> -> vector<32x128xf32>
    %139 = vector.broadcast %135 : vector<1x128xf32> to vector<32x128xf32>
    %140 = arith.addf %138, %139 : vector<32x128xf32>
    %141 = arith.addf %140, %132 : vector<32x128xf32>
    %cst_119 = arith.constant 0.000000e+00 : f32
    %142 = vector.broadcast %cst_119 : f32 to vector<32x128xf32>
    %143 = arith.maximumf %141, %142 : vector<32x128xf32>
    %c0_120 = arith.constant 0 : index
    %c0_121 = arith.constant 0 : index
    %144 = vector.load %arg15[%c0_120, %c0_121] : memref<32x128xf32, #tpu.memory_space<vmem>>, vector<32x128xf32>
    tpu.vector_store %arg15[%c0_120, %c0_121], %143 {strides = array<i32>} : memref<32x128xf32, #tpu.memory_space<vmem>>, vector<32x128xf32>,
    return
  }
}

module attributes {stable_mosaic.version = 11 : i64} {
  func.func @_upsample_add_kernel(%arg0: i32, %arg1: memref<1x16x128xf32, #tpu.memory_space<vmem>>, %arg2: memref<1x16x512xf32, #tpu.memory_space<vmem>>, %arg3: memref<128x256xbf16, #tpu.memory_space<vmem>>, %arg4: memref<128x256xbf16, #tpu.memory_space<vmem>>, %arg5: memref<128x256xbf16, #tpu.memory_space<vmem>>, %arg6: memref<1x256xf32, #tpu.memory_space<vmem>>, %arg7: memref<1x16x512xf32, #tpu.memory_space<vmem>>, %arg8: memref<17x128xf32, #tpu.memory_space<vmem>>) attributes {dimension_semantics = [#tpu.dimension_semantics<parallel>], iteration_bounds = array<i64: 2>, scalar_prefetch = 0 : i64, scratch_operands = 1 : i64, tpu.core_type = #tpu.core_type<tc>, window_params = [{transform_indices = @transform_0, window_bounds = array<i64: 1, 16, 128>}, {transform_indices = @transform_1, window_bounds = array<i64: 1, 16, 512>}, {pipeline_mode = #tpu.pipeline_mode<synchronous>, transform_indices = @transform_2, window_bounds = array<i64: 128, 256>}, {pipeline_mode = #tpu.pipeline_mode<synchronous>, transform_indices = @transform_3, window_bounds = array<i64: 128, 256>}, {pipeline_mode = #tpu.pipeline_mode<synchronous>, transform_indices = @transform_4, window_bounds = array<i64: 128, 256>}, {pipeline_mode = #tpu.pipeline_mode<synchronous>, transform_indices = @transform_5, window_bounds = array<i64: 1, 256>}, {transform_indices = @transform_6, window_bounds = array<i64: 1, 16, 512>}]} {
    %c0 = arith.constant 0 : index
    %c0_0 = arith.constant 0 : index
    %c0_1 = arith.constant 0 : index
    %0 = vector.load %arg1[%c0, %c0_0, %c0_1] : memref<1x16x128xf32, #tpu.memory_space<vmem>>, vector<1x16x128xf32>
    %1 = vector.shape_cast %0 : vector<1x16x128xf32> to vector<16x128xf32>
    %c0_2 = arith.constant 0 : index
    %c0_3 = arith.constant 0 : index
    %2 = vector.load %arg8[%c0_2, %c0_3] : memref<17x128xf32, #tpu.memory_space<vmem>>, vector<16x128xf32>
    tpu.vector_store %arg8[%c0_2, %c0_3], %1 {strides = array<i32>} : memref<17x128xf32, #tpu.memory_space<vmem>>, vector<16x128xf32>,
    %cst = arith.constant 0.000000e+00 : f32
    %3 = vector.broadcast %cst : f32 to vector<1x128xf32>
    %c16 = arith.constant 16 : index
    %c0_4 = arith.constant 0 : index
    %4 = vector.load %arg8[%c16, %c0_4] : memref<17x128xf32, #tpu.memory_space<vmem>>, vector<1x128xf32>
    tpu.vector_store %arg8[%c16, %c0_4], %3 {strides = array<i32>} : memref<17x128xf32, #tpu.memory_space<vmem>>, vector<1x128xf32>,
    %5 = arith.truncf %1 : vector<16x128xf32> to vector<16x128xbf16>
    %c1 = arith.constant 1 : index
    %c0_5 = arith.constant 0 : index
    %6 = vector.load %arg8[%c1, %c0_5] : memref<17x128xf32, #tpu.memory_space<vmem>>, vector<16x128xf32>
    %7 = arith.truncf %6 : vector<16x128xf32> to vector<16x128xbf16>
    %c0_6 = arith.constant 0 : index
    %c0_7 = arith.constant 0 : index
    %8 = vector.load %arg6[%c0_6, %c0_7] : memref<1x256xf32, #tpu.memory_space<vmem>>, vector<1x256xf32>
    %c0_8 = arith.constant 0 : index
    %c0_9 = arith.constant 0 : index
    %9 = vector.load %arg3[%c0_8, %c0_9] : memref<128x256xbf16, #tpu.memory_space<vmem>>, vector<128x256xbf16>
    %cst_10 = arith.constant dense<0.000000e+00> : vector<16x256xf32>
    %10 = tpu.matmul %5, %9, %cst_10 {dimension_numbers = #tpu.dot_dimension_numbers<[1], [0], [0], [1], [0, 0, 1, 1], [], []>} : vector<16x128xbf16>, vector<128x256xbf16>, vector<16x256xf32> -> vector<16x256xf32>
    %11 = vector.broadcast %8 : vector<1x256xf32> to vector<16x256xf32>
    %12 = arith.addf %10, %11 : vector<16x256xf32>
    %c0_11 = arith.constant 0 : index
    %c0_12 = arith.constant 0 : index
    %13 = vector.load %arg4[%c0_11, %c0_12] : memref<128x256xbf16, #tpu.memory_space<vmem>>, vector<128x256xbf16>
    %cst_13 = arith.constant dense<0.000000e+00> : vector<16x256xf32>
    %14 = tpu.matmul %5, %13, %cst_13 {dimension_numbers = #tpu.dot_dimension_numbers<[1], [0], [0], [1], [0, 0, 1, 1], [], []>} : vector<16x128xbf16>, vector<128x256xbf16>, vector<16x256xf32> -> vector<16x256xf32>
    %c0_14 = arith.constant 0 : index
    %c0_15 = arith.constant 0 : index
    %15 = vector.load %arg5[%c0_14, %c0_15] : memref<128x256xbf16, #tpu.memory_space<vmem>>, vector<128x256xbf16>
    %cst_16 = arith.constant dense<0.000000e+00> : vector<16x256xf32>
    %16 = tpu.matmul %7, %15, %cst_16 {dimension_numbers = #tpu.dot_dimension_numbers<[1], [0], [0], [1], [0, 0, 1, 1], [], []>} : vector<16x128xbf16>, vector<128x256xbf16>, vector<16x256xf32> -> vector<16x256xf32>
    %17 = arith.addf %14, %16 : vector<16x256xf32>
    %18 = vector.broadcast %8 : vector<1x256xf32> to vector<16x256xf32>
    %19 = arith.addf %17, %18 : vector<16x256xf32>
    %c0_17 = arith.constant 0 : index
    %c0_18 = arith.constant 0 : index
    %c0_19 = arith.constant 0 : index
    %20 = vector.load %arg2[%c0_17, %c0_18, %c0_19] : memref<1x16x512xf32, #tpu.memory_space<vmem>>, vector<1x16x512xf32>
    %21 = vector.shape_cast %20 : vector<1x16x512xf32> to vector<16x512xf32>
    %22 = vector.extract_strided_slice %21 {offsets = [0, 0], sizes = [16, 256], strides = [1, 1]} : vector<16x512xf32> to vector<16x256xf32>
    %23 = arith.addf %12, %22 : vector<16x256xf32>
    %c0_20 = arith.constant 0 : index
    %c0_21 = arith.constant 0 : index
    %c0_22 = arith.constant 0 : index
    %24 = vector.load %arg7[%c0_20, %c0_21, %c0_22] : memref<1x16x512xf32, #tpu.memory_space<vmem>>, vector<1x16x256xf32>
    %25 = vector.shape_cast %24 : vector<1x16x256xf32> to vector<16x256xf32>
    %26 = vector.shape_cast %23 : vector<16x256xf32> to vector<1x16x256xf32>
    tpu.vector_store %arg7[%c0_20, %c0_21, %c0_22], %26 {strides = array<i32>} : memref<1x16x512xf32, #tpu.memory_space<vmem>>, vector<1x16x256xf32>,
    %27 = vector.extract_strided_slice %21 {offsets = [0, 256], sizes = [16, 256], strides = [1, 1]} : vector<16x512xf32> to vector<16x256xf32>
    %28 = arith.addf %19, %27 : vector<16x256xf32>
    %c0_23 = arith.constant 0 : index
    %c0_24 = arith.constant 0 : index
    %c256 = arith.constant 256 : index
    %29 = vector.load %arg7[%c0_23, %c0_24, %c256] : memref<1x16x512xf32, #tpu.memory_space<vmem>>, vector<1x16x256xf32>
    %30 = vector.shape_cast %29 : vector<1x16x256xf32> to vector<16x256xf32>
    %31 = vector.shape_cast %28 : vector<16x256xf32> to vector<1x16x256xf32>
    tpu.vector_store %arg7[%c0_23, %c0_24, %c256], %31 {strides = array<i32>} : memref<1x16x512xf32, #tpu.memory_space<vmem>>, vector<1x16x256xf32>,
    return
  }
  func.func @transform_0(%arg0: i32) -> (i32, i32, i32) {
    %c0_i32 = arith.constant 0 : i32
    %c0_i32_0 = arith.constant 0 : i32
    %c0_i32_1 = arith.constant 0 : i32
    return %arg0, %c0_i32, %c0_i32_0 : i32, i32, i32
  }
  func.func @transform_1(%arg0: i32) -> (i32, i32, i32) {
    %c0_i32 = arith.constant 0 : i32
    %c0_i32_0 = arith.constant 0 : i32
    %c0_i32_1 = arith.constant 0 : i32
    return %arg0, %c0_i32, %c0_i32_0 : i32, i32, i32
  }
  func.func @transform_2(%arg0: i32) -> (i32, i32) {
    %c0_i32 = arith.constant 0 : i32
    %c0_i32_0 = arith.constant 0 : i32
    %c0_i32_1 = arith.constant 0 : i32
    return %c0_i32, %c0_i32_0 : i32, i32
  }
  func.func @transform_3(%arg0: i32) -> (i32, i32) {
    %c0_i32 = arith.constant 0 : i32
    %c0_i32_0 = arith.constant 0 : i32
    %c0_i32_1 = arith.constant 0 : i32
    return %c0_i32, %c0_i32_0 : i32, i32
  }
  func.func @transform_4(%arg0: i32) -> (i32, i32) {
    %c0_i32 = arith.constant 0 : i32
    %c0_i32_0 = arith.constant 0 : i32
    %c0_i32_1 = arith.constant 0 : i32
    return %c0_i32, %c0_i32_0 : i32, i32
  }
  func.func @transform_5(%arg0: i32) -> (i32, i32) {
    %c0_i32 = arith.constant 0 : i32
    %c0_i32_0 = arith.constant 0 : i32
    %c0_i32_1 = arith.constant 0 : i32
    return %c0_i32, %c0_i32_0 : i32, i32
  }
  func.func @transform_6(%arg0: i32) -> (i32, i32, i32) {
    %c0_i32 = arith.constant 0 : i32
    %c0_i32_0 = arith.constant 0 : i32
    %c0_i32_1 = arith.constant 0 : i32
    return %arg0, %c0_i32, %c0_i32_0 : i32, i32, i32
  }
}

</mosaic_0001>

<llo_original>
// kernel: upblock_forward.2
$region0: #{upblock_forward.2}
  #allocation0 [shape = 'u32[]', space=smem, size = 0x4, offset = 0x4, fixed_abs, tag = 'smem constant byte address 0x4 - core index']
  #allocation1 [shape = 'u32[144,128]{1,0:T(1,128)}', space=vmem, size = 0x12000, scoped, tag = 'internal scratch']
  #allocation2 [shape = 'f32[2,20,64]{2,1,0:T(8,128)}', space=vmem, size = 0x6000, scoped, tag = 'scratch operand']
  #allocation3 [shape = 'f32[2,20,128]{2,1,0:T(8,128)}', space=vmem, size = 0x6000, scoped, tag = 'scratch operand']
  %s0 = inlined_call_operand.vmem [shape: f32[32,64], index: 0, kind: input, shape index: {}]
  %s1 = inlined_call_operand.vmem [shape: f32[1,4], index: 1, kind: input, shape index: {}]
  %s2 = inlined_call_operand.vmem [shape: f32[1,4], index: 2, kind: input, shape index: {}]
  %s3 = inlined_call_operand.vmem [shape: f32[64,4], index: 3, kind: input, shape index: {}]
  %s4 = inlined_call_operand.vmem [shape: f32[4,64], index: 4, kind: input, shape index: {}]
  %s5 = inlined_call_operand.vmem [shape: bf16[3,64,128], index: 5, kind: input, shape index: {}]
  %s6 = inlined_call_operand.vmem [shape: f32[1,8], index: 6, kind: input, shape index: {}]
  %s7 = inlined_call_operand.vmem [shape: f32[1,8], index: 7, kind: input, shape index: {}]
  %s8 = inlined_call_operand.vmem [shape: f32[1,8], index: 8, kind: input, shape index: {}]
  %s9 = inlined_call_operand.vmem [shape: f32[128,8], index: 9, kind: input, shape index: {}]
  %s10 = inlined_call_operand.vmem [shape: f32[8,128], index: 10, kind: input, shape index: {}]
  %s11 = inlined_call_operand.vmem [shape: bf16[3,128,128], index: 11, kind: input, shape index: {}]
  %s12 = inlined_call_operand.vmem [shape: f32[1,8], index: 12, kind: input, shape index: {}]
  %s13 = inlined_call_operand.vmem [shape: bf16[64,128], index: 13, kind: input, shape index: {}]
  %s14 = inlined_call_operand.vmem [shape: f32[1,8], index: 14, kind: input, shape index: {}]
  %s15 = inlined_call_operand.vmem [shape: f32[32,128], index: 15, kind: output, shape index: {}]
  %s16 = sld [smem:[#allocation0]]
  $region70: #{upblock_forward.2} parent=0
    _
  %s18 = ssub.s32 1, %s16
  %s19 = scalar_select 0, %s18, %s16
  // Predicated region
  $region2: #{upblock_forward.2} parent=0 // pred_check
    _
  $region3: #{upblock_forward.2} parent=0 // pred_check_branch
    %21 = sbr.rel (0) target = $region5
  $region4: #{upblock_forward.2} parent=0 // pred_region
    _
  $region5: #{upblock_forward.2} parent=0 // pred_fallthru
    _
  // Predicated region
  $region6: #{upblock_forward.2} parent=0 // pred_check
    _
  $region7: #{upblock_forward.2} parent=0 // pred_check_branch
    %23 = sbr.rel (0) target = $region9
  $region8: #{upblock_forward.2} parent=0 // pred_region
    _
  $region9: #{upblock_forward.2} parent=0 // pred_fallthru
    _
  // Predicated region
  $region10: #{upblock_forward.2} parent=0 // pred_check
    _
  $region11: #{upblock_forward.2} parent=0 // pred_check_branch
    %25 = sbr.rel (0) target = $region13
  $region12: #{upblock_forward.2} parent=0 // pred_region
    _
  $region13: #{upblock_forward.2} parent=0 // pred_fallthru
    _
  // Predicated region
  $region14: #{upblock_forward.2} parent=0 // pred_check
    _
  $region15: #{upblock_forward.2} parent=0 // pred_check_branch
    %27 = sbr.rel (0) target = $region17
  $region16: #{upblock_forward.2} parent=0 // pred_region
    _
  $region17: #{upblock_forward.2} parent=0 // pred_fallthru
    _
  // Predicated region
  $region18: #{upblock_forward.2} parent=0 // pred_check
    _
  $region19: #{upblock_forward.2} parent=0 // pred_check_branch
    %29 = sbr.rel (0) target = $region21
  $region20: #{upblock_forward.2} parent=0 // pred_region
    _
  $region21: #{upblock_forward.2} parent=0 // pred_fallthru
    _
  // Predicated region
  $region22: #{upblock_forward.2} parent=0 // pred_check
    _
  $region23: #{upblock_forward.2} parent=0 // pred_check_branch
    %31 = sbr.rel (0) target = $region25
  $region24: #{upblock_forward.2} parent=0 // pred_region
    _
  $region25: #{upblock_forward.2} parent=0 // pred_fallthru
    _
  // Predicated region
  $region26: #{upblock_forward.2} parent=0 // pred_check
    _
  $region27: #{upblock_forward.2} parent=0 // pred_check_branch
    %33 = sbr.rel (0) target = $region29
  $region28: #{upblock_forward.2} parent=0 // pred_region
    _
  $region29: #{upblock_forward.2} parent=0 // pred_fallthru
    _
  // Predicated region
  $region30: #{upblock_forward.2} parent=0 // pred_check
    _
  $region31: #{upblock_forward.2} parent=0 // pred_check_branch
    %35 = sbr.rel (0) target = $region33
  $region32: #{upblock_forward.2} parent=0 // pred_region
    _
  $region33: #{upblock_forward.2} parent=0 // pred_fallthru
    _
  // Predicated region
  $region34: #{upblock_forward.2} parent=0 // pred_check
    _
  $region35: #{upblock_forward.2} parent=0 // pred_check_branch
    %37 = sbr.rel (0) target = $region37
  $region36: #{upblock_forward.2} parent=0 // pred_region
    _
  $region37: #{upblock_forward.2} parent=0 // pred_fallthru
    _
  // Predicated region
  $region38: #{upblock_forward.2} parent=0 // pred_check
    _
  $region39: #{upblock_forward.2} parent=0 // pred_check_branch
    %39 = sbr.rel (0) target = $region41
  $region40: #{upblock_forward.2} parent=0 // pred_region
    _
  $region41: #{upblock_forward.2} parent=0 // pred_fallthru
    _
  // Predicated region
  $region42: #{upblock_forward.2} parent=0 // pred_check
    _
  $region43: #{upblock_forward.2} parent=0 // pred_check_branch
    %41 = sbr.rel (0) target = $region45
  $region44: #{upblock_forward.2} parent=0 // pred_region
    _
  $region45: #{upblock_forward.2} parent=0 // pred_fallthru
    _
  // Predicated region
  $region46: #{upblock_forward.2} parent=0 // pred_check
    _
  $region47: #{upblock_forward.2} parent=0 // pred_check_branch
    %43 = sbr.rel (0) target = $region49
  $region48: #{upblock_forward.2} parent=0 // pred_region
    _
  $region49: #{upblock_forward.2} parent=0 // pred_fallthru
    _
  // Predicated region
  $region50: #{upblock_forward.2} parent=0 // pred_check
    _
  $region51: #{upblock_forward.2} parent=0 // pred_check_branch
    %45 = sbr.rel (0) target = $region53
  $region52: #{upblock_forward.2} parent=0 // pred_region
    _
  $region53: #{upblock_forward.2} parent=0 // pred_fallthru
    _
  // Predicated region
  $region54: #{upblock_forward.2} parent=0 // pred_check
    _
  $region55: #{upblock_forward.2} parent=0 // pred_check_branch
    %47 = sbr.rel (0) target = $region57
  $region56: #{upblock_forward.2} parent=0 // pred_region
    _
  $region57: #{upblock_forward.2} parent=0 // pred_fallthru
    _
  // Predicated region
  $region58: #{upblock_forward.2} parent=0 // pred_check
    _
  $region59: #{upblock_forward.2} parent=0 // pred_check_branch
    %49 = sbr.rel (0) target = $region61
  $region60: #{upblock_forward.2} parent=0 // pred_region
    _
  $region61: #{upblock_forward.2} parent=0 // pred_fallthru
    _
  %v51 = vld [vmem:[%s0] sm:$0xff]
  %v52 = vld [vmem:[%s0 + $0x8] sm:$0xff]
  %v53 = vld [vmem:[%s0 + $0x10] sm:$0xff]
  %v54 = vld [vmem:[%s0 + $0x18] sm:$0xff]
  %vm55 = vcmask 523264
  %v56 = vsel %vm55, %v51, 0.0
  %v57 = vsel %vm55, %v52, 0.0
  %v58 = vadd.f32 %v56, %v57
  %v59 = vsel %vm55, %v53, 0.0
  %v60 = vadd.f32 %v58, %v59
  %v61 = vsel %vm55, %v54, 0.0
  %v62 = vadd.f32 %v60, %v61
  %v63 = vrot.slane %v62, 4
  %v64 = vadd.f32 %v62, %v63
  %v65 = vrot.slane %v64, 2
  %v66 = vadd.f32 %v64, %v65
  %v67 = vrot.slane %v66, 1
  %v68 = vadd.f32 %v66, %v67
  %v69 = vmul.f32 %v51, %v51
  %v70 = vmul.f32 %v52, %v52
  %v71 = vmul.f32 %v53, %v53
  %v72 = vmul.f32 %v54, %v54
  %v73 = vsel %vm55, %v69, 0.0
  %v74 = vsel %vm55, %v70, 0.0
  %v75 = vadd.f32 %v73, %v74
  %v76 = vsel %vm55, %v71, 0.0
  %v77 = vadd.f32 %v75, %v76
  %v78 = vsel %vm55, %v72, 0.0
  %v79 = vadd.f32 %v77, %v78
  %v80 = vrot.slane %v79, 4
  %v81 = vadd.f32 %v79, %v80
  %v82 = vrot.slane %v81, 2
  %v83 = vadd.f32 %v81, %v82
  %v84 = vrot.slane %v83, 1
  %v85 = vadd.f32 %v83, %v84
  %v86 = vld [vmem:[%s3] sm:$0xff]
  %v87 = vld [vmem:[%s3 + $0x8] sm:$0xff]
  %v88 = vld [vmem:[%s3 + $0x10] sm:$0xff]
  %v89 = vld [vmem:[%s3 + $0x18] sm:$0xff]
  %v90 = vld [vmem:[%s3 + $0x20] sm:$0xff]
  %v91 = vld [vmem:[%s3 + $0x28] sm:$0xff]
  %v92 = vld [vmem:[%s3 + $0x30] sm:$0xff]
  %v93 = vld [vmem:[%s3 + $0x38] sm:$0xff]
  %v95 = vsel %vm55, %v68, 0
  %97 = vmatprep.subr.mxu0 0.0
  %98 = vmatpush1.msra.mxu0 %v86
  %99 = vmatprep.subr.mxu0 0.0
  %100 = vmatpush1.msra.mxu0 %v87
  %101 = vmatprep.subr.mxu0 0.0
  %102 = vmatpush1.msra.mxu0 %v88
  %103 = vmatprep.subr.mxu0 0.0
  %104 = vmatpush1.msra.mxu0 %v89
  %105 = vmatprep.subr.mxu0 0.0
  %106 = vmatpush1.msra.mxu0 %v90
  %107 = vmatprep.subr.mxu0 0.0
  %108 = vmatpush1.msra.mxu0 %v91
  %109 = vmatprep.subr.mxu0 0.0
  %110 = vmatpush1.msra.mxu0 %v92
  %111 = vmatprep.subr.mxu0 0.0
  %112 = vmatpush1.msra.mxu0 %v93
  %113 = vmatprep.subr.mxu0 0.0
  %114 = vmatpush1.msra.mxu0 0.0
  %115 = vmatprep.subr.mxu0 0.0
  %116 = vmatpush1.msra.mxu0 0.0
  %117 = vmatprep.subr.mxu0 0.0
  %118 = vmatpush1.msra.mxu0 0.0
  %119 = vmatprep.subr.mxu0 0.0
  %120 = vmatpush1.msra.mxu0 0.0
  %121 = vmatprep.subr.mxu0 0.0
  %122 = vmatpush1.msra.mxu0 0.0
  %123 = vmatprep.subr.mxu0 0.0
  %124 = vmatpush1.msra.mxu0 0.0
  %125 = vmatprep.subr.mxu0 0.0
  %126 = vmatpush1.msra.mxu0 0.0
  %127 = vmatprep.subr.mxu0 0.0
  %128 = vmatpush1.msra.mxu0 0.0
  %129 = vmatprep.subr.mxu0 0.0
  %130 = vmatpush1.msra.mxu0 0.0
  %131 = vmatprep.subr.mxu0 0.0
  %132 = vmatpush1.msra.mxu0 0.0
  %133 = vmatprep.subr.mxu0 0.0
  %134 = vmatpush1.msra.mxu0 0.0
  %135 = vmatprep.subr.mxu0 0.0
  %136 = vmatpush1.msra.mxu0 0.0
  %137 = vmatprep.subr.mxu0 0.0
  %138 = vmatpush1.msra.mxu0 0.0
  %139 = vmatprep.subr.mxu0 0.0
  %140 = vmatpush1.msra.mxu0 0.0
  %141 = vmatprep.subr.mxu0 0.0
  %142 = vmatpush1.msra.mxu0 0.0
  %143 = vmatprep.subr.mxu0 0.0
  %144 = vmatpush1.msra.mxu0 0.0
  %145 = vmatprep.subr.mxu0 0.0
  %146 = vmatpush1.msra.mxu0 0.0
  %147 = vmatprep.subr.mxu0 0.0
  %148 = vmatpush1.msra.mxu0 0.0
  %149 = vmatprep.subr.mxu0 0.0
  %150 = vmatpush1.msra.mxu0 0.0
  %151 = vmatprep.subr.mxu0 0.0
  %152 = vmatpush1.msra.mxu0 0.0
  %153 = vmatprep.subr.mxu0 0.0
  %154 = vmatpush1.msra.mxu0 0.0
  %155 = vmatprep.subr.mxu0 0.0
  %156 = vmatpush1.msra.mxu0 0.0
  %157 = vmatprep.subr.mxu0 0.0
  %158 = vmatpush1.msra.mxu0 0.0
  %159 = vmatprep.subr.mxu0 0.0
  %160 = vmatpush1.msra.mxu0 0.0
  %161 = vmatprep.mubr.f32.mxu0 0.0
  %162 = vmatmul.mubr.f32.gmra.mrb[0].mxu0 %v95
  %v163 = vpop.f32.mrb[0].mxu0
  %v164 = vadd.f32 0.0, %v163
  %v165 = vpop.f32.mrb[0].mxu0
  %166 = vdwg.mxu0
  %v168 = vsel %vm55, %v85, 0
  %170 = vmatprep.subr.mxu0 0.0
  %171 = vmatpush1.msra.mxu0 %v86
  %172 = vmatprep.subr.mxu0 0.0
  %173 = vmatpush1.msra.mxu0 %v87
  %174 = vmatprep.subr.mxu0 0.0
  %175 = vmatpush1.msra.mxu0 %v88
  %176 = vmatprep.subr.mxu0 0.0
  %177 = vmatpush1.msra.mxu0 %v89
  %178 = vmatprep.subr.mxu0 0.0
  %179 = vmatpush1.msra.mxu0 %v90
  %180 = vmatprep.subr.mxu0 0.0
  %181 = vmatpush1.msra.mxu0 %v91
  %182 = vmatprep.subr.mxu0 0.0
  %183 = vmatpush1.msra.mxu0 %v92
  %184 = vmatprep.subr.mxu0 0.0
  %185 = vmatpush1.msra.mxu0 %v93
  %186 = vmatprep.subr.mxu0 0.0
  %187 = vmatpush1.msra.mxu0 0.0
  %188 = vmatprep.subr.mxu0 0.0
  %189 = vmatpush1.msra.mxu0 0.0
  %190 = vmatprep.subr.mxu0 0.0
  %191 = vmatpush1.msra.mxu0 0.0
  %192 = vmatprep.subr.mxu0 0.0
  %193 = vmatpush1.msra.mxu0 0.0
  %194 = vmatprep.subr.mxu0 0.0
  %195 = vmatpush1.msra.mxu0 0.0
  %196 = vmatprep.subr.mxu0 0.0
  %197 = vmatpush1.msra.mxu0 0.0
  %198 = vmatprep.subr.mxu0 0.0
  %199 = vmatpush1.msra.mxu0 0.0
  %200 = vmatprep.subr.mxu0 0.0
  %201 = vmatpush1.msra.mxu0 0.0
  %202 = vmatprep.subr.mxu0 0.0
  %203 = vmatpush1.msra.mxu0 0.0
  %204 = vmatprep.subr.mxu0 0.0
  %205 = vmatpush1.msra.mxu0 0.0
  %206 = vmatprep.subr.mxu0 0.0
  %207 = vmatpush1.msra.mxu0 0.0
  %208 = vmatprep.subr.mxu0 0.0
  %209 = vmatpush1.msra.mxu0 0.0
  %210 = vmatprep.subr.mxu0 0.0
  %211 = vmatpush1.msra.mxu0 0.0
  %212 = vmatprep.subr.mxu0 0.0
  %213 = vmatpush1.msra.mxu0 0.0
  %214 = vmatprep.subr.mxu0 0.0
  %215 = vmatpush1.msra.mxu0 0.0
  %216 = vmatprep.subr.mxu0 0.0
  %217 = vmatpush1.msra.mxu0 0.0
  %218 = vmatprep.subr.mxu0 0.0
  %219 = vmatpush1.msra.mxu0 0.0
  %220 = vmatprep.subr.mxu0 0.0
  %221 = vmatpush1.msra.mxu0 0.0
  %222 = vmatprep.subr.mxu0 0.0
  %223 = vmatpush1.msra.mxu0 0.0
  %224 = vmatprep.subr.mxu0 0.0
  %225 = vmatpush1.msra.mxu0 0.0
  %226 = vmatprep.subr.mxu0 0.0
  %227 = vmatpush1.msra.mxu0 0.0
  %228 = vmatprep.subr.mxu0 0.0
  %229 = vmatpush1.msra.mxu0 0.0
  %230 = vmatprep.subr.mxu0 0.0
  %231 = vmatpush1.msra.mxu0 0.0
  %232 = vmatprep.subr.mxu0 0.0
  %233 = vmatpush1.msra.mxu0 0.0
  %234 = vmatprep.mubr.f32.mxu0 0.0
  %235 = vmatmul.mubr.f32.gmra.mrb[0].mxu0 %v168
  %v236 = vpop.f32.mrb[0].mxu0
  %v237 = vadd.f32 0.0, %v236
  %v238 = vpop.f32.mrb[0].mxu0
  %239 = vdwg.mxu0
  %v240 = vrcp.pop 512.0
  %v241 = vmul.f32 %v164, %v240
  %v242 = vmul.f32 %v237, %v240
  %v243 = vmul.f32 %v241, %v241
  %v244 = vsub.f32 %v242, %v243
  %v245 = vmax.f32 %v244, 0.0
  %v246 = vld [vmem:[%s1] sm:$0x1]
  %v247 = vadd.f32 %v245, 1e-05
  %v248 = vrsqrt.pop %v247
  %v249 = vmul.f32 %v246, %v248
  %v250 = vld [vmem:[%s2] sm:$0x1]
  %v251 = vmul.f32 %v241, %v249
  %v252 = vsub.f32 %v250, %v251
  %v253 = vld [vmem:[%s4] sm:$0xf]
  %vm254 = vcmask 31744
  %v256 = vsel %vm254, %v249, 0
  %vm258 = vcmask 1043456
  %v260 = vsel %vm258, %v253, 0
  %262 = vmatprep.subr.mxu0 0.0
  %263 = vmatpush1.msra.mxu0 %v260
  %264 = vmatprep.subr.mxu0 0.0
  %265 = vmatpush1.msra.mxu0 0.0
  %266 = vmatprep.subr.mxu0 0.0
  %267 = vmatpush1.msra.mxu0 0.0
  %268 = vmatprep.subr.mxu0 0.0
  %269 = vmatpush1.msra.mxu0 0.0
  %270 = vmatprep.subr.mxu0 0.0
  %271 = vmatpush1.msra.mxu0 0.0
  %272 = vmatprep.subr.mxu0 0.0
  %273 = vmatpush1.msra.mxu0 0.0
  %274 = vmatprep.subr.mxu0 0.0
  %275 = vmatpush1.msra.mxu0 0.0
  %276 = vmatprep.subr.mxu0 0.0
  %277 = vmatpush1.msra.mxu0 0.0
  %278 = vmatprep.subr.mxu0 0.0
  %279 = vmatpush1.msra.mxu0 0.0
  %280 = vmatprep.subr.mxu0 0.0
  %281 = vmatpush1.msra.mxu0 0.0
  %282 = vmatprep.subr.mxu0 0.0
  %283 = vmatpush1.msra.mxu0 0.0
  %284 = vmatprep.subr.mxu0 0.0
  %285 = vmatpush1.msra.mxu0 0.0
  %286 = vmatprep.subr.mxu0 0.0
  %287 = vmatpush1.msra.mxu0 0.0
  %288 = vmatprep.subr.mxu0 0.0
  %289 = vmatpush1.msra.mxu0 0.0
  %290 = vmatprep.subr.mxu0 0.0
  %291 = vmatpush1.msra.mxu0 0.0
  %292 = vmatprep.subr.mxu0 0.0
  %293 = vmatpush1.msra.mxu0 0.0
  %294 = vmatprep.subr.mxu0 0.0
  %295 = vmatpush1.msra.mxu0 0.0
  %296 = vmatprep.subr.mxu0 0.0
  %297 = vmatpush1.msra.mxu0 0.0
  %298 = vmatprep.subr.mxu0 0.0
  %299 = vmatpush1.msra.mxu0 0.0
  %300 = vmatprep.subr.mxu0 0.0
  %301 = vmatpush1.msra.mxu0 0.0
  %302 = vmatprep.subr.mxu0 0.0
  %303 = vmatpush1.msra.mxu0 0.0
  %304 = vmatprep.subr.mxu0 0.0
  %305 = vmatpush1.msra.mxu0 0.0
  %306 = vmatprep.subr.mxu0 0.0
  %307 = vmatpush1.msra.mxu0 0.0
  %308 = vmatprep.subr.mxu0 0.0
  %309 = vmatpush1.msra.mxu0 0.0
  %310 = vmatprep.subr.mxu0 0.0
  %311 = vmatpush1.msra.mxu0 0.0
  %312 = vmatprep.subr.mxu0 0.0
  %313 = vmatpush1.msra.mxu0 0.0
  %314 = vmatprep.subr.mxu0 0.0
  %315 = vmatpush1.msra.mxu0 0.0
  %316 = vmatprep.subr.mxu0 0.0
  %317 = vmatpush1.msra.mxu0 0.0
  %318 = vmatprep.subr.mxu0 0.0
  %319 = vmatpush1.msra.mxu0 0.0
  %320 = vmatprep.subr.mxu0 0.0
  %321 = vmatpush1.msra.mxu0 0.0
  %322 = vmatprep.subr.mxu0 0.0
  %323 = vmatpush1.msra.mxu0 0.0
  %324 = vmatprep.subr.mxu0 0.0
  %325 = vmatpush1.msra.mxu0 0.0
  %326 = vmatprep.mubr.f32.mxu0 0.0
  %327 = vmatmul.mubr.f32.gmra.mrb[0].mxu0 %v256
  %v328 = vpop.f32.mrb[0].mxu0
  %v329 = vadd.f32 0.0, %v328
  %v330 = vpop.f32.mrb[0].mxu0
  %331 = vdwg.mxu0
  %v333 = vsel %vm254, %v252, 0
  %335 = vmatprep.subr.mxu0 0.0
  %336 = vmatpush1.msra.mxu0 %v260
  %337 = vmatprep.subr.mxu0 0.0
  %338 = vmatpush1.msra.mxu0 0.0
  %339 = vmatprep.subr.mxu0 0.0
  %340 = vmatpush1.msra.mxu0 0.0
  %341 = vmatprep.subr.mxu0 0.0
  %342 = vmatpush1.msra.mxu0 0.0
  %343 = vmatprep.subr.mxu0 0.0
  %344 = vmatpush1.msra.mxu0 0.0
  %345 = vmatprep.subr.mxu0 0.0
  %346 = vmatpush1.msra.mxu0 0.0
  %347 = vmatprep.subr.mxu0 0.0
  %348 = vmatpush1.msra.mxu0 0.0
  %349 = vmatprep.subr.mxu0 0.0
  %350 = vmatpush1.msra.mxu0 0.0
  %351 = vmatprep.subr.mxu0 0.0
  %352 = vmatpush1.msra.mxu0 0.0
  %353 = vmatprep.subr.mxu0 0.0
  %354 = vmatpush1.msra.mxu0 0.0
  %355 = vmatprep.subr.mxu0 0.0
  %356 = vmatpush1.msra.mxu0 0.0
  %357 = vmatprep.subr.mxu0 0.0
  %358 = vmatpush1.msra.mxu0 0.0
  %359 = vmatprep.subr.mxu0 0.0
  %360 = vmatpush1.msra.mxu0 0.0
  %361 = vmatprep.subr.mxu0 0.0
  %362 = vmatpush1.msra.mxu0 0.0
  %363 = vmatprep.subr.mxu0 0.0
  %364 = vmatpush1.msra.mxu0 0.0
  %365 = vmatprep.subr.mxu0 0.0
  %366 = vmatpush1.msra.mxu0 0.0
  %367 = vmatprep.subr.mxu0 0.0
  %368 = vmatpush1.msra.mxu0 0.0
  %369 = vmatprep.subr.mxu0 0.0
  %370 = vmatpush1.msra.mxu0 0.0
  %371 = vmatprep.subr.mxu0 0.0
  %372 = vmatpush1.msra.mxu0 0.0
  %373 = vmatprep.subr.mxu0 0.0
  %374 = vmatpush1.msra.mxu0 0.0
  %375 = vmatprep.subr.mxu0 0.0
  %376 = vmatpush1.msra.mxu0 0.0
  %377 = vmatprep.subr.mxu0 0.0
  %378 = vmatpush1.msra.mxu0 0.0
  %379 = vmatprep.subr.mxu0 0.0
  %380 = vmatpush1.msra.mxu0 0.0
  %381 = vmatprep.subr.mxu0 0.0
  %382 = vmatpush1.msra.mxu0 0.0
  %383 = vmatprep.subr.mxu0 0.0
  %384 = vmatpush1.msra.mxu0 0.0
  %385 = vmatprep.subr.mxu0 0.0
  %386 = vmatpush1.msra.mxu0 0.0
  %387 = vmatprep.subr.mxu0 0.0
  %388 = vmatpush1.msra.mxu0 0.0
  %389 = vmatprep.subr.mxu0 0.0
  %390 = vmatpush1.msra.mxu0 0.0
  %391 = vmatprep.subr.mxu0 0.0
  %392 = vmatpush1.msra.mxu0 0.0
  %393 = vmatprep.subr.mxu0 0.0
  %394 = vmatpush1.msra.mxu0 0.0
  %395 = vmatprep.subr.mxu0 0.0
  %396 = vmatpush1.msra.mxu0 0.0
  %397 = vmatprep.subr.mxu0 0.0
  %398 = vmatpush1.msra.mxu0 0.0
  %399 = vmatprep.mubr.f32.mxu0 0.0
  %400 = vmatmul.mubr.f32.gmra.mrb[0].mxu0 %v333
  %v401 = vpop.f32.mrb[0].mxu0
  %v402 = vadd.f32 0.0, %v401
  %v403 = vpop.f32.mrb[0].mxu0
  %404 = vdwg.mxu0
  %v405 = vlaneseq
  %v406 = vshrl.u32 %v405, 7
  %v407 = vsub.s32 0, %v406
  %v408 = vrot.slane %v329, %v407
  %v409 = vmul.f32 %v51, %v408
  %v410 = vmul.f32 %v52, %v408
  %v411 = vmul.f32 %v53, %v408
  %v412 = vmul.f32 %v54, %v408
  %v413 = vlaneseq
  %v414 = vshrl.u32 %v413, 7
  %v415 = vsub.s32 0, %v414
  %v416 = vrot.slane %v402, %v415
  %v417 = vadd.f32 %v409, %v416
  %v418 = vadd.f32 %v410, %v416
  %v419 = vadd.f32 %v411, %v416
  %v420 = vadd.f32 %v412, %v416
  %v421 = vmax.f32 %v417, 0.0
  %v422 = vmax.f32 %v418, 0.0
  %v423 = vmax.f32 %v419, 0.0
  %v424 = vmax.f32 %v420, 0.0
  %425 = vst.msk [vmem:[#allocation2] sm:$0xff] %vm55, 0.0
  %426 = vst.msk [vmem:[#allocation2 + $0x8] sm:$0xff] %vm55, 0.0
  %vm427 = vcmask 519168
  %428 = vst.msk [vmem:[#allocation2 + $0x10] sm:$0xf] %vm427, 0.0
  %429 = vst.msk [vmem:[#allocation2 + $0x18] sm:$0xff] %vm55, 0.0
  %430 = vst.msk [vmem:[#allocation2 + $0x20] sm:$0xff] %vm55, 0.0
  %431 = vst.msk [vmem:[#allocation2 + $0x28] sm:$0xf] %vm427, 0.0
  %432 = vst.msk [vmem:[#allocation2 + $0x2] sm:$0xff] %vm55, %v421
  %433 = vst.msk [vmem:[#allocation2 + $0xa] sm:$0xff] %vm55, %v422
  %434 = vst.msk [vmem:[#allocation2 + $0x1a] sm:$0xff] %vm55, %v423
  %435 = vst.msk [vmem:[#allocation2 + $0x22] sm:$0xff] %vm55, %v424
  %v436 = vld [vmem:[#allocation2] sm:$0xff]
  %v437 = vld [vmem:[#allocation2 + $0x8] sm:$0xff]
  %v438 = vld [vmem:[#allocation2 + $0x18] sm:$0xff]
  %v439 = vld [vmem:[#allocation2 + $0x20] sm:$0xff]
  %v440 = vpack.c.bf16 %v437, %v436
  %v441 = vpack.c.bf16 %v439, %v438
  %v442 = vld [vmem:[%s5] sm:$0xf]
  %v443 = vld [vmem:[%s5 + $0x4] sm:$0xf]
  %v444 = vld [vmem:[%s5 + $0x8] sm:$0xf]
  %v445 = vld [vmem:[%s5 + $0xc] sm:$0xf]
  %v446 = vld [vmem:[%s5 + $0x10] sm:$0xf]
  %v447 = vld [vmem:[%s5 + $0x14] sm:$0xf]
  %v448 = vld [vmem:[%s5 + $0x18] sm:$0xf]
  %v449 = vld [vmem:[%s5 + $0x1c] sm:$0xf]
  %v450 = vld [vmem:[#allocation2 + $0x2] sm:$0xff]
  %v451 = vld [vmem:[#allocation2 + $0xa] sm:$0xff]
  %v452 = vld [vmem:[#allocation2 + $0x1a] sm:$0xff]
  %v453 = vld [vmem:[#allocation2 + $0x22] sm:$0xff]
  %v454 = vpack.c.bf16 %v451, %v450
  %v455 = vpack.c.bf16 %v453, %v452
  %s456 = scalar_lea.vmem %s5, 32
  %v457 = vld [vmem:[%s456] sm:$0xf]
  %v458 = vld [vmem:[%s456 + $0x4] sm:$0xf]
  %v459 = vld [vmem:[%s456 + $0x8] sm:$0xf]
  %v460 = vld [vmem:[%s456 + $0xc] sm:$0xf]
  %v461 = vld [vmem:[%s456 + $0x10] sm:$0xf]
  %v462 = vld [vmem:[%s456 + $0x14] sm:$0xf]
  %v463 = vld [vmem:[%s456 + $0x18] sm:$0xf]
  %v464 = vld [vmem:[%s456 + $0x1c] sm:$0xf]
  %v473 = vunpack.c.l.b16 %v457
  %v474 = vunpack.c.l.b16 %v458
  %v475 = vunpack.c.l.b16 %v459
  %v476 = vunpack.c.l.b16 %v460
  %v477 = vunpack.c.l.b16 %v461
  %v478 = vunpack.c.l.b16 %v462
  %v479 = vunpack.c.l.b16 %v463
  %v480 = vunpack.c.l.b16 %v464
  %v481 = vpack.c.b16 %v474, %v473
  %v482 = vpack.c.b16 %v476, %v475
  %v483 = vpack.c.b16 %v478, %v477
  %v484 = vpack.c.b16 %v480, %v479
  %v490 = vsel %vm55, %v454, 0
  %v493 = vsel %vm55, %v455, 0
  %495 = vmatprep.subr.bf16.mxu0 0
  %496 = vmatpush1.bf16.msra.mxu0 %v481
  %497 = vmatprep.subr.bf16.mxu0 0
  %498 = vmatpush1.bf16.msra.mxu0 %v482
  %499 = vmatprep.subr.bf16.mxu0 0
  %500 = vmatpush1.bf16.msra.mxu0 %v483
  %501 = vmatprep.subr.bf16.mxu0 0
  %502 = vmatpush1.bf16.msra.mxu0 %v484
  %503 = vmatprep.subr.bf16.mxu0 0
  %504 = vmatpush1.bf16.msra.mxu0 0
  %505 = vmatprep.subr.bf16.mxu0 0
  %506 = vmatpush1.bf16.msra.mxu0 0
  %507 = vmatprep.subr.bf16.mxu0 0
  %508 = vmatpush1.bf16.msra.mxu0 0
  %509 = vmatprep.subr.bf16.mxu0 0
  %510 = vmatpush1.bf16.msra.mxu0 0
  %511 = vmatprep.subr.bf16.mxu0 0
  %512 = vmatpush1.bf16.msra.mxu0 0
  %513 = vmatprep.subr.bf16.mxu0 0
  %514 = vmatpush1.bf16.msra.mxu0 0
  %515 = vmatprep.subr.bf16.mxu0 0
  %516 = vmatpush1.bf16.msra.mxu0 0
  %517 = vmatprep.subr.bf16.mxu0 0
  %518 = vmatpush1.bf16.msra.mxu0 0
  %519 = vmatprep.subr.bf16.mxu0 0
  %520 = vmatpush1.bf16.msra.mxu0 0
  %521 = vmatprep.subr.bf16.mxu0 0
  %522 = vmatpush1.bf16.msra.mxu0 0
  %523 = vmatprep.subr.bf16.mxu0 0
  %524 = vmatpush1.bf16.msra.mxu0 0
  %525 = vmatprep.subr.bf16.mxu0 0
  %526 = vmatpush1.bf16.msra.mxu0 0
  %527 = vmatprep.mubr.bf16.mxu0 0
  %528 = vmatmul.mubr.bf16.gmra.mrb[0].mxu0 %v490
  %v529 = vpop.f32.mrb[0].mxu0
  %v530 = vadd.f32 0.0, %v529
  %v531 = vpop.f32.mrb[0].mxu0
  %v532 = vpop.f32.mrb[0].mxu0
  %v533 = vadd.f32 0.0, %v532
  %v534 = vpop.f32.mrb[0].mxu0
  %535 = vmatprep.mubr.bf16.mxu0 0
  %536 = vmatmul.mubr.bf16.gmra.mrb[0].mxu0 %v493
  %v537 = vpop.f32.mrb[0].mxu0
  %v538 = vadd.f32 0.0, %v537
  %v539 = vpop.f32.mrb[0].mxu0
  %v540 = vpop.f32.mrb[0].mxu0
  %v541 = vadd.f32 0.0, %v540
  %v542 = vpop.f32.mrb[0].mxu0
  %543 = vdwg.mxu0
  %v552 = vunpack.c.l.b16 %v442
  %v553 = vunpack.c.l.b16 %v443
  %v554 = vunpack.c.l.b16 %v444
  %v555 = vunpack.c.l.b16 %v445
  %v556 = vunpack.c.l.b16 %v446
  %v557 = vunpack.c.l.b16 %v447
  %v558 = vunpack.c.l.b16 %v448
  %v559 = vunpack.c.l.b16 %v449
  %v560 = vpack.c.b16 %v553, %v552
  %v561 = vpack.c.b16 %v555, %v554
  %v562 = vpack.c.b16 %v557, %v556
  %v563 = vpack.c.b16 %v559, %v558
  %v569 = vsel %vm55, %v440, 0
  %v572 = vsel %vm55, %v441, 0
  %574 = vmatprep.subr.bf16.mxu0 0
  %575 = vmatpush1.bf16.msra.mxu0 %v560
  %576 = vmatprep.subr.bf16.mxu0 0
  %577 = vmatpush1.bf16.msra.mxu0 %v561
  %578 = vmatprep.subr.bf16.mxu0 0
  %579 = vmatpush1.bf16.msra.mxu0 %v562
  %580 = vmatprep.subr.bf16.mxu0 0
  %581 = vmatpush1.bf16.msra.mxu0 %v563
  %582 = vmatprep.subr.bf16.mxu0 0
  %583 = vmatpush1.bf16.msra.mxu0 0
  %584 = vmatprep.subr.bf16.mxu0 0
  %585 = vmatpush1.bf16.msra.mxu0 0
  %586 = vmatprep.subr.bf16.mxu0 0
  %587 = vmatpush1.bf16.msra.mxu0 0
  %588 = vmatprep.subr.bf16.mxu0 0
  %589 = vmatpush1.bf16.msra.mxu0 0
  %590 = vmatprep.subr.bf16.mxu0 0
  %591 = vmatpush1.bf16.msra.mxu0 0
  %592 = vmatprep.subr.bf16.mxu0 0
  %593 = vmatpush1.bf16.msra.mxu0 0
  %594 = vmatprep.subr.bf16.mxu0 0
  %595 = vmatpush1.bf16.msra.mxu0 0
  %596 = vmatprep.subr.bf16.mxu0 0
  %597 = vmatpush1.bf16.msra.mxu0 0
  %598 = vmatprep.subr.bf16.mxu0 0
  %599 = vmatpush1.bf16.msra.mxu0 0
  %600 = vmatprep.subr.bf16.mxu0 0
  %601 = vmatpush1.bf16.msra.mxu0 0
  %602 = vmatprep.subr.bf16.mxu0 0
  %603 = vmatpush1.bf16.msra.mxu0 0
  %604 = vmatprep.subr.bf16.mxu0 0
  %605 = vmatpush1.bf16.msra.mxu0 0
  %606 = vmatprep.mubr.bf16.mxu0 0
  %607 = vmatmul.mubr.bf16.gmra.mrb[0].mxu0 %v569
  %v608 = vpop.f32.mrb[0].mxu0
  %v609 = vadd.f32 %v530, %v608
  %v610 = vpop.f32.mrb[0].mxu0
  %v611 = vpop.f32.mrb[0].mxu0
  %v612 = vadd.f32 %v533, %v611
  %v613 = vpop.f32.mrb[0].mxu0
  %614 = vmatprep.mubr.bf16.mxu0 0
  %615 = vmatmul.mubr.bf16.gmra.mrb[0].mxu0 %v572
  %v616 = vpop.f32.mrb[0].mxu0
  %v617 = vadd.f32 %v538, %v616
  %v618 = vpop.f32.mrb[0].mxu0
  %v619 = vpop.f32.mrb[0].mxu0
  %v620 = vadd.f32 %v541, %v619
  %v621 = vpop.f32.mrb[0].mxu0
  %622 = vdwg.mxu0
  %v623 = vld [vmem:[#allocation2 + $0x4] sm:$0xff]
  %v624 = vld [vmem:[#allocation2 + $0xc] sm:$0xff]
  %v625 = vld [vmem:[#allocation2 + $0x1c] sm:$0xff]
  %v626 = vld [vmem:[#allocation2 + $0x24] sm:$0xff]
  %v627 = vpack.c.bf16 %v624, %v623
  %v628 = vpack.c.bf16 %v626, %v625
  %s629 = scalar_lea.vmem %s5, 64
  %v630 = vld [vmem:[%s629] sm:$0xf]
  %v631 = vld [vmem:[%s629 + $0x4] sm:$0xf]
  %v632 = vld [vmem:[%s629 + $0x8] sm:$0xf]
  %v633 = vld [vmem:[%s629 + $0xc] sm:$0xf]
  %v634 = vld [vmem:[%s629 + $0x10] sm:$0xf]
  %v635 = vld [vmem:[%s629 + $0x14] sm:$0xf]
  %v636 = vld [vmem:[%s629 + $0x18] sm:$0xf]
  %v637 = vld [vmem:[%s629 + $0x1c] sm:$0xf]
  %v646 = vunpack.c.l.b16 %v630
  %v647 = vunpack.c.l.b16 %v631
  %v648 = vunpack.c.l.b16 %v632
  %v649 = vunpack.c.l.b16 %v633
  %v650 = vunpack.c.l.b16 %v634
  %v651 = vunpack.c.l.b16 %v635
  %v652 = vunpack.c.l.b16 %v636
  %v653 = vunpack.c.l.b16 %v637
  %v654 = vpack.c.b16 %v647, %v646
  %v655 = vpack.c.b16 %v649, %v648
  %v656 = vpack.c.b16 %v651, %v650
  %v657 = vpack.c.b16 %v653, %v652
  %v663 = vsel %vm55, %v627, 0
  %v666 = vsel %vm55, %v628, 0
  %668 = vmatprep.subr.bf16.mxu0 0
  %669 = vmatpush1.bf16.msra.mxu0 %v654
  %670 = vmatprep.subr.bf16.mxu0 0
  %671 = vmatpush1.bf16.msra.mxu0 %v655
  %672 = vmatprep.subr.bf16.mxu0 0
  %673 = vmatpush1.bf16.msra.mxu0 %v656
  %674 = vmatprep.subr.bf16.mxu0 0
  %675 = vmatpush1.bf16.msra.mxu0 %v657
  %676 = vmatprep.subr.bf16.mxu0 0
  %677 = vmatpush1.bf16.msra.mxu0 0
  %678 = vmatprep.subr.bf16.mxu0 0
  %679 = vmatpush1.bf16.msra.mxu0 0
  %680 = vmatprep.subr.bf16.mxu0 0
  %681 = vmatpush1.bf16.msra.mxu0 0
  %682 = vmatprep.subr.bf16.mxu0 0
  %683 = vmatpush1.bf16.msra.mxu0 0
  %684 = vmatprep.subr.bf16.mxu0 0
  %685 = vmatpush1.bf16.msra.mxu0 0
  %686 = vmatprep.subr.bf16.mxu0 0
  %687 = vmatpush1.bf16.msra.mxu0 0
  %688 = vmatprep.subr.bf16.mxu0 0
  %689 = vmatpush1.bf16.msra.mxu0 0
  %690 = vmatprep.subr.bf16.mxu0 0
  %691 = vmatpush1.bf16.msra.mxu0 0
  %692 = vmatprep.subr.bf16.mxu0 0
  %693 = vmatpush1.bf16.msra.mxu0 0
  %694 = vmatprep.subr.bf16.mxu0 0
  %695 = vmatpush1.bf16.msra.mxu0 0
  %696 = vmatprep.subr.bf16.mxu0 0
  %697 = vmatpush1.bf16.msra.mxu0 0
  %698 = vmatprep.subr.bf16.mxu0 0
  %699 = vmatpush1.bf16.msra.mxu0 0
  %700 = vmatprep.mubr.bf16.mxu0 0
  %701 = vmatmul.mubr.bf16.gmra.mrb[0].mxu0 %v663
  %v702 = vpop.f32.mrb[0].mxu0
  %v703 = vadd.f32 0.0, %v702
  %v704 = vpop.f32.mrb[0].mxu0
  %v705 = vpop.f32.mrb[0].mxu0
  %v706 = vadd.f32 0.0, %v705
  %v707 = vpop.f32.mrb[0].mxu0
  %708 = vmatprep.mubr.bf16.mxu0 0
  %709 = vmatmul.mubr.bf16.gmra.mrb[0].mxu0 %v666
  %v710 = vpop.f32.mrb[0].mxu0
  %v711 = vadd.f32 0.0, %v710
  %v712 = vpop.f32.mrb[0].mxu0
  %v713 = vpop.f32.mrb[0].mxu0
  %v714 = vadd.f32 0.0, %v713
  %v715 = vpop.f32.mrb[0].mxu0
  %716 = vdwg.mxu0
  %v717 = vadd.f32 %v609, %v703
  %v718 = vadd.f32 %v612, %v706
  %v719 = vadd.f32 %v617, %v711
  %v720 = vadd.f32 %v620, %v714
  %v721 = vld [vmem:[%s6] sm:$0x1]
  %v722 = vld [vmem:[%s10] sm:$0xff]
  %vm723 = vcmask 64512
  %v725 = vsel %vm723, %v721, 0
  %727 = vmatprep.subr.mxu0 0.0
  %728 = vmatpush1.msra.mxu0 %v722
  %729 = vmatprep.subr.mxu0 0.0
  %730 = vmatpush1.msra.mxu0 0.0
  %731 = vmatprep.subr.mxu0 0.0
  %732 = vmatpush1.msra.mxu0 0.0
  %733 = vmatprep.subr.mxu0 0.0
  %734 = vmatpush1.msra.mxu0 0.0
  %735 = vmatprep.subr.mxu0 0.0
  %736 = vmatpush1.msra.mxu0 0.0
  %737 = vmatprep.subr.mxu0 0.0
  %738 = vmatpush1.msra.mxu0 0.0
  %739 = vmatprep.subr.mxu0 0.0
  %740 = vmatpush1.msra.mxu0 0.0
  %741 = vmatprep.subr.mxu0 0.0
  %742 = vmatpush1.msra.mxu0 0.0
  %743 = vmatprep.subr.mxu0 0.0
  %744 = vmatpush1.msra.mxu0 0.0
  %745 = vmatprep.subr.mxu0 0.0
  %746 = vmatpush1.msra.mxu0 0.0
  %747 = vmatprep.subr.mxu0 0.0
  %748 = vmatpush1.msra.mxu0 0.0
  %749 = vmatprep.subr.mxu0 0.0
  %750 = vmatpush1.msra.mxu0 0.0
  %751 = vmatprep.subr.mxu0 0.0
  %752 = vmatpush1.msra.mxu0 0.0
  %753 = vmatprep.subr.mxu0 0.0
  %754 = vmatpush1.msra.mxu0 0.0
  %755 = vmatprep.subr.mxu0 0.0
  %756 = vmatpush1.msra.mxu0 0.0
  %757 = vmatprep.subr.mxu0 0.0
  %758 = vmatpush1.msra.mxu0 0.0
  %759 = vmatprep.subr.mxu0 0.0
  %760 = vmatpush1.msra.mxu0 0.0
  %761 = vmatprep.subr.mxu0 0.0
  %762 = vmatpush1.msra.mxu0 0.0
  %763 = vmatprep.subr.mxu0 0.0
  %764 = vmatpush1.msra.mxu0 0.0
  %765 = vmatprep.subr.mxu0 0.0
  %766 = vmatpush1.msra.mxu0 0.0
  %767 = vmatprep.subr.mxu0 0.0
  %768 = vmatpush1.msra.mxu0 0.0
  %769 = vmatprep.subr.mxu0 0.0
  %770 = vmatpush1.msra.mxu0 0.0
  %771 = vmatprep.subr.mxu0 0.0
  %772 = vmatpush1.msra.mxu0 0.0
  %773 = vmatprep.subr.mxu0 0.0
  %774 = vmatpush1.msra.mxu0 0.0
  %775 = vmatprep.subr.mxu0 0.0
  %776 = vmatpush1.msra.mxu0 0.0
  %777 = vmatprep.subr.mxu0 0.0
  %778 = vmatpush1.msra.mxu0 0.0
  %779 = vmatprep.subr.mxu0 0.0
  %780 = vmatpush1.msra.mxu0 0.0
  %781 = vmatprep.subr.mxu0 0.0
  %782 = vmatpush1.msra.mxu0 0.0
  %783 = vmatprep.subr.mxu0 0.0
  %784 = vmatpush1.msra.mxu0 0.0
  %785 = vmatprep.subr.mxu0 0.0
  %786 = vmatpush1.msra.mxu0 0.0
  %787 = vmatprep.subr.mxu0 0.0
  %788 = vmatpush1.msra.mxu0 0.0
  %789 = vmatprep.subr.mxu0 0.0
  %790 = vmatpush1.msra.mxu0 0.0
  %791 = vmatprep.mubr.f32.mxu0 0.0
  %792 = vmatmul.mubr.f32.gmra.mrb[0].mxu0 %v725
  %v793 = vpop.f32.mrb[0].mxu0
  %v794 = vadd.f32 0.0, %v793
  %v795 = vpop.f32.mrb[0].mxu0
  %796 = vdwg.mxu0
  %v797 = vlaneseq
  %v798 = vshrl.u32 %v797, 7
  %v799 = vsub.s32 0, %v798
  %v800 = vrot.slane %v794, %v799
  %v801 = vadd.f32 %v717, %v800
  %v802 = vadd.f32 %v718, %v800
  %v803 = vadd.f32 %v719, %v800
  %v804 = vadd.f32 %v720, %v800
  %v805 = vadd.f32 %v801, %v802
  %v806 = vadd.f32 %v805, %v803
  %v807 = vadd.f32 %v806, %v804
  %v808 = vrot.slane %v807, 4
  %v809 = vadd.f32 %v807, %v808
  %v810 = vrot.slane %v809, 2
  %v811 = vadd.f32 %v809, %v810
  %v812 = vrot.slane %v811, 1
  %v813 = vadd.f32 %v811, %v812
  %v814 = vmul.f32 %v801, %v801
  %v815 = vmul.f32 %v802, %v802
  %v816 = vmul.f32 %v803, %v803
  %v817 = vmul.f32 %v804, %v804
  %v818 = vadd.f32 %v814, %v815
  %v819 = vadd.f32 %v818, %v816
  %v820 = vadd.f32 %v819, %v817
  %v821 = vrot.slane %v820, 4
  %v822 = vadd.f32 %v820, %v821
  %v823 = vrot.slane %v822, 2
  %v824 = vadd.f32 %v822, %v823
  %v825 = vrot.slane %v824, 1
  %v826 = vadd.f32 %v824, %v825
  %v827 = vld [vmem:[%s9] sm:$0xff]
  %v828 = vld [vmem:[%s9 + $0x8] sm:$0xff]
  %v829 = vld [vmem:[%s9 + $0x10] sm:$0xff]
  %v830 = vld [vmem:[%s9 + $0x18] sm:$0xff]
  %v831 = vld [vmem:[%s9 + $0x20] sm:$0xff]
  %v832 = vld [vmem:[%s9 + $0x28] sm:$0xff]
  %v833 = vld [vmem:[%s9 + $0x30] sm:$0xff]
  %v834 = vld [vmem:[%s9 + $0x38] sm:$0xff]
  %v835 = vld [vmem:[%s9 + $0x40] sm:$0xff]
  %v836 = vld [vmem:[%s9 + $0x48] sm:$0xff]
  %v837 = vld [vmem:[%s9 + $0x50] sm:$0xff]
  %v838 = vld [vmem:[%s9 + $0x58] sm:$0xff]
  %v839 = vld [vmem:[%s9 + $0x60] sm:$0xff]
  %v840 = vld [vmem:[%s9 + $0x68] sm:$0xff]
  %v841 = vld [vmem:[%s9 + $0x70] sm:$0xff]
  %v842 = vld [vmem:[%s9 + $0x78] sm:$0xff]
  %843 = vmatprep.subr.mxu0 0.0
  %844 = vmatpush1.msra.mxu0 %v827
  %845 = vmatprep.subr.mxu0 0.0
  %846 = vmatpush1.msra.mxu0 %v828
  %847 = vmatprep.subr.mxu0 0.0
  %848 = vmatpush1.msra.mxu0 %v829
  %849 = vmatprep.subr.mxu0 0.0
  %850 = vmatpush1.msra.mxu0 %v830
  %851 = vmatprep.subr.mxu0 0.0
  %852 = vmatpush1.msra.mxu0 %v831
  %853 = vmatprep.subr.mxu0 0.0
  %854 = vmatpush1.msra.mxu0 %v832
  %855 = vmatprep.subr.mxu0 0.0
  %856 = vmatpush1.msra.mxu0 %v833
  %857 = vmatprep.subr.mxu0 0.0
  %858 = vmatpush1.msra.mxu0 %v834
  %859 = vmatprep.subr.mxu0 0.0
  %860 = vmatpush1.msra.mxu0 %v835
  %861 = vmatprep.subr.mxu0 0.0
  %862 = vmatpush1.msra.mxu0 %v836
  %863 = vmatprep.subr.mxu0 0.0
  %864 = vmatpush1.msra.mxu0 %v837
  %865 = vmatprep.subr.mxu0 0.0
  %866 = vmatpush1.msra.mxu0 %v838
  %867 = vmatprep.subr.mxu0 0.0
  %868 = vmatpush1.msra.mxu0 %v839
  %869 = vmatprep.subr.mxu0 0.0
  %870 = vmatpush1.msra.mxu0 %v840
  %871 = vmatprep.subr.mxu0 0.0
  %872 = vmatpush1.msra.mxu0 %v841
  %873 = vmatprep.subr.mxu0 0.0
  %874 = vmatpush1.msra.mxu0 %v842
  %875 = vmatprep.subr.mxu0 0.0
  %876 = vmatpush1.msra.mxu0 0.0
  %877 = vmatprep.subr.mxu0 0.0
  %878 = vmatpush1.msra.mxu0 0.0
  %879 = vmatprep.subr.mxu0 0.0
  %880 = vmatpush1.msra.mxu0 0.0
  %881 = vmatprep.subr.mxu0 0.0
  %882 = vmatpush1.msra.mxu0 0.0
  %883 = vmatprep.subr.mxu0 0.0
  %884 = vmatpush1.msra.mxu0 0.0
  %885 = vmatprep.subr.mxu0 0.0
  %886 = vmatpush1.msra.mxu0 0.0
  %887 = vmatprep.subr.mxu0 0.0
  %888 = vmatpush1.msra.mxu0 0.0
  %889 = vmatprep.subr.mxu0 0.0
  %890 = vmatpush1.msra.mxu0 0.0
  %891 = vmatprep.subr.mxu0 0.0
  %892 = vmatpush1.msra.mxu0 0.0
  %893 = vmatprep.subr.mxu0 0.0
  %894 = vmatpush1.msra.mxu0 0.0
  %895 = vmatprep.subr.mxu0 0.0
  %896 = vmatpush1.msra.mxu0 0.0
  %897 = vmatprep.subr.mxu0 0.0
  %898 = vmatpush1.msra.mxu0 0.0
  %899 = vmatprep.subr.mxu0 0.0
  %900 = vmatpush1.msra.mxu0 0.0
  %901 = vmatprep.subr.mxu0 0.0
  %902 = vmatpush1.msra.mxu0 0.0
  %903 = vmatprep.subr.mxu0 0.0
  %904 = vmatpush1.msra.mxu0 0.0
  %905 = vmatprep.subr.mxu0 0.0
  %906 = vmatpush1.msra.mxu0 0.0
  %907 = vmatprep.mubr.f32.mxu0 0.0
  %908 = vmatmul.mubr.f32.gmra.mrb[0].mxu0 %v813
  %v909 = vpop.f32.mrb[0].mxu0
  %v910 = vadd.f32 0.0, %v909
  %v911 = vpop.f32.mrb[0].mxu0
  %912 = vdwg.mxu0
  %913 = vmatprep.subr.mxu0 0.0
  %914 = vmatpush1.msra.mxu0 %v827
  %915 = vmatprep.subr.mxu0 0.0
  %916 = vmatpush1.msra.mxu0 %v828
  %917 = vmatprep.subr.mxu0 0.0
  %918 = vmatpush1.msra.mxu0 %v829
  %919 = vmatprep.subr.mxu0 0.0
  %920 = vmatpush1.msra.mxu0 %v830
  %921 = vmatprep.subr.mxu0 0.0
  %922 = vmatpush1.msra.mxu0 %v831
  %923 = vmatprep.subr.mxu0 0.0
  %924 = vmatpush1.msra.mxu0 %v832
  %925 = vmatprep.subr.mxu0 0.0
  %926 = vmatpush1.msra.mxu0 %v833
  %927 = vmatprep.subr.mxu0 0.0
  %928 = vmatpush1.msra.mxu0 %v834
  %929 = vmatprep.subr.mxu0 0.0
  %930 = vmatpush1.msra.mxu0 %v835
  %931 = vmatprep.subr.mxu0 0.0
  %932 = vmatpush1.msra.mxu0 %v836
  %933 = vmatprep.subr.mxu0 0.0
  %934 = vmatpush1.msra.mxu0 %v837
  %935 = vmatprep.subr.mxu0 0.0
  %936 = vmatpush1.msra.mxu0 %v838
  %937 = vmatprep.subr.mxu0 0.0
  %938 = vmatpush1.msra.mxu0 %v839
  %939 = vmatprep.subr.mxu0 0.0
  %940 = vmatpush1.msra.mxu0 %v840
  %941 = vmatprep.subr.mxu0 0.0
  %942 = vmatpush1.msra.mxu0 %v841
  %943 = vmatprep.subr.mxu0 0.0
  %944 = vmatpush1.msra.mxu0 %v842
  %945 = vmatprep.subr.mxu0 0.0
  %946 = vmatpush1.msra.mxu0 0.0
  %947 = vmatprep.subr.mxu0 0.0
  %948 = vmatpush1.msra.mxu0 0.0
  %949 = vmatprep.subr.mxu0 0.0
  %950 = vmatpush1.msra.mxu0 0.0
  %951 = vmatprep.subr.mxu0 0.0
  %952 = vmatpush1.msra.mxu0 0.0
  %953 = vmatprep.subr.mxu0 0.0
  %954 = vmatpush1.msra.mxu0 0.0
  %955 = vmatprep.subr.mxu0 0.0
  %956 = vmatpush1.msra.mxu0 0.0
  %957 = vmatprep.subr.mxu0 0.0
  %958 = vmatpush1.msra.mxu0 0.0
  %959 = vmatprep.subr.mxu0 0.0
  %960 = vmatpush1.msra.mxu0 0.0
  %961 = vmatprep.subr.mxu0 0.0
  %962 = vmatpush1.msra.mxu0 0.0
  %963 = vmatprep.subr.mxu0 0.0
  %964 = vmatpush1.msra.mxu0 0.0
  %965 = vmatprep.subr.mxu0 0.0
  %966 = vmatpush1.msra.mxu0 0.0
  %967 = vmatprep.subr.mxu0 0.0
  %968 = vmatpush1.msra.mxu0 0.0
  %969 = vmatprep.subr.mxu0 0.0
  %970 = vmatpush1.msra.mxu0 0.0
  %971 = vmatprep.subr.mxu0 0.0
  %972 = vmatpush1.msra.mxu0 0.0
  %973 = vmatprep.subr.mxu0 0.0
  %974 = vmatpush1.msra.mxu0 0.0
  %975 = vmatprep.subr.mxu0 0.0
  %976 = vmatpush1.msra.mxu0 0.0
  %977 = vmatprep.mubr.f32.mxu0 0.0
  %978 = vmatmul.mubr.f32.gmra.mrb[0].mxu0 %v826
  %v979 = vpop.f32.mrb[0].mxu0
  %v980 = vadd.f32 0.0, %v979
  %v981 = vpop.f32.mrb[0].mxu0
  %982 = vdwg.mxu0
  %v983 = vmul.f32 %v910, %v240
  %v984 = vmul.f32 %v980, %v240
  %v985 = vmul.f32 %v983, %v983
  %v986 = vsub.f32 %v984, %v985
  %v987 = vmax.f32 %v986, 0.0
  %v988 = vld [vmem:[%s7] sm:$0x1]
  %v989 = vadd.f32 %v987, 1e-05
  %v990 = vrsqrt.pop %v989
  %v991 = vmul.f32 %v988, %v990
  %v992 = vld [vmem:[%s8] sm:$0x1]
  %v993 = vmul.f32 %v983, %v991
  %v994 = vsub.f32 %v992, %v993
  %v996 = vsel %vm723, %v991, 0
  %998 = vmatprep.subr.mxu0 0.0
  %999 = vmatpush1.msra.mxu0 %v722
  %1000 = vmatprep.subr.mxu0 0.0
  %1001 = vmatpush1.msra.mxu0 0.0
  %1002 = vmatprep.subr.mxu0 0.0
  %1003 = vmatpush1.msra.mxu0 0.0
  %1004 = vmatprep.subr.mxu0 0.0
  %1005 = vmatpush1.msra.mxu0 0.0
  %1006 = vmatprep.subr.mxu0 0.0
  %1007 = vmatpush1.msra.mxu0 0.0
  %1008 = vmatprep.subr.mxu0 0.0
  %1009 = vmatpush1.msra.mxu0 0.0
  %1010 = vmatprep.subr.mxu0 0.0
  %1011 = vmatpush1.msra.mxu0 0.0
  %1012 = vmatprep.subr.mxu0 0.0
  %1013 = vmatpush1.msra.mxu0 0.0
  %1014 = vmatprep.subr.mxu0 0.0
  %1015 = vmatpush1.msra.mxu0 0.0
  %1016 = vmatprep.subr.mxu0 0.0
  %1017 = vmatpush1.msra.mxu0 0.0
  %1018 = vmatprep.subr.mxu0 0.0
  %1019 = vmatpush1.msra.mxu0 0.0
  %1020 = vmatprep.subr.mxu0 0.0
  %1021 = vmatpush1.msra.mxu0 0.0
  %1022 = vmatprep.subr.mxu0 0.0
  %1023 = vmatpush1.msra.mxu0 0.0
  %1024 = vmatprep.subr.mxu0 0.0
  %1025 = vmatpush1.msra.mxu0 0.0
  %1026 = vmatprep.subr.mxu0 0.0
  %1027 = vmatpush1.msra.mxu0 0.0
  %1028 = vmatprep.subr.mxu0 0.0
  %1029 = vmatpush1.msra.mxu0 0.0
  %1030 = vmatprep.subr.mxu0 0.0
  %1031 = vmatpush1.msra.mxu0 0.0
  %1032 = vmatprep.subr.mxu0 0.0
  %1033 = vmatpush1.msra.mxu0 0.0
  %1034 = vmatprep.subr.mxu0 0.0
  %1035 = vmatpush1.msra.mxu0 0.0
  %1036 = vmatprep.subr.mxu0 0.0
  %1037 = vmatpush1.msra.mxu0 0.0
  %1038 = vmatprep.subr.mxu0 0.0
  %1039 = vmatpush1.msra.mxu0 0.0
  %1040 = vmatprep.subr.mxu0 0.0
  %1041 = vmatpush1.msra.mxu0 0.0
  %1042 = vmatprep.subr.mxu0 0.0
  %1043 = vmatpush1.msra.mxu0 0.0
  %1044 = vmatprep.subr.mxu0 0.0
  %1045 = vmatpush1.msra.mxu0 0.0
  %1046 = vmatprep.subr.mxu0 0.0
  %1047 = vmatpush1.msra.mxu0 0.0
  %1048 = vmatprep.subr.mxu0 0.0
  %1049 = vmatpush1.msra.mxu0 0.0
  %1050 = vmatprep.subr.mxu0 0.0
  %1051 = vmatpush1.msra.mxu0 0.0
  %1052 = vmatprep.subr.mxu0 0.0
  %1053 = vmatpush1.msra.mxu0 0.0
  %1054 = vmatprep.subr.mxu0 0.0
  %1055 = vmatpush1.msra.mxu0 0.0
  %1056 = vmatprep.subr.mxu0 0.0
  %1057 = vmatpush1.msra.mxu0 0.0
  %1058 = vmatprep.subr.mxu0 0.0
  %1059 = vmatpush1.msra.mxu0 0.0
  %1060 = vmatprep.subr.mxu0 0.0
  %1061 = vmatpush1.msra.mxu0 0.0
  %1062 = vmatprep.mubr.f32.mxu0 0.0
  %1063 = vmatmul.mubr.f32.gmra.mrb[0].mxu0 %v996
  %v1064 = vpop.f32.mrb[0].mxu0
  %v1065 = vadd.f32 0.0, %v1064
  %v1066 = vpop.f32.mrb[0].mxu0
  %1067 = vdwg.mxu0
  %v1069 = vsel %vm723, %v994, 0
  %1071 = vmatprep.subr.mxu0 0.0
  %1072 = vmatpush1.msra.mxu0 %v722
  %1073 = vmatprep.subr.mxu0 0.0
  %1074 = vmatpush1.msra.mxu0 0.0
  %1075 = vmatprep.subr.mxu0 0.0
  %1076 = vmatpush1.msra.mxu0 0.0
  %1077 = vmatprep.subr.mxu0 0.0
  %1078 = vmatpush1.msra.mxu0 0.0
  %1079 = vmatprep.subr.mxu0 0.0
  %1080 = vmatpush1.msra.mxu0 0.0
  %1081 = vmatprep.subr.mxu0 0.0
  %1082 = vmatpush1.msra.mxu0 0.0
  %1083 = vmatprep.subr.mxu0 0.0
  %1084 = vmatpush1.msra.mxu0 0.0
  %1085 = vmatprep.subr.mxu0 0.0
  %1086 = vmatpush1.msra.mxu0 0.0
  %1087 = vmatprep.subr.mxu0 0.0
  %1088 = vmatpush1.msra.mxu0 0.0
  %1089 = vmatprep.subr.mxu0 0.0
  %1090 = vmatpush1.msra.mxu0 0.0
  %1091 = vmatprep.subr.mxu0 0.0
  %1092 = vmatpush1.msra.mxu0 0.0
  %1093 = vmatprep.subr.mxu0 0.0
  %1094 = vmatpush1.msra.mxu0 0.0
  %1095 = vmatprep.subr.mxu0 0.0
  %1096 = vmatpush1.msra.mxu0 0.0
  %1097 = vmatprep.subr.mxu0 0.0
  %1098 = vmatpush1.msra.mxu0 0.0
  %1099 = vmatprep.subr.mxu0 0.0
  %1100 = vmatpush1.msra.mxu0 0.0
  %1101 = vmatprep.subr.mxu0 0.0
  %1102 = vmatpush1.msra.mxu0 0.0
  %1103 = vmatprep.subr.mxu0 0.0
  %1104 = vmatpush1.msra.mxu0 0.0
  %1105 = vmatprep.subr.mxu0 0.0
  %1106 = vmatpush1.msra.mxu0 0.0
  %1107 = vmatprep.subr.mxu0 0.0
  %1108 = vmatpush1.msra.mxu0 0.0
  %1109 = vmatprep.subr.mxu0 0.0
  %1110 = vmatpush1.msra.mxu0 0.0
  %1111 = vmatprep.subr.mxu0 0.0
  %1112 = vmatpush1.msra.mxu0 0.0
  %1113 = vmatprep.subr.mxu0 0.0
  %1114 = vmatpush1.msra.mxu0 0.0
  %1115 = vmatprep.subr.mxu0 0.0
  %1116 = vmatpush1.msra.mxu0 0.0
  %1117 = vmatprep.subr.mxu0 0.0
  %1118 = vmatpush1.msra.mxu0 0.0
  %1119 = vmatprep.subr.mxu0 0.0
  %1120 = vmatpush1.msra.mxu0 0.0
  %1121 = vmatprep.subr.mxu0 0.0
  %1122 = vmatpush1.msra.mxu0 0.0
  %1123 = vmatprep.subr.mxu0 0.0
  %1124 = vmatpush1.msra.mxu0 0.0
  %1125 = vmatprep.subr.mxu0 0.0
  %1126 = vmatpush1.msra.mxu0 0.0
  %1127 = vmatprep.subr.mxu0 0.0
  %1128 = vmatpush1.msra.mxu0 0.0
  %1129 = vmatprep.subr.mxu0 0.0
  %1130 = vmatpush1.msra.mxu0 0.0
  %1131 = vmatprep.subr.mxu0 0.0
  %1132 = vmatpush1.msra.mxu0 0.0
  %1133 = vmatprep.subr.mxu0 0.0
  %1134 = vmatpush1.msra.mxu0 0.0
  %1135 = vmatprep.mubr.f32.mxu0 0.0
  %1136 = vmatmul.mubr.f32.gmra.mrb[0].mxu0 %v1069
  %v1137 = vpop.f32.mrb[0].mxu0
  %v1138 = vadd.f32 0.0, %v1137
  %v1139 = vpop.f32.mrb[0].mxu0
  %1140 = vdwg.mxu0
  %v1141 = vlaneseq
  %v1142 = vshrl.u32 %v1141, 7
  %v1143 = vsub.s32 0, %v1142
  %v1144 = vrot.slane %v1065, %v1143
  %v1145 = vmul.f32 %v801, %v1144
  %v1146 = vmul.f32 %v802, %v1144
  %v1147 = vmul.f32 %v803, %v1144
  %v1148 = vmul.f32 %v804, %v1144
  %v1149 = vlaneseq
  %v1150 = vshrl.u32 %v1149, 7
  %v1151 = vsub.s32 0, %v1150
  %v1152 = vrot.slane %v1138, %v1151
  %v1153 = vadd.f32 %v1145, %v1152
  %v1154 = vadd.f32 %v1146, %v1152
  %v1155 = vadd.f32 %v1147, %v1152
  %v1156 = vadd.f32 %v1148, %v1152
  %v1157 = vmax.f32 %v1153, 0.0
  %v1158 = vmax.f32 %v1154, 0.0
  %v1159 = vmax.f32 %v1155, 0.0
  %v1160 = vmax.f32 %v1156, 0.0
  %1161 = vst [vmem:[#allocation3] sm:$0xff] 0.0
  %1162 = vst [vmem:[#allocation3 + $0x8] sm:$0xff] 0.0
  %1163 = vst [vmem:[#allocation3 + $0x10] sm:$0xf] 0.0
  %1164 = vst [vmem:[#allocation3 + $0x18] sm:$0xff] 0.0
  %1165 = vst [vmem:[#allocation3 + $0x20] sm:$0xff] 0.0
  %1166 = vst [vmem:[#allocation3 + $0x28] sm:$0xf] 0.0
  %1167 = vst [vmem:[#allocation3 + $0x2] sm:$0xff] %v1157
  %1168 = vst [vmem:[#allocation3 + $0xa] sm:$0xff] %v1158
  %1169 = vst [vmem:[#allocation3 + $0x1a] sm:$0xff] %v1159
  %1170 = vst [vmem:[#allocation3 + $0x22] sm:$0xff] %v1160
  %v1171 = vld [vmem:[#allocation3] sm:$0xff]
  %v1172 = vld [vmem:[#allocation3 + $0x8] sm:$0xff]
  %v1173 = vld [vmem:[#allocation3 + $0x18] sm:$0xff]
  %v1174 = vld [vmem:[#allocation3 + $0x20] sm:$0xff]
  %v1175 = vpack.c.bf16 %v1172, %v1171
  %v1176 = vpack.c.bf16 %v1174, %v1173
  %v1177 = vld [vmem:[%s11] sm:$0xf]
  %v1178 = vld [vmem:[%s11 + $0x4] sm:$0xf]
  %v1179 = vld [vmem:[%s11 + $0x8] sm:$0xf]
  %v1180 = vld [vmem:[%s11 + $0xc] sm:$0xf]
  %v1181 = vld [vmem:[%s11 + $0x10] sm:$0xf]
  %v1182 = vld [vmem:[%s11 + $0x14] sm:$0xf]
  %v1183 = vld [vmem:[%s11 + $0x18] sm:$0xf]
  %v1184 = vld [vmem:[%s11 + $0x1c] sm:$0xf]
  %v1185 = vld [vmem:[%s11 + $0x20] sm:$0xf]
  %v1186 = vld [vmem:[%s11 + $0x24] sm:$0xf]
  %v1187 = vld [vmem:[%s11 + $0x28] sm:$0xf]
  %v1188 = vld [vmem:[%s11 + $0x2c] sm:$0xf]
  %v1189 = vld [vmem:[%s11 + $0x30] sm:$0xf]
  %v1190 = vld [vmem:[%s11 + $0x34] sm:$0xf]
  %v1191 = vld [vmem:[%s11 + $0x38] sm:$0xf]
  %v1192 = vld [vmem:[%s11 + $0x3c] sm:$0xf]
  %v1193 = vld [vmem:[#allocation3 + $0x2] sm:$0xff]
  %v1194 = vld [vmem:[#allocation3 + $0xa] sm:$0xff]
  %v1195 = vld [vmem:[#allocation3 + $0x1a] sm:$0xff]
  %v1196 = vld [vmem:[#allocation3 + $0x22] sm:$0xff]
  %v1197 = vpack.c.bf16 %v1194, %v1193
  %v1198 = vpack.c.bf16 %v1196, %v1195
  %s1199 = scalar_lea.vmem %s11, 64
  %v1200 = vld [vmem:[%s1199] sm:$0xf]
  %v1201 = vld [vmem:[%s1199 + $0x4] sm:$0xf]
  %v1202 = vld [vmem:[%s1199 + $0x8] sm:$0xf]
  %v1203 = vld [vmem:[%s1199 + $0xc] sm:$0xf]
  %v1204 = vld [vmem:[%s1199 + $0x10] sm:$0xf]
  %v1205 = vld [vmem:[%s1199 + $0x14] sm:$0xf]
  %v1206 = vld [vmem:[%s1199 + $0x18] sm:$0xf]
  %v1207 = vld [vmem:[%s1199 + $0x1c] sm:$0xf]
  %v1208 = vld [vmem:[%s1199 + $0x20] sm:$0xf]
  %v1209 = vld [vmem:[%s1199 + $0x24] sm:$0xf]
  %v1210 = vld [vmem:[%s1199 + $0x28] sm:$0xf]
  %v1211 = vld [vmem:[%s1199 + $0x2c] sm:$0xf]
  %v1212 = vld [vmem:[%s1199 + $0x30] sm:$0xf]
  %v1213 = vld [vmem:[%s1199 + $0x34] sm:$0xf]
  %v1214 = vld [vmem:[%s1199 + $0x38] sm:$0xf]
  %v1215 = vld [vmem:[%s1199 + $0x3c] sm:$0xf]
  %v1232 = vunpack.c.l.b16 %v1200
  %v1233 = vunpack.c.l.b16 %v1201
  %v1234 = vunpack.c.l.b16 %v1202
  %v1235 = vunpack.c.l.b16 %v1203
  %v1236 = vunpack.c.l.b16 %v1204
  %v1237 = vunpack.c.l.b16 %v1205
  %v1238 = vunpack.c.l.b16 %v1206
  %v1239 = vunpack.c.l.b16 %v1207
  %v1240 = vunpack.c.l.b16 %v1208
  %v1241 = vunpack.c.l.b16 %v1209
  %v1242 = vunpack.c.l.b16 %v1210
  %v1243 = vunpack.c.l.b16 %v1211
  %v1244 = vunpack.c.l.b16 %v1212
  %v1245 = vunpack.c.l.b16 %v1213
  %v1246 = vunpack.c.l.b16 %v1214
  %v1247 = vunpack.c.l.b16 %v1215
  %v1248 = vpack.c.b16 %v1233, %v1232
  %v1249 = vpack.c.b16 %v1235, %v1234
  %v1250 = vpack.c.b16 %v1237, %v1236
  %v1251 = vpack.c.b16 %v1239, %v1238
  %v1252 = vpack.c.b16 %v1241, %v1240
  %v1253 = vpack.c.b16 %v1243, %v1242
  %v1254 = vpack.c.b16 %v1245, %v1244
  %v1255 = vpack.c.b16 %v1247, %v1246
  %1264 = vmatprep.subr.bf16.mxu0 0
  %1265 = vmatpush1.bf16.msra.mxu0 %v1248
  %1266 = vmatprep.subr.bf16.mxu0 0
  %1267 = vmatpush1.bf16.msra.mxu0 %v1249
  %1268 = vmatprep.subr.bf16.mxu0 0
  %1269 = vmatpush1.bf16.msra.mxu0 %v1250
  %1270 = vmatprep.subr.bf16.mxu0 0
  %1271 = vmatpush1.bf16.msra.mxu0 %v1251
  %1272 = vmatprep.subr.bf16.mxu0 0
  %1273 = vmatpush1.bf16.msra.mxu0 %v1252
  %1274 = vmatprep.subr.bf16.mxu0 0
  %1275 = vmatpush1.bf16.msra.mxu0 %v1253
  %1276 = vmatprep.subr.bf16.mxu0 0
  %1277 = vmatpush1.bf16.msra.mxu0 %v1254
  %1278 = vmatprep.subr.bf16.mxu0 0
  %1279 = vmatpush1.bf16.msra.mxu0 %v1255
  %1280 = vmatprep.subr.bf16.mxu0 0
  %1281 = vmatpush1.bf16.msra.mxu0 0
  %1282 = vmatprep.subr.bf16.mxu0 0
  %1283 = vmatpush1.bf16.msra.mxu0 0
  %1284 = vmatprep.subr.bf16.mxu0 0
  %1285 = vmatpush1.bf16.msra.mxu0 0
  %1286 = vmatprep.subr.bf16.mxu0 0
  %1287 = vmatpush1.bf16.msra.mxu0 0
  %1288 = vmatprep.subr.bf16.mxu0 0
  %1289 = vmatpush1.bf16.msra.mxu0 0
  %1290 = vmatprep.subr.bf16.mxu0 0
  %1291 = vmatpush1.bf16.msra.mxu0 0
  %1292 = vmatprep.subr.bf16.mxu0 0
  %1293 = vmatpush1.bf16.msra.mxu0 0
  %1294 = vmatprep.subr.bf16.mxu0 0
  %1295 = vmatpush1.bf16.msra.mxu0 0
  %1296 = vmatprep.mubr.bf16.mxu0 0
  %1297 = vmatmul.mubr.bf16.gmra.mrb[0].mxu0 %v1197
  %v1298 = vpop.f32.mrb[0].mxu0
  %v1299 = vadd.f32 0.0, %v1298
  %v1300 = vpop.f32.mrb[0].mxu0
  %v1301 = vpop.f32.mrb[0].mxu0
  %v1302 = vadd.f32 0.0, %v1301
  %v1303 = vpop.f32.mrb[0].mxu0
  %1304 = vmatprep.mubr.bf16.mxu0 0
  %1305 = vmatmul.mubr.bf16.gmra.mrb[0].mxu0 %v1198
  %v1306 = vpop.f32.mrb[0].mxu0
  %v1307 = vadd.f32 0.0, %v1306
  %v1308 = vpop.f32.mrb[0].mxu0
  %v1309 = vpop.f32.mrb[0].mxu0
  %v1310 = vadd.f32 0.0, %v1309
  %v1311 = vpop.f32.mrb[0].mxu0
  %1312 = vdwg.mxu0
  %v1329 = vunpack.c.l.b16 %v1177
  %v1330 = vunpack.c.l.b16 %v1178
  %v1331 = vunpack.c.l.b16 %v1179
  %v1332 = vunpack.c.l.b16 %v1180
  %v1333 = vunpack.c.l.b16 %v1181
  %v1334 = vunpack.c.l.b16 %v1182
  %v1335 = vunpack.c.l.b16 %v1183
  %v1336 = vunpack.c.l.b16 %v1184
  %v1337 = vunpack.c.l.b16 %v1185
  %v1338 = vunpack.c.l.b16 %v1186
  %v1339 = vunpack.c.l.b16 %v1187
  %v1340 = vunpack.c.l.b16 %v1188
  %v1341 = vunpack.c.l.b16 %v1189
  %v1342 = vunpack.c.l.b16 %v1190
  %v1343 = vunpack.c.l.b16 %v1191
  %v1344 = vunpack.c.l.b16 %v1192
  %v1345 = vpack.c.b16 %v1330, %v1329
  %v1346 = vpack.c.b16 %v1332, %v1331
  %v1347 = vpack.c.b16 %v1334, %v1333
  %v1348 = vpack.c.b16 %v1336, %v1335
  %v1349 = vpack.c.b16 %v1338, %v1337
  %v1350 = vpack.c.b16 %v1340, %v1339
  %v1351 = vpack.c.b16 %v1342, %v1341
  %v1352 = vpack.c.b16 %v1344, %v1343
  %1361 = vmatprep.subr.bf16.mxu0 0
  %1362 = vmatpush1.bf16.msra.mxu0 %v1345
  %1363 = vmatprep.subr.bf16.mxu0 0
  %1364 = vmatpush1.bf16.msra.mxu0 %v1346
  %1365 = vmatprep.subr.bf16.mxu0 0
  %1366 = vmatpush1.bf16.msra.mxu0 %v1347
  %1367 = vmatprep.subr.bf16.mxu0 0
  %1368 = vmatpush1.bf16.msra.mxu0 %v1348
  %1369 = vmatprep.subr.bf16.mxu0 0
  %1370 = vmatpush1.bf16.msra.mxu0 %v1349
  %1371 = vmatprep.subr.bf16.mxu0 0
  %1372 = vmatpush1.bf16.msra.mxu0 %v1350
  %1373 = vmatprep.subr.bf16.mxu0 0
  %1374 = vmatpush1.bf16.msra.mxu0 %v1351
  %1375 = vmatprep.subr.bf16.mxu0 0
  %1376 = vmatpush1.bf16.msra.mxu0 %v1352
  %1377 = vmatprep.subr.bf16.mxu0 0
  %1378 = vmatpush1.bf16.msra.mxu0 0
  %1379 = vmatprep.subr.bf16.mxu0 0
  %1380 = vmatpush1.bf16.msra.mxu0 0
  %1381 = vmatprep.subr.bf16.mxu0 0
  %1382 = vmatpush1.bf16.msra.mxu0 0
  %1383 = vmatprep.subr.bf16.mxu0 0
  %1384 = vmatpush1.bf16.msra.mxu0 0
  %1385 = vmatprep.subr.bf16.mxu0 0
  %1386 = vmatpush1.bf16.msra.mxu0 0
  %1387 = vmatprep.subr.bf16.mxu0 0
  %1388 = vmatpush1.bf16.msra.mxu0 0
  %1389 = vmatprep.subr.bf16.mxu0 0
  %1390 = vmatpush1.bf16.msra.mxu0 0
  %1391 = vmatprep.subr.bf16.mxu0 0
  %1392 = vmatpush1.bf16.msra.mxu0 0
  %1393 = vmatprep.mubr.bf16.mxu0 0
  %1394 = vmatmul.mubr.bf16.gmra.mrb[0].mxu0 %v1175
  %v1395 = vpop.f32.mrb[0].mxu0
  %v1396 = vadd.f32 %v1299, %v1395
  %v1397 = vpop.f32.mrb[0].mxu0
  %v1398 = vpop.f32.mrb[0].mxu0
  %v1399 = vadd.f32 %v1302, %v1398
  %v1400 = vpop.f32.mrb[0].mxu0
  %1401 = vmatprep.mubr.bf16.mxu0 0
  %1402 = vmatmul.mubr.bf16.gmra.mrb[0].mxu0 %v1176
  %v1403 = vpop.f32.mrb[0].mxu0
  %v1404 = vadd.f32 %v1307, %v1403
  %v1405 = vpop.f32.mrb[0].mxu0
  %v1406 = vpop.f32.mrb[0].mxu0
  %v1407 = vadd.f32 %v1310, %v1406
  %v1408 = vpop.f32.mrb[0].mxu0
  %1409 = vdwg.mxu0
  %v1410 = vld [vmem:[#allocation3 + $0x4] sm:$0xff]
  %v1411 = vld [vmem:[#allocation3 + $0xc] sm:$0xff]
  %v1412 = vld [vmem:[#allocation3 + $0x1c] sm:$0xff]
  %v1413 = vld [vmem:[#allocation3 + $0x24] sm:$0xff]
  %v1414 = vpack.c.bf16 %v1411, %v1410
  %v1415 = vpack.c.bf16 %v1413, %v1412
  %s1416 = scalar_lea.vmem %s11, 128
  %v1417 = vld [vmem:[%s1416] sm:$0xf]
  %v1418 = vld [vmem:[%s1416 + $0x4] sm:$0xf]
  %v1419 = vld [vmem:[%s1416 + $0x8] sm:$0xf]
  %v1420 = vld [vmem:[%s1416 + $0xc] sm:$0xf]
  %v1421 = vld [vmem:[%s1416 + $0x10] sm:$0xf]
  %v1422 = vld [vmem:[%s1416 + $0x14] sm:$0xf]
  %v1423 = vld [vmem:[%s1416 + $0x18] sm:$0xf]
  %v1424 = vld [vmem:[%s1416 + $0x1c] sm:$0xf]
  %v1425 = vld [vmem:[%s1416 + $0x20] sm:$0xf]
  %v1426 = vld [vmem:[%s1416 + $0x24] sm:$0xf]
  %v1427 = vld [vmem:[%s1416 + $0x28] sm:$0xf]
  %v1428 = vld [vmem:[%s1416 + $0x2c] sm:$0xf]
  %v1429 = vld [vmem:[%s1416 + $0x30] sm:$0xf]
  %v1430 = vld [vmem:[%s1416 + $0x34] sm:$0xf]
  %v1431 = vld [vmem:[%s1416 + $0x38] sm:$0xf]
  %v1432 = vld [vmem:[%s1416 + $0x3c] sm:$0xf]
  %v1449 = vunpack.c.l.b16 %v1417
  %v1450 = vunpack.c.l.b16 %v1418
  %v1451 = vunpack.c.l.b16 %v1419
  %v1452 = vunpack.c.l.b16 %v1420
  %v1453 = vunpack.c.l.b16 %v1421
  %v1454 = vunpack.c.l.b16 %v1422
  %v1455 = vunpack.c.l.b16 %v1423
  %v1456 = vunpack.c.l.b16 %v1424
  %v1457 = vunpack.c.l.b16 %v1425
  %v1458 = vunpack.c.l.b16 %v1426
  %v1459 = vunpack.c.l.b16 %v1427
  %v1460 = vunpack.c.l.b16 %v1428
  %v1461 = vunpack.c.l.b16 %v1429
  %v1462 = vunpack.c.l.b16 %v1430
  %v1463 = vunpack.c.l.b16 %v1431
  %v1464 = vunpack.c.l.b16 %v1432
  %v1465 = vpack.c.b16 %v1450, %v1449
  %v1466 = vpack.c.b16 %v1452, %v1451
  %v1467 = vpack.c.b16 %v1454, %v1453
  %v1468 = vpack.c.b16 %v1456, %v1455
  %v1469 = vpack.c.b16 %v1458, %v1457
  %v1470 = vpack.c.b16 %v1460, %v1459
  %v1471 = vpack.c.b16 %v1462, %v1461
  %v1472 = vpack.c.b16 %v1464, %v1463
  %1481 = vmatprep.subr.bf16.mxu0 0
  %1482 = vmatpush1.bf16.msra.mxu0 %v1465
  %1483 = vmatprep.subr.bf16.mxu0 0
  %1484 = vmatpush1.bf16.msra.mxu0 %v1466
  %1485 = vmatprep.subr.bf16.mxu0 0
  %1486 = vmatpush1.bf16.msra.mxu0 %v1467
  %1487 = vmatprep.subr.bf16.mxu0 0
  %1488 = vmatpush1.bf16.msra.mxu0 %v1468
  %1489 = vmatprep.subr.bf16.mxu0 0
  %1490 = vmatpush1.bf16.msra.mxu0 %v1469
  %1491 = vmatprep.subr.bf16.mxu0 0
  %1492 = vmatpush1.bf16.msra.mxu0 %v1470
  %1493 = vmatprep.subr.bf16.mxu0 0
  %1494 = vmatpush1.bf16.msra.mxu0 %v1471
  %1495 = vmatprep.subr.bf16.mxu0 0
  %1496 = vmatpush1.bf16.msra.mxu0 %v1472
  %1497 = vmatprep.subr.bf16.mxu0 0
  %1498 = vmatpush1.bf16.msra.mxu0 0
  %1499 = vmatprep.subr.bf16.mxu0 0
  %1500 = vmatpush1.bf16.msra.mxu0 0
  %1501 = vmatprep.subr.bf16.mxu0 0
  %1502 = vmatpush1.bf16.msra.mxu0 0
  %1503 = vmatprep.subr.bf16.mxu0 0
  %1504 = vmatpush1.bf16.msra.mxu0 0
  %1505 = vmatprep.subr.bf16.mxu0 0
  %1506 = vmatpush1.bf16.msra.mxu0 0
  %1507 = vmatprep.subr.bf16.mxu0 0
  %1508 = vmatpush1.bf16.msra.mxu0 0
  %1509 = vmatprep.subr.bf16.mxu0 0
  %1510 = vmatpush1.bf16.msra.mxu0 0
  %1511 = vmatprep.subr.bf16.mxu0 0
  %1512 = vmatpush1.bf16.msra.mxu0 0
  %1513 = vmatprep.mubr.bf16.mxu0 0
  %1514 = vmatmul.mubr.bf16.gmra.mrb[0].mxu0 %v1414
  %v1515 = vpop.f32.mrb[0].mxu0
  %v1516 = vadd.f32 0.0, %v1515
  %v1517 = vpop.f32.mrb[0].mxu0
  %v1518 = vpop.f32.mrb[0].mxu0
  %v1519 = vadd.f32 0.0, %v1518
  %v1520 = vpop.f32.mrb[0].mxu0
  %1521 = vmatprep.mubr.bf16.mxu0 0
  %1522 = vmatmul.mubr.bf16.gmra.mrb[0].mxu0 %v1415
  %v1523 = vpop.f32.mrb[0].mxu0
  %v1524 = vadd.f32 0.0, %v1523
  %v1525 = vpop.f32.mrb[0].mxu0
  %v1526 = vpop.f32.mrb[0].mxu0
  %v1527 = vadd.f32 0.0, %v1526
  %v1528 = vpop.f32.mrb[0].mxu0
  %1529 = vdwg.mxu0
  %v1530 = vadd.f32 %v1396, %v1516
  %v1531 = vadd.f32 %v1399, %v1519
  %v1532 = vadd.f32 %v1404, %v1524
  %v1533 = vadd.f32 %v1407, %v1527
  %v1534 = vld [vmem:[%s12] sm:$0x1]
  %v1535 = vld [vmem:[%s10] sm:$0xff]
  %v1537 = vsel %vm723, %v1534, 0
  %1539 = vmatprep.subr.mxu0 0.0
  %1540 = vmatpush1.msra.mxu0 %v1535
  %1541 = vmatprep.subr.mxu0 0.0
  %1542 = vmatpush1.msra.mxu0 0.0
  %1543 = vmatprep.subr.mxu0 0.0
  %1544 = vmatpush1.msra.mxu0 0.0
  %1545 = vmatprep.subr.mxu0 0.0
  %1546 = vmatpush1.msra.mxu0 0.0
  %1547 = vmatprep.subr.mxu0 0.0
  %1548 = vmatpush1.msra.mxu0 0.0
  %1549 = vmatprep.subr.mxu0 0.0
  %1550 = vmatpush1.msra.mxu0 0.0
  %1551 = vmatprep.subr.mxu0 0.0
  %1552 = vmatpush1.msra.mxu0 0.0
  %1553 = vmatprep.subr.mxu0 0.0
  %1554 = vmatpush1.msra.mxu0 0.0
  %1555 = vmatprep.subr.mxu0 0.0
  %1556 = vmatpush1.msra.mxu0 0.0
  %1557 = vmatprep.subr.mxu0 0.0
  %1558 = vmatpush1.msra.mxu0 0.0
  %1559 = vmatprep.subr.mxu0 0.0
  %1560 = vmatpush1.msra.mxu0 0.0
  %1561 = vmatprep.subr.mxu0 0.0
  %1562 = vmatpush1.msra.mxu0 0.0
  %1563 = vmatprep.subr.mxu0 0.0
  %1564 = vmatpush1.msra.mxu0 0.0
  %1565 = vmatprep.subr.mxu0 0.0
  %1566 = vmatpush1.msra.mxu0 0.0
  %1567 = vmatprep.subr.mxu0 0.0
  %1568 = vmatpush1.msra.mxu0 0.0
  %1569 = vmatprep.subr.mxu0 0.0
  %1570 = vmatpush1.msra.mxu0 0.0
  %1571 = vmatprep.subr.mxu0 0.0
  %1572 = vmatpush1.msra.mxu0 0.0
  %1573 = vmatprep.subr.mxu0 0.0
  %1574 = vmatpush1.msra.mxu0 0.0
  %1575 = vmatprep.subr.mxu0 0.0
  %1576 = vmatpush1.msra.mxu0 0.0
  %1577 = vmatprep.subr.mxu0 0.0
  %1578 = vmatpush1.msra.mxu0 0.0
  %1579 = vmatprep.subr.mxu0 0.0
  %1580 = vmatpush1.msra.mxu0 0.0
  %1581 = vmatprep.subr.mxu0 0.0
  %1582 = vmatpush1.msra.mxu0 0.0
  %1583 = vmatprep.subr.mxu0 0.0
  %1584 = vmatpush1.msra.mxu0 0.0
  %1585 = vmatprep.subr.mxu0 0.0
  %1586 = vmatpush1.msra.mxu0 0.0
  %1587 = vmatprep.subr.mxu0 0.0
  %1588 = vmatpush1.msra.mxu0 0.0
  %1589 = vmatprep.subr.mxu0 0.0
  %1590 = vmatpush1.msra.mxu0 0.0
  %1591 = vmatprep.subr.mxu0 0.0
  %1592 = vmatpush1.msra.mxu0 0.0
  %1593 = vmatprep.subr.mxu0 0.0
  %1594 = vmatpush1.msra.mxu0 0.0
  %1595 = vmatprep.subr.mxu0 0.0
  %1596 = vmatpush1.msra.mxu0 0.0
  %1597 = vmatprep.subr.mxu0 0.0
  %1598 = vmatpush1.msra.mxu0 0.0
  %1599 = vmatprep.subr.mxu0 0.0
  %1600 = vmatpush1.msra.mxu0 0.0
  %1601 = vmatprep.subr.mxu0 0.0
  %1602 = vmatpush1.msra.mxu0 0.0
  %1603 = vmatprep.mubr.f32.mxu0 0.0
  %1604 = vmatmul.mubr.f32.gmra.mrb[0].mxu0 %v1537
  %v1605 = vpop.f32.mrb[0].mxu0
  %v1606 = vadd.f32 0.0, %v1605
  %v1607 = vpop.f32.mrb[0].mxu0
  %1608 = vdwg.mxu0
  %v1609 = vlaneseq
  %v1610 = vshrl.u32 %v1609, 7
  %v1611 = vsub.s32 0, %v1610
  %v1612 = vrot.slane %v1606, %v1611
  %v1613 = vadd.f32 %v1530, %v1612
  %v1614 = vadd.f32 %v1531, %v1612
  %v1615 = vadd.f32 %v1532, %v1612
  %v1616 = vadd.f32 %v1533, %v1612
  %v1617 = vld [vmem:[%s14] sm:$0x1]
  %v1619 = vsel %vm723, %v1617, 0
  %1621 = vmatprep.subr.mxu0 0.0
  %1622 = vmatpush1.msra.mxu0 %v1535
  %1623 = vmatprep.subr.mxu0 0.0
  %1624 = vmatpush1.msra.mxu0 0.0
  %1625 = vmatprep.subr.mxu0 0.0
  %1626 = vmatpush1.msra.mxu0 0.0
  %1627 = vmatprep.subr.mxu0 0.0
  %1628 = vmatpush1.msra.mxu0 0.0
  %1629 = vmatprep.subr.mxu0 0.0
  %1630 = vmatpush1.msra.mxu0 0.0
  %1631 = vmatprep.subr.mxu0 0.0
  %1632 = vmatpush1.msra.mxu0 0.0
  %1633 = vmatprep.subr.mxu0 0.0
  %1634 = vmatpush1.msra.mxu0 0.0
  %1635 = vmatprep.subr.mxu0 0.0
  %1636 = vmatpush1.msra.mxu0 0.0
  %1637 = vmatprep.subr.mxu0 0.0
  %1638 = vmatpush1.msra.mxu0 0.0
  %1639 = vmatprep.subr.mxu0 0.0
  %1640 = vmatpush1.msra.mxu0 0.0
  %1641 = vmatprep.subr.mxu0 0.0
  %1642 = vmatpush1.msra.mxu0 0.0
  %1643 = vmatprep.subr.mxu0 0.0
  %1644 = vmatpush1.msra.mxu0 0.0
  %1645 = vmatprep.subr.mxu0 0.0
  %1646 = vmatpush1.msra.mxu0 0.0
  %1647 = vmatprep.subr.mxu0 0.0
  %1648 = vmatpush1.msra.mxu0 0.0
  %1649 = vmatprep.subr.mxu0 0.0
  %1650 = vmatpush1.msra.mxu0 0.0
  %1651 = vmatprep.subr.mxu0 0.0
  %1652 = vmatpush1.msra.mxu0 0.0
  %1653 = vmatprep.subr.mxu0 0.0
  %1654 = vmatpush1.msra.mxu0 0.0
  %1655 = vmatprep.subr.mxu0 0.0
  %1656 = vmatpush1.msra.mxu0 0.0
  %1657 = vmatprep.subr.mxu0 0.0
  %1658 = vmatpush1.msra.mxu0 0.0
  %1659 = vmatprep.subr.mxu0 0.0
  %1660 = vmatpush1.msra.mxu0 0.0
  %1661 = vmatprep.subr.mxu0 0.0
  %1662 = vmatpush1.msra.mxu0 0.0
  %1663 = vmatprep.subr.mxu0 0.0
  %1664 = vmatpush1.msra.mxu0 0.0
  %1665 = vmatprep.subr.mxu0 0.0
  %1666 = vmatpush1.msra.mxu0 0.0
  %1667 = vmatprep.subr.mxu0 0.0
  %1668 = vmatpush1.msra.mxu0 0.0
  %1669 = vmatprep.subr.mxu0 0.0
  %1670 = vmatpush1.msra.mxu0 0.0
  %1671 = vmatprep.subr.mxu0 0.0
  %1672 = vmatpush1.msra.mxu0 0.0
  %1673 = vmatprep.subr.mxu0 0.0
  %1674 = vmatpush1.msra.mxu0 0.0
  %1675 = vmatprep.subr.mxu0 0.0
  %1676 = vmatpush1.msra.mxu0 0.0
  %1677 = vmatprep.subr.mxu0 0.0
  %1678 = vmatpush1.msra.mxu0 0.0
  %1679 = vmatprep.subr.mxu0 0.0
  %1680 = vmatpush1.msra.mxu0 0.0
  %1681 = vmatprep.subr.mxu0 0.0
  %1682 = vmatpush1.msra.mxu0 0.0
  %1683 = vmatprep.subr.mxu0 0.0
  %1684 = vmatpush1.msra.mxu0 0.0
  %1685 = vmatprep.mubr.f32.mxu0 0.0
  %1686 = vmatmul.mubr.f32.gmra.mrb[0].mxu0 %v1619
  %v1687 = vpop.f32.mrb[0].mxu0
  %v1688 = vadd.f32 0.0, %v1687
  %v1689 = vpop.f32.mrb[0].mxu0
  %1690 = vdwg.mxu0
  %v1691 = vpack.c.bf16 %v422, %v421
  %v1692 = vpack.c.bf16 %v424, %v423
  %v1693 = vld [vmem:[%s13] sm:$0xf]
  %v1694 = vld [vmem:[%s13 + $0x4] sm:$0xf]
  %v1695 = vld [vmem:[%s13 + $0x8] sm:$0xf]
  %v1696 = vld [vmem:[%s13 + $0xc] sm:$0xf]
  %v1697 = vld [vmem:[%s13 + $0x10] sm:$0xf]
  %v1698 = vld [vmem:[%s13 + $0x14] sm:$0xf]
  %v1699 = vld [vmem:[%s13 + $0x18] sm:$0xf]
  %v1700 = vld [vmem:[%s13 + $0x1c] sm:$0xf]
  %v1701 = vlaneseq
  %v1702 = vshrl.u32 %v1701, 7
  %v1703 = vsub.s32 0, %v1702
  %v1704 = vrot.slane %v1688, %v1703
  %v1713 = vunpack.c.l.b16 %v1693
  %v1714 = vunpack.c.l.b16 %v1694
  %v1715 = vunpack.c.l.b16 %v1695
  %v1716 = vunpack.c.l.b16 %v1696
  %v1717 = vunpack.c.l.b16 %v1697
  %v1718 = vunpack.c.l.b16 %v1698
  %v1719 = vunpack.c.l.b16 %v1699
  %v1720 = vunpack.c.l.b16 %v1700
  %v1721 = vpack.c.b16 %v1714, %v1713
  %v1722 = vpack.c.b16 %v1716, %v1715
  %v1723 = vpack.c.b16 %v1718, %v1717
  %v1724 = vpack.c.b16 %v1720, %v1719
  %v1730 = vsel %vm55, %v1691, 0
  %v1733 = vsel %vm55, %v1692, 0
  %1735 = vmatprep.subr.bf16.mxu0 0
  %1736 = vmatpush1.bf16.msra.mxu0 %v1721
  %1737 = vmatprep.subr.bf16.mxu0 0
  %1738 = vmatpush1.bf16.msra.mxu0 %v1722
  %1739 = vmatprep.subr.bf16.mxu0 0
  %1740 = vmatpush1.bf16.msra.mxu0 %v1723
  %1741 = vmatprep.subr.bf16.mxu0 0
  %1742 = vmatpush1.bf16.msra.mxu0 %v1724
  %1743 = vmatprep.subr.bf16.mxu0 0
  %1744 = vmatpush1.bf16.msra.mxu0 0
  %1745 = vmatprep.subr.bf16.mxu0 0
  %1746 = vmatpush1.bf16.msra.mxu0 0
  %1747 = vmatprep.subr.bf16.mxu0 0
  %1748 = vmatpush1.bf16.msra.mxu0 0
  %1749 = vmatprep.subr.bf16.mxu0 0
  %1750 = vmatpush1.bf16.msra.mxu0 0
  %1751 = vmatprep.subr.bf16.mxu0 0
  %1752 = vmatpush1.bf16.msra.mxu0 0
  %1753 = vmatprep.subr.bf16.mxu0 0
  %1754 = vmatpush1.bf16.msra.mxu0 0
  %1755 = vmatprep.subr.bf16.mxu0 0
  %1756 = vmatpush1.bf16.msra.mxu0 0
  %1757 = vmatprep.subr.bf16.mxu0 0
  %1758 = vmatpush1.bf16.msra.mxu0 0
  %1759 = vmatprep.subr.bf16.mxu0 0
  %1760 = vmatpush1.bf16.msra.mxu0 0
  %1761 = vmatprep.subr.bf16.mxu0 0
  %1762 = vmatpush1.bf16.msra.mxu0 0
  %1763 = vmatprep.subr.bf16.mxu0 0
  %1764 = vmatpush1.bf16.msra.mxu0 0
  %1765 = vmatprep.subr.bf16.mxu0 0
  %1766 = vmatpush1.bf16.msra.mxu0 0
  %1767 = vmatprep.mubr.bf16.mxu0 0
  %1768 = vmatmul.mubr.bf16.gmra.mrb[0].mxu0 %v1730
  %v1769 = vpop.f32.mrb[0].mxu0
  %v1770 = vadd.f32 %v1704, %v1769
  %v1771 = vpop.f32.mrb[0].mxu0
  %v1772 = vpop.f32.mrb[0].mxu0
  %v1773 = vadd.f32 %v1704, %v1772
  %v1774 = vpop.f32.mrb[0].mxu0
  %1775 = vmatprep.mubr.bf16.mxu0 0
  %1776 = vmatmul.mubr.bf16.gmra.mrb[0].mxu0 %v1733
  %v1777 = vpop.f32.mrb[0].mxu0
  %v1778 = vadd.f32 %v1704, %v1777
  %v1779 = vpop.f32.mrb[0].mxu0
  %v1780 = vpop.f32.mrb[0].mxu0
  %v1781 = vadd.f32 %v1704, %v1780
  %v1782 = vpop.f32.mrb[0].mxu0
  %1783 = vdwg.mxu0
  %v1784 = vadd.f32 %v1770, %v1613
  %v1785 = vadd.f32 %v1773, %v1614
  %v1786 = vadd.f32 %v1778, %v1615
  %v1787 = vadd.f32 %v1781, %v1616
  %v1788 = vmax.f32 %v1784, 0.0
  %v1789 = vmax.f32 %v1785, 0.0
  %v1790 = vmax.f32 %v1786, 0.0
  %v1791 = vmax.f32 %v1787, 0.0
  %1792 = vst [vmem:[%s15] sm:$0xff] %v1788
  %1793 = vst [vmem:[%s15 + $0x8] sm:$0xff] %v1789
  %1794 = vst [vmem:[%s15 + $0x10] sm:$0xff] %v1790
  %1795 = vst [vmem:[%s15 + $0x18] sm:$0xff] %v1791
  // Predicated region
  $region62: #{upblock_forward.2} parent=0 // pred_check
    _
  $region63: #{upblock_forward.2} parent=0 // pred_check_branch
    %1797 = sbr.rel (0) target = $region65
  $region64: #{upblock_forward.2} parent=0 // pred_region
    _
  $region65: #{upblock_forward.2} parent=0 // pred_fallthru
    _
  // Predicated region
  $region66: #{upblock_forward.2} parent=0 // pred_check
    _
  $region67: #{upblock_forward.2} parent=0 // pred_check_branch
    %1799 = sbr.rel (0) target = $region69
  $region68: #{upblock_forward.2} parent=0 // pred_region
    _
  $region69: #{upblock_forward.2} parent=0 // pred_fallthru
    _

// kernel: tile.8
$region0: #{tile.8}
  #allocation0 [shape = 's32[1]{0}', space=sflag, size = 0x4, scoped, tag = 'scoped memory for tile.8']
  %s0 = inlined_call_operand.vmem [shape: f32[8], index: 0, kind: input, shape index: {}]
  %s1 = inlined_call_operand.vmem [shape: f32[32,8], index: 1, kind: output, shape index: {}]
  // Predicated region
  $region2: #{tile.8} parent=0 // pred_check
    _
  $region3: #{tile.8} parent=0 // pred_check_branch
    %3 = sbr.rel (0) target = $region5
  $region4: #{tile.8} parent=0 // pred_region
    _
  $region5: #{tile.8} parent=0 // pred_fallthru
    _
  %v4 = vld [vmem:[%s0] ss:$0 sm:$0xff]
  %5 = vst [vmem:[%s1] sm:$0xff] %v4
  %s6 = scalar_lea.vmem %s1, 8
  %7 = vst [vmem:[%s6] sm:$0xff] %v4
  %s8 = scalar_lea.vmem %s1, 16
  %9 = vst [vmem:[%s8] sm:$0xff] %v4
  %s10 = scalar_lea.vmem %s1, 24
  %11 = vst [vmem:[%s10] sm:$0xff] %v4

// kernel: tile.9
$region0: #{tile.9}
  %s0 = inlined_call_operand.vmem [shape: f32[32,8], index: 0, kind: input, shape index: {}]
  %s1 = inlined_call_operand.vmem [shape: f32[1,256], index: 1, kind: output, shape index: {}]
  $region1: #{tile.9} parent=0
    #allocation0 [shape = 'u8[8192]{0}', space=vmem, size = 0x2000, scoped, tag = 'scoped mem for output reshape']
    %s2 = smov 3
    %v3 = vld [vmem:[%s0] ss:$16 sm:%s2]
    %vm4 = vcmask 64512
    %5 = vst.msk [vmem:[#allocation0] ss:$8 sm:$0x3] %vm4, %v3
    %s6 = scalar_lea.vmem %s0, 15
    %s7 = smov 3
    %v8 = vld [vmem:[%s6] ss:$16 sm:%s7]
    %9 = vrot.lane.b32.xlu0 %v8, 120
    %v10 = vpop.permute.xlu0 %9
    %vm11 = vcmask 1048512
    %12 = vst.msk [vmem:[#allocation0] ss:$8 sm:$0x3] %vm11, %v10
    %s13 = scalar_lea.vmem %s0, 14
    %s14 = smov 3
    %v15 = vld [vmem:[%s13] ss:$16 sm:%s14]
    %16 = vrot.lane.b32.xlu0 %v15, 112
    %v17 = vpop.permute.xlu0 %16
    %vm18 = vcmask 982912
    %19 = vst.msk [vmem:[#allocation0] ss:$8 sm:$0x3] %vm18, %v17
    %s20 = scalar_lea.vmem %s0, 13
    %s21 = smov 3
    %v22 = vld [vmem:[%s20] ss:$16 sm:%s21]
    %23 = vrot.lane.b32.xlu0 %v22, 104
    %v24 = vpop.permute.xlu0 %23
    %vm25 = vcmask 917312
    %26 = vst.msk [vmem:[#allocation0] ss:$8 sm:$0x3] %vm25, %v24
    %s27 = scalar_lea.vmem %s0, 12
    %s28 = smov 3
    %v29 = vld [vmem:[%s27] ss:$16 sm:%s28]
    %30 = vrot.lane.b32.xlu0 %v29, 96
    %v31 = vpop.permute.xlu0 %30
    %vm32 = vcmask 851712
    %33 = vst.msk [vmem:[#allocation0] ss:$8 sm:$0x3] %vm32, %v31
    %s34 = scalar_lea.vmem %s0, 11
    %s35 = smov 3
    %v36 = vld [vmem:[%s34] ss:$16 sm:%s35]
    %37 = vrot.lane.b32.xlu0 %v36, 88
    %v38 = vpop.permute.xlu0 %37
    %vm39 = vcmask 786112
    %40 = vst.msk [vmem:[#allocation0] ss:$8 sm:$0x3] %vm39, %v38
    %s41 = scalar_lea.vmem %s0, 10
    %s42 = smov 3
    %v43 = vld [vmem:[%s41] ss:$16 sm:%s42]
    %44 = vrot.lane.b32.xlu0 %v43, 80
    %v45 = vpop.permute.xlu0 %44
    %vm46 = vcmask 720512
    %47 = vst.msk [vmem:[#allocation0] ss:$8 sm:$0x3] %vm46, %v45
    %s48 = scalar_lea.vmem %s0, 9
    %s49 = smov 3
    %v50 = vld [vmem:[%s48] ss:$16 sm:%s49]
    %51 = vrot.lane.b32.xlu0 %v50, 72
    %v52 = vpop.permute.xlu0 %51
    %vm53 = vcmask 654912
    %54 = vst.msk [vmem:[#allocation0] ss:$8 sm:$0x3] %vm53, %v52
    %s55 = scalar_lea.vmem %s0, 8
    %s56 = smov 3
    %v57 = vld [vmem:[%s55] ss:$16 sm:%s56]
    %58 = vrot.lane.b32.xlu0 %v57, 64
    %v59 = vpop.permute.xlu0 %58
    %vm60 = vcmask 589312
    %61 = vst.msk [vmem:[#allocation0] ss:$8 sm:$0x3] %vm60, %v59
    %s62 = scalar_lea.vmem %s0, 7
    %s63 = smov 3
    %v64 = vld [vmem:[%s62] ss:$16 sm:%s63]
    %65 = vrot.lane.b32.xlu0 %v64, 56
    %v66 = vpop.permute.xlu0 %65
    %vm67 = vcmask 523712
    %68 = vst.msk [vmem:[#allocation0] ss:$8 sm:$0x3] %vm67, %v66
    %s69 = scalar_lea.vmem %s0, 6
    %s70 = smov 3
    %v71 = vld [vmem:[%s69] ss:$16 sm:%s70]
    %72 = vrot.lane.b32.xlu0 %v71, 48
    %v73 = vpop.permute.xlu0 %72
    %vm74 = vcmask 458112
    %75 = vst.msk [vmem:[#allocation0] ss:$8 sm:$0x3] %vm74, %v73
    %s76 = scalar_lea.vmem %s0, 5
    %s77 = smov 3
    %v78 = vld [vmem:[%s76] ss:$16 sm:%s77]
    %79 = vrot.lane.b32.xlu0 %v78, 40
    %v80 = vpop.permute.xlu0 %79
    %vm81 = vcmask 392512
    %82 = vst.msk [vmem:[#allocation0] ss:$8 sm:$0x3] %vm81, %v80
    %s83 = scalar_lea.vmem %s0, 4
    %s84 = smov 3
    %v85 = vld [vmem:[%s83] ss:$16 sm:%s84]
    %86 = vrot.lane.b32.xlu0 %v85, 32
    %v87 = vpop.permute.xlu0 %86
    %vm88 = vcmask 326912
    %89 = vst.msk [vmem:[#allocation0] ss:$8 sm:$0x3] %vm88, %v87
    %s90 = scalar_lea.vmem %s0, 3
    %s91 = smov 3
    %v92 = vld [vmem:[%s90] ss:$16 sm:%s91]
    %93 = vrot.lane.b32.xlu0 %v92, 24
    %v94 = vpop.permute.xlu0 %93
    %vm95 = vcmask 261312
    %96 = vst.msk [vmem:[#allocation0] ss:$8 sm:$0x3] %vm95, %v94
    %s97 = scalar_lea.vmem %s0, 2
    %s98 = smov 3
    %v99 = vld [vmem:[%s97] ss:$16 sm:%s98]
    %100 = vrot.lane.b32.xlu0 %v99, 16
    %v101 = vpop.permute.xlu0 %100
    %vm102 = vcmask 195712
    %103 = vst.msk [vmem:[#allocation0] ss:$8 sm:$0x3] %vm102, %v101
    %s104 = scalar_lea.vmem %s0, 1
    %s105 = smov 3
    %v106 = vld [vmem:[%s104] ss:$16 sm:%s105]
    %107 = vrot.lane.b32.xlu0 %v106, 8
    %v108 = vpop.permute.xlu0 %107
    %vm109 = vcmask 130112
    %110 = vst.msk [vmem:[#allocation0] ss:$8 sm:$0x3] %vm109, %v108
    %s112 = sshllo.u32 0, 1
    %v114 = vld [vmem:[#allocation0] sm:%s112]
    %s115 = sshllo.u32 0, 1
    %116 = vst [vmem:[%s1] sm:%s115] %v114
    %s117 = scalar_lea.vmem [#allocation0], 8
    %v118 = vld [vmem:[%s117] sm:%s112]
    %s119 = sshllo.u32 0, 1
    %s120 = scalar_lea.vmem %s1, 1
    %121 = vst [vmem:[%s120] sm:%s119] %v118

// kernel: upblock_forward.3
$region0: #{upblock_forward.3}
  #allocation0 [shape = 'u32[]', space=smem, size = 0x4, offset = 0x4, fixed_abs, tag = 'smem constant byte address 0x4 - core index']
  #allocation1 [shape = 'u32[144,128]{1,0:T(1,128)}', space=vmem, size = 0x12000, scoped, tag = 'internal scratch']
  #allocation2 [shape = 'f32[17,128]{1,0:T(8,128)}', space=vmem, size = 0x3000, scoped, tag = 'scratch operand']
  %s0 = inlined_call_operand.vmem [shape: f32[2,16,128], index: 0, kind: input, shape index: {}]
  %s1 = inlined_call_operand.vmem [shape: f32[2,16,512], index: 1, kind: input, shape index: {}]
  %s2 = inlined_call_operand.vmem [shape: bf16[128,256], index: 2, kind: input, shape index: {}]
  %s3 = inlined_call_operand.vmem [shape: bf16[128,256], index: 3, kind: input, shape index: {}]
  %s4 = inlined_call_operand.vmem [shape: bf16[128,256], index: 4, kind: input, shape index: {}]
  %s5 = inlined_call_operand.vmem [shape: f32[1,256], index: 5, kind: input, shape index: {}]
  %s6 = inlined_call_operand.vmem [shape: f32[2,16,512], index: 6, kind: output, shape index: {}]
  %s7 = sld [smem:[#allocation0]]
  $region57: #{upblock_forward.3} parent=0
    _
  %s9 = ssub.s32 1, %s7
  %s10 = scalar_select 0, %s9, %s7
  loop: start=0, step=1, limit=4
  $region2: #{upblock_forward.3} parent=0 // loop_pre_header
    _
  $region3: #{upblock_forward.3} parent=0 // loop_header
    %s12 = sphi 0, %s16
    %p13 = scmp.ge.s32.totalorder %s12, 4
    %s22 = sphi 0, %s24
    %s25 = sphi 0, %s22
    %s26 = sphi 0, %s25
    %s42 = sphi 0, %s26
    %s48 = sphi 0, %s50
    %s51 = sphi 0, %s48
    %s52 = sphi 0, %s51
    %s68 = sphi 0, %s52
    %s72 = sphi 0, %s72
    %s74 = sphi 0, %s72
    %s75 = sphi 0, %s74
    %s89 = sphi 0, %s75
    %s93 = sphi 0, %s93
    %s95 = sphi 0, %s93
    %s96 = sphi 0, %s95
    %s110 = sphi 0, %s96
    %s114 = sphi 0, %s114
    %s116 = sphi 0, %s114
    %s117 = sphi 0, %s116
    %s131 = sphi 0, %s117
    %s135 = sphi 0, %s135
    %s137 = sphi 0, %s135
    %s138 = sphi 0, %s137
    %s152 = sphi 0, %s138
    %s158 = sphi 0, %s160
    %s161 = sphi 0, %s158
    %s162 = sphi 0, %s161
    %s178 = sphi 0, %s162
  $region4: #{upblock_forward.3} parent=0 // loop_header_branch
    %15 = sbr.rel (%p13) target = $region8
  $region5: #{upblock_forward.3} parent=0 // loop_body
    %s17 = ssub.s32 %s12, 1
    %s18 = ssub.s32 %s12, 2
    %s19 = sadd.s32 %s12, 1
    %s20 = ssub.s32 %s12, %s19
    %p21 = scmp.eq.s32.totalorder %s20, 0
    %s23 = sadd.s32 %s22, 1
    %s24 = scalar_select %p21, %s22, %s23
    %p27 = pneg %p21
    %p28 = scmp.eq.s32.totalorder %s12, 1
    %p29 = por %p27, %p28
    %p30 = scmp.ne.s32.totalorder %s22, %s25
    %p31 = scmp.eq.s32.totalorder %s12, 0
    %p32 = por %p30, %p31
    %p33 = scmp.ne.s32.totalorder %s22, %s25
    %p34 = scmp.eq.s32.totalorder %s17, 1
    %p35 = por %p33, %p34
    %p36 = scmp.ne.s32.totalorder %s25, %s26
    %p37 = scmp.eq.s32.totalorder %s17, 0
    %p38 = por %p36, %p37
    %p39 = scmp.ne.s32.totalorder %s25, %s26
    %p40 = scmp.eq.s32.totalorder %s18, 1
    %p41 = por %p39, %p40
    %p43 = scmp.ne.s32.totalorder %s26, %s42
    %p44 = scmp.eq.s32.totalorder %s18, 0
    %p45 = por %p43, %p44
    %s46 = ssub.s32 %s12, %s19
    %p47 = scmp.eq.s32.totalorder %s46, 0
    %s49 = sadd.s32 %s48, 1
    %s50 = scalar_select %p47, %s48, %s49
    %p53 = pneg %p47
    %p54 = scmp.eq.s32.totalorder %s12, 1
    %p55 = por %p53, %p54
    %p56 = scmp.ne.s32.totalorder %s48, %s51
    %p57 = scmp.eq.s32.totalorder %s12, 0
    %p58 = por %p56, %p57
    %p59 = scmp.ne.s32.totalorder %s48, %s51
    %p60 = scmp.eq.s32.totalorder %s17, 1
    %p61 = por %p59, %p60
    %p62 = scmp.ne.s32.totalorder %s51, %s52
    %p63 = scmp.eq.s32.totalorder %s17, 0
    %p64 = por %p62, %p63
    %p65 = scmp.ne.s32.totalorder %s51, %s52
    %p66 = scmp.eq.s32.totalorder %s18, 1
    %p67 = por %p65, %p66
    %p69 = scmp.ne.s32.totalorder %s52, %s68
    %p70 = scmp.eq.s32.totalorder %s18, 0
    %p71 = por %p69, %p70
    %s73 = sadd.s32 %s72, 1
    %p76 = scmp.eq.s32.totalorder %s12, 1
    %p77 = scmp.ne.s32.totalorder %s72, %s74
    %p78 = scmp.eq.s32.totalorder %s12, 0
    %p79 = por %p77, %p78
    %p80 = scmp.ne.s32.totalorder %s72, %s74
    %p81 = scmp.eq.s32.totalorder %s17, 1
    %p82 = por %p80, %p81
    %p83 = scmp.ne.s32.totalorder %s74, %s75
    %p84 = scmp.eq.s32.totalorder %s17, 0
    %p85 = por %p83, %p84
    %p86 = scmp.ne.s32.totalorder %s74, %s75
    %p87 = scmp.eq.s32.totalorder %s18, 1
    %p88 = por %p86, %p87
    %p90 = scmp.ne.s32.totalorder %s75, %s89
    %p91 = scmp.eq.s32.totalorder %s18, 0
    %p92 = por %p90, %p91
    %s94 = sadd.s32 %s93, 1
    %p97 = scmp.eq.s32.totalorder %s12, 1
    %p98 = scmp.ne.s32.totalorder %s93, %s95
    %p99 = scmp.eq.s32.totalorder %s12, 0
    %p100 = por %p98, %p99
    %p101 = scmp.ne.s32.totalorder %s93, %s95
    %p102 = scmp.eq.s32.totalorder %s17, 1
    %p103 = por %p101, %p102
    %p104 = scmp.ne.s32.totalorder %s95, %s96
    %p105 = scmp.eq.s32.totalorder %s17, 0
    %p106 = por %p104, %p105
    %p107 = scmp.ne.s32.totalorder %s95, %s96
    %p108 = scmp.eq.s32.totalorder %s18, 1
    %p109 = por %p107, %p108
    %p111 = scmp.ne.s32.totalorder %s96, %s110
    %p112 = scmp.eq.s32.totalorder %s18, 0
    %p113 = por %p111, %p112
    %s115 = sadd.s32 %s114, 1
    %p118 = scmp.eq.s32.totalorder %s12, 1
    %p119 = scmp.ne.s32.totalorder %s114, %s116
    %p120 = scmp.eq.s32.totalorder %s12, 0
    %p121 = por %p119, %p120
    %p122 = scmp.ne.s32.totalorder %s114, %s116
    %p123 = scmp.eq.s32.totalorder %s17, 1
    %p124 = por %p122, %p123
    %p125 = scmp.ne.s32.totalorder %s116, %s117
    %p126 = scmp.eq.s32.totalorder %s17, 0
    %p127 = por %p125, %p126
    %p128 = scmp.ne.s32.totalorder %s116, %s117
    %p129 = scmp.eq.s32.totalorder %s18, 1
    %p130 = por %p128, %p129
    %p132 = scmp.ne.s32.totalorder %s117, %s131
    %p133 = scmp.eq.s32.totalorder %s18, 0
    %p134 = por %p132, %p133
    %s136 = sadd.s32 %s135, 1
    %p139 = scmp.eq.s32.totalorder %s12, 1
    %p140 = scmp.ne.s32.totalorder %s135, %s137
    %p141 = scmp.eq.s32.totalorder %s12, 0
    %p142 = por %p140, %p141
    %p143 = scmp.ne.s32.totalorder %s135, %s137
    %p144 = scmp.eq.s32.totalorder %s17, 1
    %p145 = por %p143, %p144
    %p146 = scmp.ne.s32.totalorder %s137, %s138
    %p147 = scmp.eq.s32.totalorder %s17, 0
    %p148 = por %p146, %p147
    %p149 = scmp.ne.s32.totalorder %s137, %s138
    %p150 = scmp.eq.s32.totalorder %s18, 1
    %p151 = por %p149, %p150
    %p153 = scmp.ne.s32.totalorder %s138, %s152
    %p154 = scmp.eq.s32.totalorder %s18, 0
    %p155 = por %p153, %p154
    %s156 = ssub.s32 %s12, %s19
    %p157 = scmp.eq.s32.totalorder %s156, 0
    %s159 = sadd.s32 %s158, 1
    %s160 = scalar_select %p157, %s158, %s159
    %p163 = pneg %p157
    %p164 = scmp.eq.s32.totalorder %s12, 1
    %p165 = por %p163, %p164
    %p166 = scmp.ne.s32.totalorder %s158, %s161
    %p167 = scmp.eq.s32.totalorder %s12, 0
    %p168 = por %p166, %p167
    %p169 = scmp.ne.s32.totalorder %s158, %s161
    %p170 = scmp.eq.s32.totalorder %s17, 1
    %p171 = por %p169, %p170
    %p172 = scmp.ne.s32.totalorder %s161, %s162
    %p173 = scmp.eq.s32.totalorder %s17, 0
    %p174 = por %p172, %p173
    %p175 = scmp.ne.s32.totalorder %s161, %s162
    %p176 = scmp.eq.s32.totalorder %s18, 1
    %p177 = por %p175, %p176
    %p179 = scmp.ne.s32.totalorder %s162, %s178
    %p180 = scmp.eq.s32.totalorder %s18, 0
    %p181 = por %p179, %p180
    %p182 = scmp.le.s32.totalorder 1, %s12
    %p183 = scmp.lt.s32.totalorder %s12, 3
    %p184 = pnand %p182, %p183
    %p185 = pneg %p184
    // Predicated region
    $region9: #{upblock_forward.3} parent=5 // pred_check
      _
    $region10: #{upblock_forward.3} parent=5 // pred_check_branch
      %187 = sbr.rel (%p184) target = $region12
    $region11: #{upblock_forward.3} parent=5 // pred_region
      %s188 = ssub.s32 %s12, 1
      // Predicated region
      $region13: #{upblock_forward.3} parent=11 // pred_check
        %p189 = pneg %p85
      $region14: #{upblock_forward.3} parent=11 // pred_check_branch
        %191 = sbr.rel (%p189) target = $region16
      $region15: #{upblock_forward.3} parent=11 // pred_region
        _
      $region16: #{upblock_forward.3} parent=11 // pred_fallthru
        _
      // Predicated region
      $region17: #{upblock_forward.3} parent=11 // pred_check
        %p192 = pneg %p106
      $region18: #{upblock_forward.3} parent=11 // pred_check_branch
        %194 = sbr.rel (%p192) target = $region20
      $region19: #{upblock_forward.3} parent=11 // pred_region
        _
      $region20: #{upblock_forward.3} parent=11 // pred_fallthru
        _
      // Predicated region
      $region21: #{upblock_forward.3} parent=11 // pred_check
        %p195 = pneg %p127
      $region22: #{upblock_forward.3} parent=11 // pred_check_branch
        %197 = sbr.rel (%p195) target = $region24
      $region23: #{upblock_forward.3} parent=11 // pred_region
        _
      $region24: #{upblock_forward.3} parent=11 // pred_fallthru
        _
      // Predicated region
      $region25: #{upblock_forward.3} parent=11 // pred_check
        %p198 = pneg %p148
      $region26: #{upblock_forward.3} parent=11 // pred_check_branch
        %200 = sbr.rel (%p198) target = $region28
      $region27: #{upblock_forward.3} parent=11 // pred_region
        _
      $region28: #{upblock_forward.3} parent=11 // pred_fallthru
        _
    $region12: #{upblock_forward.3} parent=5 // pred_fallthru
      _
    %p201 = scmp.lt.s32.totalorder %s12, 2
    // Predicated region
    $region29: #{upblock_forward.3} parent=5 // pred_check
      %p202 = pneg %p201
    $region30: #{upblock_forward.3} parent=5 // pred_check_branch
      %204 = sbr.rel (%p202) target = $region32
    $region31: #{upblock_forward.3} parent=5 // pred_region
      // Predicated region
      $region33: #{upblock_forward.3} parent=31 // pred_check
        %p205 = pneg %p32
      $region34: #{upblock_forward.3} parent=31 // pred_check_branch
        %207 = sbr.rel (%p205) target = $region36
      $region35: #{upblock_forward.3} parent=31 // pred_region
        %p208 = scmp.lt.s32.totalorder %s12, 1
        %s209 = scalar_select %p208, %s12, 1
        %s210 = smul.addr %s209, 2
        %s211 = smul.addr %s210, 8
        %s212 = scalar_lea.vmem %s0, %s211
      $region36: #{upblock_forward.3} parent=31 // pred_fallthru
        _
      // Predicated region
      $region37: #{upblock_forward.3} parent=31 // pred_check
        %p213 = pneg %p58
      $region38: #{upblock_forward.3} parent=31 // pred_check_branch
        %215 = sbr.rel (%p213) target = $region40
      $region39: #{upblock_forward.3} parent=31 // pred_region
        %p216 = scmp.lt.s32.totalorder %s12, 1
        %s217 = scalar_select %p216, %s12, 1
        %s218 = smul.addr %s217, 8
        %s219 = smul.addr %s218, 8
        %s220 = scalar_lea.vmem %s1, %s219
      $region40: #{upblock_forward.3} parent=31 // pred_fallthru
        _
    $region32: #{upblock_forward.3} parent=5 // pred_fallthru
      _
    %p221 = scmp.le.s32.totalorder 1, %s12
    %p222 = scmp.lt.s32.totalorder %s12, 3
    %p223 = pnand %p221, %p222
    %p224 = pneg %p223
    // Predicated region
    $region41: #{upblock_forward.3} parent=5 // pred_check
      _
    $region42: #{upblock_forward.3} parent=5 // pred_check_branch
      %226 = sbr.rel (%p223) target = $region44
    $region43: #{upblock_forward.3} parent=5 // pred_region
      %s227 = ssub.s32 %s12, 1
      %p228 = scmp.lt.s32.totalorder %s17, 1
      %s229 = scalar_select %p228, %s17, 1
      %s230 = smul.addr %s229, 2
      %s231 = smul.addr %s230, 8
      %s232 = scalar_lea.vmem %s0, %s231
      %p233 = pneg %p38
      %p234 = pneg %p35
      %p235 = scmp.lt.s32.totalorder %s17, 1
      %s236 = scalar_select %p235, %s17, 1
      %s237 = smul.addr %s236, 8
      %s238 = smul.addr %s237, 8
      %s239 = scalar_lea.vmem %s1, %s238
      %p240 = pneg %p64
      %p241 = pneg %p61
      %p242 = pneg %p85
      %p243 = pneg %p82
      %p244 = pneg %p106
      %p245 = pneg %p103
      %p246 = pneg %p127
      %p247 = pneg %p124
      %p248 = pneg %p148
      %p249 = pneg %p145
      %p250 = pneg %p174
      %p251 = pneg %p171
      %p252 = scmp.lt.s32.totalorder %s17, 1
      %s253 = scalar_select %p252, %s17, 1
      %s254 = smul.addr %s253, 8
      %s255 = smul.addr %s254, 8
      %s256 = scalar_lea.vmem %s6, %s255
      %p257 = scmp.lt.s32.totalorder %s17, 1
      %s258 = scalar_select %p257, %s17, 1
      %s259 = smul.addr %s258, 2
      %s260 = smul.addr %s259, 8
      %s261 = scalar_lea.vmem %s0, %s260
      %p262 = scmp.lt.s32.totalorder %s17, 1
      %s263 = scalar_select %p262, %s17, 1
      %s264 = smul.addr %s263, 8
      %s265 = smul.addr %s264, 8
      %s266 = scalar_lea.vmem %s1, %s265
      %p267 = scmp.lt.s32.totalorder %s17, 1
      %s268 = scalar_select %p267, %s17, 1
      %s269 = smul.addr %s268, 8
      %s270 = smul.addr %s269, 8
      %s271 = scalar_lea.vmem %s6, %s270
      %v273 = vld [vmem:[%s261] sm:$0xff]
      %v274 = vld [vmem:[%s261 + $0x8] sm:$0xff]
      %275 = vst [vmem:[#allocation2] sm:$0xff] %v273
      %276 = vst [vmem:[#allocation2 + $0x8] sm:$0xff] %v274
      %277 = vst [vmem:[#allocation2 + $0x10] sm:$0x1] 0.0
      %v278 = vpack.c.bf16 %v274, %v273
      %v279 = vld [vmem:[#allocation2 + $0x1] sm:$0xff]
      %v280 = vld [vmem:[#allocation2 + $0x9] sm:$0xff]
      %v281 = vpack.c.bf16 %v280, %v279
      %v282 = vld [vmem:[%s5] sm:$0x3]
      %v283 = vld [vmem:[%s2] sm:$0xff]
      %v284 = vld [vmem:[%s2 + $0x8] sm:$0xff]
      %v285 = vld [vmem:[%s2 + $0x10] sm:$0xff]
      %v286 = vld [vmem:[%s2 + $0x18] sm:$0xff]
      %v287 = vld [vmem:[%s2 + $0x20] sm:$0xff]
      %v288 = vld [vmem:[%s2 + $0x28] sm:$0xff]
      %v289 = vld [vmem:[%s2 + $0x30] sm:$0xff]
      %v290 = vld [vmem:[%s2 + $0x38] sm:$0xff]
      %v291 = vld [vmem:[%s2 + $0x40] sm:$0xff]
      %v292 = vld [vmem:[%s2 + $0x48] sm:$0xff]
      %v293 = vld [vmem:[%s2 + $0x50] sm:$0xff]
      %v294 = vld [vmem:[%s2 + $0x58] sm:$0xff]
      %v295 = vld [vmem:[%s2 + $0x60] sm:$0xff]
      %v296 = vld [vmem:[%s2 + $0x68] sm:$0xff]
      %v297 = vld [vmem:[%s2 + $0x70] sm:$0xff]
      %v298 = vld [vmem:[%s2 + $0x78] sm:$0xff]
      %v300 = vlaneseq
      %v301 = vshrl.u32 %v300, 7
      %v302 = vsub.s32 0, %v301
      %v303 = vrot.slane %v282, %v302
      %v304 = vlaneseq
      %v305 = vshrl.u32 %v304, 7
      %v306 = vsub.s32 1, %v305
      %v307 = vrot.slane %v282, %v306
      %v326 = vunpack.c.l.b16 %v283
      %v327 = vunpack.c.h.b16 %v283
      %v328 = vunpack.c.l.b16 %v284
      %v329 = vunpack.c.h.b16 %v284
      %v330 = vunpack.c.l.b16 %v285
      %v331 = vunpack.c.h.b16 %v285
      %v332 = vunpack.c.l.b16 %v286
      %v333 = vunpack.c.h.b16 %v286
      %v334 = vunpack.c.l.b16 %v287
      %v335 = vunpack.c.h.b16 %v287
      %v336 = vunpack.c.l.b16 %v288
      %v337 = vunpack.c.h.b16 %v288
      %v338 = vunpack.c.l.b16 %v289
      %v339 = vunpack.c.h.b16 %v289
      %v340 = vunpack.c.l.b16 %v290
      %v341 = vunpack.c.h.b16 %v290
      %v342 = vunpack.c.l.b16 %v291
      %v343 = vunpack.c.h.b16 %v291
      %v344 = vunpack.c.l.b16 %v292
      %v345 = vunpack.c.h.b16 %v292
      %v346 = vunpack.c.l.b16 %v293
      %v347 = vunpack.c.h.b16 %v293
      %v348 = vunpack.c.l.b16 %v294
      %v349 = vunpack.c.h.b16 %v294
      %v350 = vunpack.c.l.b16 %v295
      %v351 = vunpack.c.h.b16 %v295
      %v352 = vunpack.c.l.b16 %v296
      %v353 = vunpack.c.h.b16 %v296
      %v354 = vunpack.c.l.b16 %v297
      %v355 = vunpack.c.h.b16 %v297
      %v356 = vunpack.c.l.b16 %v298
      %v357 = vunpack.c.h.b16 %v298
      %v358 = vpack.c.b16 %v328, %v326
      %v359 = vpack.c.b16 %v329, %v327
      %v360 = vpack.c.b16 %v332, %v330
      %v361 = vpack.c.b16 %v333, %v331
      %v362 = vpack.c.b16 %v336, %v334
      %v363 = vpack.c.b16 %v337, %v335
      %v364 = vpack.c.b16 %v340, %v338
      %v365 = vpack.c.b16 %v341, %v339
      %v366 = vpack.c.b16 %v344, %v342
      %v367 = vpack.c.b16 %v345, %v343
      %v368 = vpack.c.b16 %v348, %v346
      %v369 = vpack.c.b16 %v349, %v347
      %v370 = vpack.c.b16 %v352, %v350
      %v371 = vpack.c.b16 %v353, %v351
      %v372 = vpack.c.b16 %v356, %v354
      %v373 = vpack.c.b16 %v357, %v355
      %390 = vmatprep.subr.bf16.mxu0 %v359
      %391 = vmatpush1.bf16.msra.mxu0 %v358
      %392 = vmatprep.subr.bf16.mxu0 %v361
      %393 = vmatpush1.bf16.msra.mxu0 %v360
      %394 = vmatprep.subr.bf16.mxu0 %v363
      %395 = vmatpush1.bf16.msra.mxu0 %v362
      %396 = vmatprep.subr.bf16.mxu0 %v365
      %397 = vmatpush1.bf16.msra.mxu0 %v364
      %398 = vmatprep.subr.bf16.mxu0 %v367
      %399 = vmatpush1.bf16.msra.mxu0 %v366
      %400 = vmatprep.subr.bf16.mxu0 %v369
      %401 = vmatpush1.bf16.msra.mxu0 %v368
      %402 = vmatprep.subr.bf16.mxu0 %v371
      %403 = vmatpush1.bf16.msra.mxu0 %v370
      %404 = vmatprep.subr.bf16.mxu0 %v373
      %405 = vmatpush1.bf16.msra.mxu0 %v372
      %406 = vmatprep.subr.bf16.mxu0 0
      %407 = vmatpush1.bf16.msra.mxu0 0
      %408 = vmatprep.subr.bf16.mxu0 0
      %409 = vmatpush1.bf16.msra.mxu0 0
      %410 = vmatprep.subr.bf16.mxu0 0
      %411 = vmatpush1.bf16.msra.mxu0 0
      %412 = vmatprep.subr.bf16.mxu0 0
      %413 = vmatpush1.bf16.msra.mxu0 0
      %414 = vmatprep.subr.bf16.mxu0 0
      %415 = vmatpush1.bf16.msra.mxu0 0
      %416 = vmatprep.subr.bf16.mxu0 0
      %417 = vmatpush1.bf16.msra.mxu0 0
      %418 = vmatprep.subr.bf16.mxu0 0
      %419 = vmatpush1.bf16.msra.mxu0 0
      %420 = vmatprep.subr.bf16.mxu0 0
      %421 = vmatpush1.bf16.msra.mxu0 0
      %422 = vmatprep.mubr.bf16.mxu0 0
      %423 = vmatmul.mubr.bf16.gmra.mrb[0].mxu0 %v278
      %v424 = vpop.f32.mrb[0].mxu0
      %v425 = vadd.f32 %v303, %v424
      %v426 = vpop.f32.mrb[0].mxu0
      %v427 = vadd.f32 %v307, %v426
      %v428 = vpop.f32.mrb[0].mxu0
      %v429 = vadd.f32 %v303, %v428
      %v430 = vpop.f32.mrb[0].mxu0
      %v431 = vadd.f32 %v307, %v430
      %432 = vdwg.mxu0
      %v433 = vld [vmem:[%s3] sm:$0xff]
      %v434 = vld [vmem:[%s3 + $0x8] sm:$0xff]
      %v435 = vld [vmem:[%s3 + $0x10] sm:$0xff]
      %v436 = vld [vmem:[%s3 + $0x18] sm:$0xff]
      %v437 = vld [vmem:[%s3 + $0x20] sm:$0xff]
      %v438 = vld [vmem:[%s3 + $0x28] sm:$0xff]
      %v439 = vld [vmem:[%s3 + $0x30] sm:$0xff]
      %v440 = vld [vmem:[%s3 + $0x38] sm:$0xff]
      %v441 = vld [vmem:[%s3 + $0x40] sm:$0xff]
      %v442 = vld [vmem:[%s3 + $0x48] sm:$0xff]
      %v443 = vld [vmem:[%s3 + $0x50] sm:$0xff]
      %v444 = vld [vmem:[%s3 + $0x58] sm:$0xff]
      %v445 = vld [vmem:[%s3 + $0x60] sm:$0xff]
      %v446 = vld [vmem:[%s3 + $0x68] sm:$0xff]
      %v447 = vld [vmem:[%s3 + $0x70] sm:$0xff]
      %v448 = vld [vmem:[%s3 + $0x78] sm:$0xff]
      %v449 = vld [vmem:[%s4] sm:$0xff]
      %v450 = vld [vmem:[%s4 + $0x8] sm:$0xff]
      %v451 = vld [vmem:[%s4 + $0x10] sm:$0xff]
      %v452 = vld [vmem:[%s4 + $0x18] sm:$0xff]
      %v453 = vld [vmem:[%s4 + $0x20] sm:$0xff]
      %v454 = vld [vmem:[%s4 + $0x28] sm:$0xff]
      %v455 = vld [vmem:[%s4 + $0x30] sm:$0xff]
      %v456 = vld [vmem:[%s4 + $0x38] sm:$0xff]
      %v457 = vld [vmem:[%s4 + $0x40] sm:$0xff]
      %v458 = vld [vmem:[%s4 + $0x48] sm:$0xff]
      %v459 = vld [vmem:[%s4 + $0x50] sm:$0xff]
      %v460 = vld [vmem:[%s4 + $0x58] sm:$0xff]
      %v461 = vld [vmem:[%s4 + $0x60] sm:$0xff]
      %v462 = vld [vmem:[%s4 + $0x68] sm:$0xff]
      %v463 = vld [vmem:[%s4 + $0x70] sm:$0xff]
      %v464 = vld [vmem:[%s4 + $0x78] sm:$0xff]
      %v481 = vunpack.c.l.b16 %v449
      %v482 = vunpack.c.h.b16 %v449
      %v483 = vunpack.c.l.b16 %v450
      %v484 = vunpack.c.h.b16 %v450
      %v485 = vunpack.c.l.b16 %v451
      %v486 = vunpack.c.h.b16 %v451
      %v487 = vunpack.c.l.b16 %v452
      %v488 = vunpack.c.h.b16 %v452
      %v489 = vunpack.c.l.b16 %v453
      %v490 = vunpack.c.h.b16 %v453
      %v491 = vunpack.c.l.b16 %v454
      %v492 = vunpack.c.h.b16 %v454
      %v493 = vunpack.c.l.b16 %v455
      %v494 = vunpack.c.h.b16 %v455
      %v495 = vunpack.c.l.b16 %v456
      %v496 = vunpack.c.h.b16 %v456
      %v497 = vunpack.c.l.b16 %v457
      %v498 = vunpack.c.h.b16 %v457
      %v499 = vunpack.c.l.b16 %v458
      %v500 = vunpack.c.h.b16 %v458
      %v501 = vunpack.c.l.b16 %v459
      %v502 = vunpack.c.h.b16 %v459
      %v503 = vunpack.c.l.b16 %v460
      %v504 = vunpack.c.h.b16 %v460
      %v505 = vunpack.c.l.b16 %v461
      %v506 = vunpack.c.h.b16 %v461
      %v507 = vunpack.c.l.b16 %v462
      %v508 = vunpack.c.h.b16 %v462
      %v509 = vunpack.c.l.b16 %v463
      %v510 = vunpack.c.h.b16 %v463
      %v511 = vunpack.c.l.b16 %v464
      %v512 = vunpack.c.h.b16 %v464
      %v513 = vpack.c.b16 %v483, %v481
      %v514 = vpack.c.b16 %v484, %v482
      %v515 = vpack.c.b16 %v487, %v485
      %v516 = vpack.c.b16 %v488, %v486
      %v517 = vpack.c.b16 %v491, %v489
      %v518 = vpack.c.b16 %v492, %v490
      %v519 = vpack.c.b16 %v495, %v493
      %v520 = vpack.c.b16 %v496, %v494
      %v521 = vpack.c.b16 %v499, %v497
      %v522 = vpack.c.b16 %v500, %v498
      %v523 = vpack.c.b16 %v503, %v501
      %v524 = vpack.c.b16 %v504, %v502
      %v525 = vpack.c.b16 %v507, %v505
      %v526 = vpack.c.b16 %v508, %v506
      %v527 = vpack.c.b16 %v511, %v509
      %v528 = vpack.c.b16 %v512, %v510
      %545 = vmatprep.subr.bf16.mxu0 %v514
      %546 = vmatpush1.bf16.msra.mxu0 %v513
      %547 = vmatprep.subr.bf16.mxu0 %v516
      %548 = vmatpush1.bf16.msra.mxu0 %v515
      %549 = vmatprep.subr.bf16.mxu0 %v518
      %550 = vmatpush1.bf16.msra.mxu0 %v517
      %551 = vmatprep.subr.bf16.mxu0 %v520
      %552 = vmatpush1.bf16.msra.mxu0 %v519
      %553 = vmatprep.subr.bf16.mxu0 %v522
      %554 = vmatpush1.bf16.msra.mxu0 %v521
      %555 = vmatprep.subr.bf16.mxu0 %v524
      %556 = vmatpush1.bf16.msra.mxu0 %v523
      %557 = vmatprep.subr.bf16.mxu0 %v526
      %558 = vmatpush1.bf16.msra.mxu0 %v525
      %559 = vmatprep.subr.bf16.mxu0 %v528
      %560 = vmatpush1.bf16.msra.mxu0 %v527
      %561 = vmatprep.subr.bf16.mxu0 0
      %562 = vmatpush1.bf16.msra.mxu0 0
      %563 = vmatprep.subr.bf16.mxu0 0
      %564 = vmatpush1.bf16.msra.mxu0 0
      %565 = vmatprep.subr.bf16.mxu0 0
      %566 = vmatpush1.bf16.msra.mxu0 0
      %567 = vmatprep.subr.bf16.mxu0 0
      %568 = vmatpush1.bf16.msra.mxu0 0
      %569 = vmatprep.subr.bf16.mxu0 0
      %570 = vmatpush1.bf16.msra.mxu0 0
      %571 = vmatprep.subr.bf16.mxu0 0
      %572 = vmatpush1.bf16.msra.mxu0 0
      %573 = vmatprep.subr.bf16.mxu0 0
      %574 = vmatpush1.bf16.msra.mxu0 0
      %575 = vmatprep.subr.bf16.mxu0 0
      %576 = vmatpush1.bf16.msra.mxu0 0
      %577 = vmatprep.mubr.bf16.mxu0 0
      %578 = vmatmul.mubr.bf16.gmra.mrb[0].mxu0 %v281
      %v579 = vpop.f32.mrb[0].mxu0
      %v580 = vadd.f32 0.0, %v579
      %v581 = vpop.f32.mrb[0].mxu0
      %v582 = vadd.f32 0.0, %v581
      %v583 = vpop.f32.mrb[0].mxu0
      %v584 = vadd.f32 0.0, %v583
      %v585 = vpop.f32.mrb[0].mxu0
      %v586 = vadd.f32 0.0, %v585
      %587 = vdwg.mxu0
      %v604 = vunpack.c.l.b16 %v433
      %v605 = vunpack.c.h.b16 %v433
      %v606 = vunpack.c.l.b16 %v434
      %v607 = vunpack.c.h.b16 %v434
      %v608 = vunpack.c.l.b16 %v435
      %v609 = vunpack.c.h.b16 %v435
      %v610 = vunpack.c.l.b16 %v436
      %v611 = vunpack.c.h.b16 %v436
      %v612 = vunpack.c.l.b16 %v437
      %v613 = vunpack.c.h.b16 %v437
      %v614 = vunpack.c.l.b16 %v438
      %v615 = vunpack.c.h.b16 %v438
      %v616 = vunpack.c.l.b16 %v439
      %v617 = vunpack.c.h.b16 %v439
      %v618 = vunpack.c.l.b16 %v440
      %v619 = vunpack.c.h.b16 %v440
      %v620 = vunpack.c.l.b16 %v441
      %v621 = vunpack.c.h.b16 %v441
      %v622 = vunpack.c.l.b16 %v442
      %v623 = vunpack.c.h.b16 %v442
      %v624 = vunpack.c.l.b16 %v443
      %v625 = vunpack.c.h.b16 %v443
      %v626 = vunpack.c.l.b16 %v444
      %v627 = vunpack.c.h.b16 %v444
      %v628 = vunpack.c.l.b16 %v445
      %v629 = vunpack.c.h.b16 %v445
      %v630 = vunpack.c.l.b16 %v446
      %v631 = vunpack.c.h.b16 %v446
      %v632 = vunpack.c.l.b16 %v447
      %v633 = vunpack.c.h.b16 %v447
      %v634 = vunpack.c.l.b16 %v448
      %v635 = vunpack.c.h.b16 %v448
      %v636 = vpack.c.b16 %v606, %v604
      %v637 = vpack.c.b16 %v607, %v605
      %v638 = vpack.c.b16 %v610, %v608
      %v639 = vpack.c.b16 %v611, %v609
      %v640 = vpack.c.b16 %v614, %v612
      %v641 = vpack.c.b16 %v615, %v613
      %v642 = vpack.c.b16 %v618, %v616
      %v643 = vpack.c.b16 %v619, %v617
      %v644 = vpack.c.b16 %v622, %v620
      %v645 = vpack.c.b16 %v623, %v621
      %v646 = vpack.c.b16 %v626, %v624
      %v647 = vpack.c.b16 %v627, %v625
      %v648 = vpack.c.b16 %v630, %v628
      %v649 = vpack.c.b16 %v631, %v629
      %v650 = vpack.c.b16 %v634, %v632
      %v651 = vpack.c.b16 %v635, %v633
      %668 = vmatprep.subr.bf16.mxu0 %v637
      %669 = vmatpush1.bf16.msra.mxu0 %v636
      %670 = vmatprep.subr.bf16.mxu0 %v639
      %671 = vmatpush1.bf16.msra.mxu0 %v638
      %672 = vmatprep.subr.bf16.mxu0 %v641
      %673 = vmatpush1.bf16.msra.mxu0 %v640
      %674 = vmatprep.subr.bf16.mxu0 %v643
      %675 = vmatpush1.bf16.msra.mxu0 %v642
      %676 = vmatprep.subr.bf16.mxu0 %v645
      %677 = vmatpush1.bf16.msra.mxu0 %v644
      %678 = vmatprep.subr.bf16.mxu0 %v647
      %679 = vmatpush1.bf16.msra.mxu0 %v646
      %680 = vmatprep.subr.bf16.mxu0 %v649
      %681 = vmatpush1.bf16.msra.mxu0 %v648
      %682 = vmatprep.subr.bf16.mxu0 %v651
      %683 = vmatpush1.bf16.msra.mxu0 %v650
      %684 = vmatprep.subr.bf16.mxu0 0
      %685 = vmatpush1.bf16.msra.mxu0 0
      %686 = vmatprep.subr.bf16.mxu0 0
      %687 = vmatpush1.bf16.msra.mxu0 0
      %688 = vmatprep.subr.bf16.mxu0 0
      %689 = vmatpush1.bf16.msra.mxu0 0
      %690 = vmatprep.subr.bf16.mxu0 0
      %691 = vmatpush1.bf16.msra.mxu0 0
      %692 = vmatprep.subr.bf16.mxu0 0
      %693 = vmatpush1.bf16.msra.mxu0 0
      %694 = vmatprep.subr.bf16.mxu0 0
      %695 = vmatpush1.bf16.msra.mxu0 0
      %696 = vmatprep.subr.bf16.mxu0 0
      %697 = vmatpush1.bf16.msra.mxu0 0
      %698 = vmatprep.subr.bf16.mxu0 0
      %699 = vmatpush1.bf16.msra.mxu0 0
      %700 = vmatprep.mubr.bf16.mxu0 0
      %701 = vmatmul.mubr.bf16.gmra.mrb[0].mxu0 %v278
      %v702 = vpop.f32.mrb[0].mxu0
      %v703 = vadd.f32 %v580, %v702
      %v704 = vpop.f32.mrb[0].mxu0
      %v705 = vadd.f32 %v582, %v704
      %v706 = vpop.f32.mrb[0].mxu0
      %v707 = vadd.f32 %v584, %v706
      %v708 = vpop.f32.mrb[0].mxu0
      %v709 = vadd.f32 %v586, %v708
      %710 = vdwg.mxu0
      %v711 = vadd.f32 %v703, %v303
      %v712 = vadd.f32 %v705, %v307
      %v713 = vadd.f32 %v707, %v303
      %v714 = vadd.f32 %v709, %v307
      %v715 = vld [vmem:[%s266] sm:$0xff]
      %v716 = vld [vmem:[%s266 + $0x8] sm:$0xff]
      %v717 = vld [vmem:[%s266 + $0x10] sm:$0xff]
      %v718 = vld [vmem:[%s266 + $0x18] sm:$0xff]
      %v719 = vld [vmem:[%s266 + $0x20] sm:$0xff]
      %v720 = vld [vmem:[%s266 + $0x28] sm:$0xff]
      %v721 = vld [vmem:[%s266 + $0x30] sm:$0xff]
      %v722 = vld [vmem:[%s266 + $0x38] sm:$0xff]
      %v723 = vadd.f32 %v425, %v715
      %v724 = vadd.f32 %v427, %v716
      %v725 = vadd.f32 %v429, %v719
      %v726 = vadd.f32 %v431, %v720
      %727 = vst [vmem:[%s271] sm:$0xff] %v723
      %728 = vst [vmem:[%s271 + $0x8] sm:$0xff] %v724
      %729 = vst [vmem:[%s271 + $0x20] sm:$0xff] %v725
      %730 = vst [vmem:[%s271 + $0x28] sm:$0xff] %v726
      %v731 = vadd.f32 %v711, %v717
      %v732 = vadd.f32 %v712, %v718
      %v733 = vadd.f32 %v713, %v721
      %v734 = vadd.f32 %v714, %v722
      %735 = vst [vmem:[%s271 + $0x10] sm:$0xff] %v731
      %736 = vst [vmem:[%s271 + $0x18] sm:$0xff] %v732
      %737 = vst [vmem:[%s271 + $0x30] sm:$0xff] %v733
      %738 = vst [vmem:[%s271 + $0x38] sm:$0xff] %v734
      %p739 = scmp.lt.s32.totalorder %s17, 1
      %s740 = scalar_select %p739, %s17, 1
      %s741 = smul.addr %s740, 8
      %s742 = smul.addr %s741, 8
      %s743 = scalar_lea.vmem %s6, %s742
      // Predicated region
      $region45: #{upblock_forward.3} parent=43 // pred_check
        %p744 = pneg %p171
      $region46: #{upblock_forward.3} parent=43 // pred_check_branch
        %746 = sbr.rel (%p744) target = $region48
      $region47: #{upblock_forward.3} parent=43 // pred_region
        _
      $region48: #{upblock_forward.3} parent=43 // pred_fallthru
        _
    $region44: #{upblock_forward.3} parent=5 // pred_fallthru
      _
    %p747 = scmp.le.s32.totalorder 2, %s12
    // Predicated region
    $region49: #{upblock_forward.3} parent=5 // pred_check
      %p748 = pneg %p747
    $region50: #{upblock_forward.3} parent=5 // pred_check_branch
      %750 = sbr.rel (%p748) target = $region52
    $region51: #{upblock_forward.3} parent=5 // pred_region
      %s751 = ssub.s32 %s12, 2
      // Predicated region
      $region53: #{upblock_forward.3} parent=51 // pred_check
        %p752 = pneg %p177
      $region54: #{upblock_forward.3} parent=51 // pred_check_branch
        %754 = sbr.rel (%p752) target = $region56
      $region55: #{upblock_forward.3} parent=51 // pred_region
        %p755 = scmp.lt.s32.totalorder %s18, 1
        %s756 = scalar_select %p755, %s18, 1
        %s757 = smul.addr %s756, 8
        %s758 = smul.addr %s757, 8
        %s759 = scalar_lea.vmem %s6, %s758
      $region56: #{upblock_forward.3} parent=51 // pred_fallthru
        _
    $region52: #{upblock_forward.3} parent=5 // pred_fallthru
      _
  $region6: #{upblock_forward.3} parent=0 // loop_footer
    %s16 = sadd.s32 1, %s12
  $region7: #{upblock_forward.3} parent=0 // loop_footer_branch
    %11 = sbr.rel target = $region3
  $region8: #{upblock_forward.3} parent=0 // loop_exit
    _

</llo_original>
